<compile_context>
chip_gen: v5e
topology: v5e:2x2
jax: 0.10.0
libtpu: 0.0.40
codegen_flags: <defaults>
</compile_context>

<pallas_src>
import jax
import jax.numpy as jnp
import numpy as np
from jax.experimental import pallas as pl
from jax.experimental.pallas import tpu as pltpu


def _bilstm_kernel(gx_ref, whh_ref, out_ref):
    """Fused bidirectional LSTM recurrence (one MXU dot per timestep).

    gx_ref : (T, 2B, 4*Hp) f32   precomputed x @ W_ih + b.  rows [0:B] = forward
                                 at time t, rows [B:2B] = backward (already
                                 time-reversed: step t uses x[T-1-t]).
    whh_ref: (2*Hp, 4*Hp) bf16   recurrent weights: rows [0:Hp] = W_hh_f^T,
                                 rows [Hp:2Hp] = W_hh_b^T (gate-padded).
    out_ref: (T, B, 2*Hp) f32    fwd h in lanes [0:Hp], bwd h in lanes [Hp:2Hp].
    """
    T = gx_ref.shape[0]
    B2 = gx_ref.shape[1]
    B = B2 // 2
    HP = out_ref.shape[2] // 2

    whh = whh_ref[...]                                    # (2Hp, 4Hp) bf16, hoisted

    # Block-diagonal selection mask: fwd rows keep lanes [0:Hp], bwd rows keep
    # lanes [Hp:2Hp].  Hoisted out of the time loop.
    row = jax.lax.broadcasted_iota(jnp.int32, (B2, 2 * HP), 0)
    col = jax.lax.broadcasted_iota(jnp.int32, (B2, 2 * HP), 1)
    mask = ((row < B) == (col < HP)).astype(jnp.float32)  # (2B, 2Hp)

    h2_0 = jnp.zeros((B2, 2 * HP), jnp.bfloat16)          # masked state (MXU LHS)
    c_0 = jnp.zeros((B2, HP), jnp.float32)

    def step(t, carry):
        h2, c = carry
        # Single fused recurrent matmul for both directions: (2B,2Hp)@(2Hp,4Hp).
        rec = jnp.dot(h2, whh, preferred_element_type=jnp.float32)
        gates = gx_ref[t] + rec                           # (2B, 4Hp) f32

        i = jax.nn.sigmoid(gates[:, 0 * HP:1 * HP])       # 128-aligned lane slices
        f = jax.nn.sigmoid(gates[:, 1 * HP:2 * HP])
        g = jnp.tanh(gates[:, 2 * HP:3 * HP])
        o = jax.nn.sigmoid(gates[:, 3 * HP:4 * HP])

        c_new = f * c + i * g                             # f32 elementwise
        h = o * jnp.tanh(c_new)                           # (2B, Hp) f32

        out_ref[t, :, 0:HP] = h[0:B]                      # forward, time t
        out_ref[T - 1 - t, :, HP:2 * HP] = h[B:B2]        # backward, time T-1-t

        # Rebuild the masked bf16 state for the next step's MXU LHS.
        h2_new = (jnp.concatenate([h, h], axis=1) * mask).astype(jnp.bfloat16)
        return (h2_new, c_new)

    jax.lax.fori_loop(0, T, step, (h2_0, c_0), unroll=True)


def _pad_gate_cols(w, h, hp):
    """Pad the last (4*h) gate axis to (4*hp), zero-padding each gate block."""
    lead = w.shape[:-1]
    w4 = w.reshape(*lead, 4, h)
    w4 = jnp.pad(w4, [(0, 0)] * len(lead) + [(0, 0), (0, hp - h)])
    return w4.reshape(*lead, 4 * hp)


@jax.jit
def lstm_backbone_forward(x, params):
    """Equivalent of LSTMBackbone.forward.  x: (B, T, D) -> (B, T, 2H)."""
    x = jnp.asarray(x, jnp.float32)
    B, T, D = x.shape
    H = params["w_hh_f"].shape[1]
    HP = ((H + 127) // 128) * 128                         # 200 -> 256

    x_tbd = jnp.transpose(x, (1, 0, 2))                   # (T, B, D)

    def prep_dir(w_ih, w_hh, b_ih, b_hh, x_dir):
        wih_t = _pad_gate_cols(jnp.asarray(w_ih, jnp.float32).T, H, HP)   # (D, 4Hp)
        whh_t = _pad_gate_cols(jnp.asarray(w_hh, jnp.float32).T, H, HP)   # (H, 4Hp)
        whh_t = jnp.pad(whh_t, ((0, HP - H), (0, 0)))                     # (Hp, 4Hp)
        bias = _pad_gate_cols(jnp.asarray(b_ih, jnp.float32)
                              + jnp.asarray(b_hh, jnp.float32), H, HP)    # (4Hp,)
        # Input projection for all timesteps at once (off the serial path).
        gx = jnp.einsum('tbd,dg->tbg', x_dir, wih_t,
                        precision=jax.lax.Precision.HIGH) + bias          # (T, B, 4Hp)
        return gx, whh_t

    gx_f, whh_f = prep_dir(params["w_ih_f"], params["w_hh_f"],
                           params["b_ih_f"], params["b_hh_f"], x_tbd)
    gx_b, whh_b = prep_dir(params["w_ih_r"], params["w_hh_r"],
                           params["b_ih_r"], params["b_hh_r"],
                           jnp.flip(x_tbd, axis=0))

    gx = jnp.concatenate([gx_f, gx_b], axis=1)            # (T, 2B, 4Hp) f32
    whh = jnp.concatenate([whh_f, whh_b], axis=0).astype(jnp.bfloat16)  # (2Hp, 4Hp)

    out_pad = pl.pallas_call(
        _bilstm_kernel,
        out_shape=jax.ShapeDtypeStruct((T, B, 2 * HP), jnp.float32),
        grid_spec=pltpu.PrefetchScalarGridSpec(
            num_scalar_prefetch=0,
            grid=(1,),
            in_specs=[
                pl.BlockSpec((T, 2 * B, 4 * HP), lambda i: (0, 0, 0)),
                pl.BlockSpec((2 * HP, 4 * HP), lambda i: (0, 0)),
            ],
            out_specs=pl.BlockSpec((T, B, 2 * HP), lambda i: (0, 0, 0)),
        ),
        compiler_params=pltpu.CompilerParams(
            dimension_semantics=("arbitrary",)),
    )(gx, whh)

    # Un-pad: fwd h lives in lanes [0:H], bwd h in lanes [HP:HP+H].
    out = jnp.concatenate([out_pad[:, :, :H], out_pad[:, :, HP:HP + H]], axis=-1)
    return jnp.transpose(out, (1, 0, 2))                  # (B, T, 2H)


def _lstm_direction_ref(x_tbd, w_ih, w_hh, b_ih, b_hh):
    """Pure-JAX f32 reference (lax.scan) for correctness checking."""
    T, B, D = x_tbd.shape
    H = w_hh.shape[1]

    def step(carry, x_t):
        h, c = carry
        gates = (jnp.dot(x_t, w_ih.T, precision=jax.lax.Precision.HIGHEST)
                 + jnp.dot(h, w_hh.T, precision=jax.lax.Precision.HIGHEST)
                 + b_ih + b_hh)
        i = jax.nn.sigmoid(gates[:, :H])
        f = jax.nn.sigmoid(gates[:, H:2 * H])
        g = jnp.tanh(gates[:, 2 * H:3 * H])
        o = jax.nn.sigmoid(gates[:, 3 * H:])
        c = f * c + i * g
        h = o * jnp.tanh(c)
        return (h, c), h

    init = (jnp.zeros((B, H), jnp.float32), jnp.zeros((B, H), jnp.float32))
    _, hs = jax.lax.scan(step, init, x_tbd)
    return hs


def init_params(key, input_size, hidden_size):
    """Deterministic init matching PyTorch LSTM param shapes (uniform ±1/sqrt(H))."""
    k = 1.0 / np.sqrt(hidden_size)
    keys = jax.random.split(key, 8)
    shapes = [
        ("w_ih_f", (4 * hidden_size, input_size)),
        ("w_hh_f", (4 * hidden_size, hidden_size)),
        ("b_ih_f", (4 * hidden_size,)),
        ("b_hh_f", (4 * hidden_size,)),
        ("w_ih_r", (4 * hidden_size, input_size)),
        ("w_hh_r", (4 * hidden_size, hidden_size)),
        ("b_ih_r", (4 * hidden_size,)),
        ("b_hh_r", (4 * hidden_size,)),
    ]
    return {name: jax.random.uniform(kk, shape, jnp.float32, -k, k)
            for kk, (name, shape) in zip(keys, shapes)}


if __name__ == "__main__":
    dim_f = 2
    input_size = 8 * dim_f + 128           # 144
    hidden_size = 200                      # fixed by the module
    B, T = 2, 8

    key = jax.random.PRNGKey(0)
    key_x, key_p = jax.random.split(key)
    x = jax.random.normal(key_x, (B, T, input_size), jnp.float32)
    params = init_params(key_p, input_size, hidden_size)

    out = jax.block_until_ready(lstm_backbone_forward(x, params))
    assert out.shape == (B, T, 2 * hidden_size), out.shape

    # Correctness check against pure-f32 JAX reference.  Tolerance is 2e-3
    # because the in-kernel recurrent matmul uses bf16 MXU operands (single
    # MXU pass, per perf guidance) with f32 accumulation.
    x_tbd = jnp.transpose(x, (1, 0, 2))
    ref_fwd = _lstm_direction_ref(x_tbd, params["w_ih_f"], params["w_hh_f"],
                                  params["b_ih_f"], params["b_hh_f"])
    ref_bwd = jnp.flip(_lstm_direction_ref(jnp.flip(x_tbd, 0),
                                           params["w_ih_r"], params["w_hh_r"],
                                           params["b_ih_r"], params["b_hh_r"]), 0)
    ref = jnp.transpose(jnp.concatenate([ref_fwd, ref_bwd], -1), (1, 0, 2))
    np.testing.assert_allclose(np.asarray(out), np.asarray(ref),
                               rtol=2e-3, atol=2e-3)

    print("KERNEL_OK")
</pallas_src>

<mosaic_0001>
module attributes {stable_mosaic.version = 11 : i64} {
  func.func @_bilstm_kernel(%arg0: i32, %arg1: memref<8x4x1024xf32, #tpu.memory_space<vmem>>, %arg2: memref<512x1024xbf16, #tpu.memory_space<vmem>>, %arg3: memref<8x2x512xf32, #tpu.memory_space<vmem>>) attributes {dimension_semantics = [#tpu.dimension_semantics<arbitrary>], iteration_bounds = array<i64: 1>, scalar_prefetch = 0 : i64, scratch_operands = 0 : i64, tpu.core_type = #tpu.core_type<tc>, window_params = [{pipeline_mode = #tpu.pipeline_mode<synchronous>, transform_indices = @transform_0, window_bounds = array<i64: 8, 4, 1024>}, {pipeline_mode = #tpu.pipeline_mode<synchronous>, transform_indices = @transform_1, window_bounds = array<i64: 512, 1024>}, {pipeline_mode = #tpu.pipeline_mode<synchronous>, transform_indices = @transform_2, window_bounds = array<i64: 8, 2, 512>}]} {
    %c0 = arith.constant 0 : index
    %c0_0 = arith.constant 0 : index
    %0 = vector.load %arg2[%c0, %c0_0] : memref<512x1024xbf16, #tpu.memory_space<vmem>>, vector<512x1024xbf16>
    %1 = tpu.iota {dimensions = array<i32: 0>} : vector<4x512xi32>
    %2 = tpu.iota {dimensions = array<i32: 1>} : vector<4x512xi32>
    %c2_i32 = arith.constant 2 : i32
    %3 = vector.broadcast %c2_i32 : i32 to vector<4x512xi32>
    %4 = arith.cmpi slt, %1, %3 : vector<4x512xi32>
    %c256_i32 = arith.constant 256 : i32
    %5 = vector.broadcast %c256_i32 : i32 to vector<4x512xi32>
    %6 = arith.cmpi slt, %2, %5 : vector<4x512xi32>
    %7 = arith.xori %4, %6 : vector<4x512xi1>
    %cst = arith.constant dense<true> : vector<4x512xi1>
    %8 = arith.xori %7, %cst : vector<4x512xi1>
    %9 = arith.extui %8 : vector<4x512xi1> to vector<4x512xi32>
    %10 = arith.sitofp %9 : vector<4x512xi32> to vector<4x512xf32>
    %cst_1 = arith.constant 0.000000e+00 : bf16
    %11 = vector.broadcast %cst_1 : bf16 to vector<4x512xbf16>
    %cst_2 = arith.constant 0.000000e+00 : f32
    %12 = vector.broadcast %cst_2 : f32 to vector<4x256xf32>
    %c0_i32 = arith.constant 0 : i32
    %cst_3 = arith.constant dense<0.000000e+00> : vector<4x1024xf32>
    %13 = tpu.matmul %11, %0, %cst_3 {dimension_numbers = #tpu.dot_dimension_numbers<[1], [0], [0], [1], [0, 0, 1, 1], [], []>} : vector<4x512xbf16>, vector<512x1024xbf16>, vector<4x1024xf32> -> vector<4x1024xf32>
    %14 = arith.index_cast %c0_i32 : i32 to index
    %c0_4 = arith.constant 0 : index
    %c0_5 = arith.constant 0 : index
    %15 = vector.load %arg1[%14, %c0_4, %c0_5] : memref<8x4x1024xf32, #tpu.memory_space<vmem>>, vector<1x4x1024xf32>
    %16 = vector.shape_cast %15 : vector<1x4x1024xf32> to vector<4x1024xf32>
    %17 = arith.addf %16, %13 : vector<4x1024xf32>
    %18 = vector.extract_strided_slice %17 {offsets = [0, 0], sizes = [4, 256], strides = [1, 1]} : vector<4x1024xf32> to vector<4x256xf32>
    %19 = arith.negf %18 : vector<4x256xf32>
    %20 = math.exp %19 : vector<4x256xf32>
    %cst_6 = arith.constant 1.000000e+00 : f32
    %21 = vector.broadcast %cst_6 : f32 to vector<4x256xf32>
    %22 = arith.addf %21, %20 : vector<4x256xf32>
    %23 = arith.divf %21, %22 : vector<4x256xf32>
    %24 = vector.extract_strided_slice %17 {offsets = [0, 256], sizes = [4, 256], strides = [1, 1]} : vector<4x1024xf32> to vector<4x256xf32>
    %25 = arith.negf %24 : vector<4x256xf32>
    %26 = math.exp %25 : vector<4x256xf32>
    %cst_7 = arith.constant 1.000000e+00 : f32
    %27 = vector.broadcast %cst_7 : f32 to vector<4x256xf32>
    %28 = arith.addf %27, %26 : vector<4x256xf32>
    %29 = arith.divf %27, %28 : vector<4x256xf32>
    %30 = vector.extract_strided_slice %17 {offsets = [0, 512], sizes = [4, 256], strides = [1, 1]} : vector<4x1024xf32> to vector<4x256xf32>
    %31 = math.tanh %30 : vector<4x256xf32>
    %32 = vector.extract_strided_slice %17 {offsets = [0, 768], sizes = [4, 256], strides = [1, 1]} : vector<4x1024xf32> to vector<4x256xf32>
    %33 = arith.negf %32 : vector<4x256xf32>
    %34 = math.exp %33 : vector<4x256xf32>
    %cst_8 = arith.constant 1.000000e+00 : f32
    %35 = vector.broadcast %cst_8 : f32 to vector<4x256xf32>
    %36 = arith.addf %35, %34 : vector<4x256xf32>
    %37 = arith.divf %35, %36 : vector<4x256xf32>
    %38 = arith.mulf %29, %12 : vector<4x256xf32>
    %39 = arith.mulf %23, %31 : vector<4x256xf32>
    %40 = arith.addf %38, %39 : vector<4x256xf32>
    %41 = math.tanh %40 : vector<4x256xf32>
    %42 = arith.mulf %37, %41 : vector<4x256xf32>
    %43 = vector.extract_strided_slice %42 {offsets = [0, 0], sizes = [2, 256], strides = [1, 1]} : vector<4x256xf32> to vector<2x256xf32>
    %44 = arith.index_cast %c0_i32 : i32 to index
    %c0_9 = arith.constant 0 : index
    %c0_10 = arith.constant 0 : index
    %45 = vector.load %arg3[%44, %c0_9, %c0_10] : memref<8x2x512xf32, #tpu.memory_space<vmem>>, vector<1x2x256xf32>
    %46 = vector.shape_cast %45 : vector<1x2x256xf32> to vector<2x256xf32>
    %47 = vector.shape_cast %43 : vector<2x256xf32> to vector<1x2x256xf32>
    tpu.vector_store %arg3[%44, %c0_9, %c0_10], %47 {strides = array<i32>} : memref<8x2x512xf32, #tpu.memory_space<vmem>>, vector<1x2x256xf32>,
    %48 = vector.extract_strided_slice %42 {offsets = [2, 0], sizes = [2, 256], strides = [1, 1]} : vector<4x256xf32> to vector<2x256xf32>
    %c7_i32 = arith.constant 7 : i32
    %49 = arith.subi %c7_i32, %c0_i32 : i32
    %50 = arith.index_cast %49 : i32 to index
    %c0_11 = arith.constant 0 : index
    %c256 = arith.constant 256 : index
    %51 = vector.load %arg3[%50, %c0_11, %c256] : memref<8x2x512xf32, #tpu.memory_space<vmem>>, vector<1x2x256xf32>
    %52 = vector.shape_cast %51 : vector<1x2x256xf32> to vector<2x256xf32>
    %53 = vector.shape_cast %48 : vector<2x256xf32> to vector<1x2x256xf32>
    tpu.vector_store %arg3[%50, %c0_11, %c256], %53 {strides = array<i32>} : memref<8x2x512xf32, #tpu.memory_space<vmem>>, vector<1x2x256xf32>,
    %54 = tpu.concatenate %42, %42 in 1 : vector<4x256xf32>, vector<4x256xf32> -> vector<4x512xf32>
    %55 = arith.mulf %54, %10 : vector<4x512xf32>
    %56 = arith.truncf %55 : vector<4x512xf32> to vector<4x512xbf16>
    %c1_i32 = arith.constant 1 : i32
    %cst_12 = arith.constant dense<0.000000e+00> : vector<4x1024xf32>
    %57 = tpu.matmul %56, %0, %cst_12 {dimension_numbers = #tpu.dot_dimension_numbers<[1], [0], [0], [1], [0, 0, 1, 1], [], []>} : vector<4x512xbf16>, vector<512x1024xbf16>, vector<4x1024xf32> -> vector<4x1024xf32>
    %58 = arith.index_cast %c1_i32 : i32 to index
    %c0_13 = arith.constant 0 : index
    %c0_14 = arith.constant 0 : index
    %59 = vector.load %arg1[%58, %c0_13, %c0_14] : memref<8x4x1024xf32, #tpu.memory_space<vmem>>, vector<1x4x1024xf32>
    %60 = vector.shape_cast %59 : vector<1x4x1024xf32> to vector<4x1024xf32>
    %61 = arith.addf %60, %57 : vector<4x1024xf32>
    %62 = vector.extract_strided_slice %61 {offsets = [0, 0], sizes = [4, 256], strides = [1, 1]} : vector<4x1024xf32> to vector<4x256xf32>
    %63 = arith.negf %62 : vector<4x256xf32>
    %64 = math.exp %63 : vector<4x256xf32>
    %cst_15 = arith.constant 1.000000e+00 : f32
    %65 = vector.broadcast %cst_15 : f32 to vector<4x256xf32>
    %66 = arith.addf %65, %64 : vector<4x256xf32>
    %67 = arith.divf %65, %66 : vector<4x256xf32>
    %68 = vector.extract_strided_slice %61 {offsets = [0, 256], sizes = [4, 256], strides = [1, 1]} : vector<4x1024xf32> to vector<4x256xf32>
    %69 = arith.negf %68 : vector<4x256xf32>
    %70 = math.exp %69 : vector<4x256xf32>
    %cst_16 = arith.constant 1.000000e+00 : f32
    %71 = vector.broadcast %cst_16 : f32 to vector<4x256xf32>
    %72 = arith.addf %71, %70 : vector<4x256xf32>
    %73 = arith.divf %71, %72 : vector<4x256xf32>
    %74 = vector.extract_strided_slice %61 {offsets = [0, 512], sizes = [4, 256], strides = [1, 1]} : vector<4x1024xf32> to vector<4x256xf32>
    %75 = math.tanh %74 : vector<4x256xf32>
    %76 = vector.extract_strided_slice %61 {offsets = [0, 768], sizes = [4, 256], strides = [1, 1]} : vector<4x1024xf32> to vector<4x256xf32>
    %77 = arith.negf %76 : vector<4x256xf32>
    %78 = math.exp %77 : vector<4x256xf32>
    %cst_17 = arith.constant 1.000000e+00 : f32
    %79 = vector.broadcast %cst_17 : f32 to vector<4x256xf32>
    %80 = arith.addf %79, %78 : vector<4x256xf32>
    %81 = arith.divf %79, %80 : vector<4x256xf32>
    %82 = arith.mulf %73, %40 : vector<4x256xf32>
    %83 = arith.mulf %67, %75 : vector<4x256xf32>
    %84 = arith.addf %82, %83 : vector<4x256xf32>
    %85 = math.tanh %84 : vector<4x256xf32>
    %86 = arith.mulf %81, %85 : vector<4x256xf32>
    %87 = vector.extract_strided_slice %86 {offsets = [0, 0], sizes = [2, 256], strides = [1, 1]} : vector<4x256xf32> to vector<2x256xf32>
    %88 = arith.index_cast %c1_i32 : i32 to index
    %c0_18 = arith.constant 0 : index
    %c0_19 = arith.constant 0 : index
    %89 = vector.load %arg3[%88, %c0_18, %c0_19] : memref<8x2x512xf32, #tpu.memory_space<vmem>>, vector<1x2x256xf32>
    %90 = vector.shape_cast %89 : vector<1x2x256xf32> to vector<2x256xf32>
    %91 = vector.shape_cast %87 : vector<2x256xf32> to vector<1x2x256xf32>
    tpu.vector_store %arg3[%88, %c0_18, %c0_19], %91 {strides = array<i32>} : memref<8x2x512xf32, #tpu.memory_space<vmem>>, vector<1x2x256xf32>,
    %92 = vector.extract_strided_slice %86 {offsets = [2, 0], sizes = [2, 256], strides = [1, 1]} : vector<4x256xf32> to vector<2x256xf32>
    %c7_i32_20 = arith.constant 7 : i32
    %93 = arith.subi %c7_i32_20, %c1_i32 : i32
    %94 = arith.index_cast %93 : i32 to index
    %c0_21 = arith.constant 0 : index
    %c256_22 = arith.constant 256 : index
    %95 = vector.load %arg3[%94, %c0_21, %c256_22] : memref<8x2x512xf32, #tpu.memory_space<vmem>>, vector<1x2x256xf32>
    %96 = vector.shape_cast %95 : vector<1x2x256xf32> to vector<2x256xf32>
    %97 = vector.shape_cast %92 : vector<2x256xf32> to vector<1x2x256xf32>
    tpu.vector_store %arg3[%94, %c0_21, %c256_22], %97 {strides = array<i32>} : memref<8x2x512xf32, #tpu.memory_space<vmem>>, vector<1x2x256xf32>,
    %98 = tpu.concatenate %86, %86 in 1 : vector<4x256xf32>, vector<4x256xf32> -> vector<4x512xf32>
    %99 = arith.mulf %98, %10 : vector<4x512xf32>
    %100 = arith.truncf %99 : vector<4x512xf32> to vector<4x512xbf16>
    %c2_i32_23 = arith.constant 2 : i32
    %cst_24 = arith.constant dense<0.000000e+00> : vector<4x1024xf32>
    %101 = tpu.matmul %100, %0, %cst_24 {dimension_numbers = #tpu.dot_dimension_numbers<[1], [0], [0], [1], [0, 0, 1, 1], [], []>} : vector<4x512xbf16>, vector<512x1024xbf16>, vector<4x1024xf32> -> vector<4x1024xf32>
    %102 = arith.index_cast %c2_i32_23 : i32 to index
    %c0_25 = arith.constant 0 : index
    %c0_26 = arith.constant 0 : index
    %103 = vector.load %arg1[%102, %c0_25, %c0_26] : memref<8x4x1024xf32, #tpu.memory_space<vmem>>, vector<1x4x1024xf32>
    %104 = vector.shape_cast %103 : vector<1x4x1024xf32> to vector<4x1024xf32>
    %105 = arith.addf %104, %101 : vector<4x1024xf32>
    %106 = vector.extract_strided_slice %105 {offsets = [0, 0], sizes = [4, 256], strides = [1, 1]} : vector<4x1024xf32> to vector<4x256xf32>
    %107 = arith.negf %106 : vector<4x256xf32>
    %108 = math.exp %107 : vector<4x256xf32>
    %cst_27 = arith.constant 1.000000e+00 : f32
    %109 = vector.broadcast %cst_27 : f32 to vector<4x256xf32>
    %110 = arith.addf %109, %108 : vector<4x256xf32>
    %111 = arith.divf %109, %110 : vector<4x256xf32>
    %112 = vector.extract_strided_slice %105 {offsets = [0, 256], sizes = [4, 256], strides = [1, 1]} : vector<4x1024xf32> to vector<4x256xf32>
    %113 = arith.negf %112 : vector<4x256xf32>
    %114 = math.exp %113 : vector<4x256xf32>
    %cst_28 = arith.constant 1.000000e+00 : f32
    %115 = vector.broadcast %cst_28 : f32 to vector<4x256xf32>
    %116 = arith.addf %115, %114 : vector<4x256xf32>
    %117 = arith.divf %115, %116 : vector<4x256xf32>
    %118 = vector.extract_strided_slice %105 {offsets = [0, 512], sizes = [4, 256], strides = [1, 1]} : vector<4x1024xf32> to vector<4x256xf32>
    %119 = math.tanh %118 : vector<4x256xf32>
    %120 = vector.extract_strided_slice %105 {offsets = [0, 768], sizes = [4, 256], strides = [1, 1]} : vector<4x1024xf32> to vector<4x256xf32>
    %121 = arith.negf %120 : vector<4x256xf32>
    %122 = math.exp %121 : vector<4x256xf32>
    %cst_29 = arith.constant 1.000000e+00 : f32
    %123 = vector.broadcast %cst_29 : f32 to vector<4x256xf32>
    %124 = arith.addf %123, %122 : vector<4x256xf32>
    %125 = arith.divf %123, %124 : vector<4x256xf32>
    %126 = arith.mulf %117, %84 : vector<4x256xf32>
    %127 = arith.mulf %111, %119 : vector<4x256xf32>
    %128 = arith.addf %126, %127 : vector<4x256xf32>
    %129 = math.tanh %128 : vector<4x256xf32>
    %130 = arith.mulf %125, %129 : vector<4x256xf32>
    %131 = vector.extract_strided_slice %130 {offsets = [0, 0], sizes = [2, 256], strides = [1, 1]} : vector<4x256xf32> to vector<2x256xf32>
    %132 = arith.index_cast %c2_i32_23 : i32 to index
    %c0_30 = arith.constant 0 : index
    %c0_31 = arith.constant 0 : index
    %133 = vector.load %arg3[%132, %c0_30, %c0_31] : memref<8x2x512xf32, #tpu.memory_space<vmem>>, vector<1x2x256xf32>
    %134 = vector.shape_cast %133 : vector<1x2x256xf32> to vector<2x256xf32>
    %135 = vector.shape_cast %131 : vector<2x256xf32> to vector<1x2x256xf32>
    tpu.vector_store %arg3[%132, %c0_30, %c0_31], %135 {strides = array<i32>} : memref<8x2x512xf32, #tpu.memory_space<vmem>>, vector<1x2x256xf32>,
    %136 = vector.extract_strided_slice %130 {offsets = [2, 0], sizes = [2, 256], strides = [1, 1]} : vector<4x256xf32> to vector<2x256xf32>
    %c7_i32_32 = arith.constant 7 : i32
    %137 = arith.subi %c7_i32_32, %c2_i32_23 : i32
    %138 = arith.index_cast %137 : i32 to index
    %c0_33 = arith.constant 0 : index
    %c256_34 = arith.constant 256 : index
    %139 = vector.load %arg3[%138, %c0_33, %c256_34] : memref<8x2x512xf32, #tpu.memory_space<vmem>>, vector<1x2x256xf32>
    %140 = vector.shape_cast %139 : vector<1x2x256xf32> to vector<2x256xf32>
    %141 = vector.shape_cast %136 : vector<2x256xf32> to vector<1x2x256xf32>
    tpu.vector_store %arg3[%138, %c0_33, %c256_34], %141 {strides = array<i32>} : memref<8x2x512xf32, #tpu.memory_space<vmem>>, vector<1x2x256xf32>,
    %142 = tpu.concatenate %130, %130 in 1 : vector<4x256xf32>, vector<4x256xf32> -> vector<4x512xf32>
    %143 = arith.mulf %142, %10 : vector<4x512xf32>
    %144 = arith.truncf %143 : vector<4x512xf32> to vector<4x512xbf16>
    %c3_i32 = arith.constant 3 : i32
    %cst_35 = arith.constant dense<0.000000e+00> : vector<4x1024xf32>
    %145 = tpu.matmul %144, %0, %cst_35 {dimension_numbers = #tpu.dot_dimension_numbers<[1], [0], [0], [1], [0, 0, 1, 1], [], []>} : vector<4x512xbf16>, vector<512x1024xbf16>, vector<4x1024xf32> -> vector<4x1024xf32>
    %146 = arith.index_cast %c3_i32 : i32 to index
    %c0_36 = arith.constant 0 : index
    %c0_37 = arith.constant 0 : index
    %147 = vector.load %arg1[%146, %c0_36, %c0_37] : memref<8x4x1024xf32, #tpu.memory_space<vmem>>, vector<1x4x1024xf32>
    %148 = vector.shape_cast %147 : vector<1x4x1024xf32> to vector<4x1024xf32>
    %149 = arith.addf %148, %145 : vector<4x1024xf32>
    %150 = vector.extract_strided_slice %149 {offsets = [0, 0], sizes = [4, 256], strides = [1, 1]} : vector<4x1024xf32> to vector<4x256xf32>
    %151 = arith.negf %150 : vector<4x256xf32>
    %152 = math.exp %151 : vector<4x256xf32>
    %cst_38 = arith.constant 1.000000e+00 : f32
    %153 = vector.broadcast %cst_38 : f32 to vector<4x256xf32>
    %154 = arith.addf %153, %152 : vector<4x256xf32>
    %155 = arith.divf %153, %154 : vector<4x256xf32>
    %156 = vector.extract_strided_slice %149 {offsets = [0, 256], sizes = [4, 256], strides = [1, 1]} : vector<4x1024xf32> to vector<4x256xf32>
    %157 = arith.negf %156 : vector<4x256xf32>
    %158 = math.exp %157 : vector<4x256xf32>
    %cst_39 = arith.constant 1.000000e+00 : f32
    %159 = vector.broadcast %cst_39 : f32 to vector<4x256xf32>
    %160 = arith.addf %159, %158 : vector<4x256xf32>
    %161 = arith.divf %159, %160 : vector<4x256xf32>
    %162 = vector.extract_strided_slice %149 {offsets = [0, 512], sizes = [4, 256], strides = [1, 1]} : vector<4x1024xf32> to vector<4x256xf32>
    %163 = math.tanh %162 : vector<4x256xf32>
    %164 = vector.extract_strided_slice %149 {offsets = [0, 768], sizes = [4, 256], strides = [1, 1]} : vector<4x1024xf32> to vector<4x256xf32>
    %165 = arith.negf %164 : vector<4x256xf32>
    %166 = math.exp %165 : vector<4x256xf32>
    %cst_40 = arith.constant 1.000000e+00 : f32
    %167 = vector.broadcast %cst_40 : f32 to vector<4x256xf32>
    %168 = arith.addf %167, %166 : vector<4x256xf32>
    %169 = arith.divf %167, %168 : vector<4x256xf32>
    %170 = arith.mulf %161, %128 : vector<4x256xf32>
    %171 = arith.mulf %155, %163 : vector<4x256xf32>
    %172 = arith.addf %170, %171 : vector<4x256xf32>
    %173 = math.tanh %172 : vector<4x256xf32>
    %174 = arith.mulf %169, %173 : vector<4x256xf32>
    %175 = vector.extract_strided_slice %174 {offsets = [0, 0], sizes = [2, 256], strides = [1, 1]} : vector<4x256xf32> to vector<2x256xf32>
    %176 = arith.index_cast %c3_i32 : i32 to index
    %c0_41 = arith.constant 0 : index
    %c0_42 = arith.constant 0 : index
    %177 = vector.load %arg3[%176, %c0_41, %c0_42] : memref<8x2x512xf32, #tpu.memory_space<vmem>>, vector<1x2x256xf32>
    %178 = vector.shape_cast %177 : vector<1x2x256xf32> to vector<2x256xf32>
    %179 = vector.shape_cast %175 : vector<2x256xf32> to vector<1x2x256xf32>
    tpu.vector_store %arg3[%176, %c0_41, %c0_42], %179 {strides = array<i32>} : memref<8x2x512xf32, #tpu.memory_space<vmem>>, vector<1x2x256xf32>,
    %180 = vector.extract_strided_slice %174 {offsets = [2, 0], sizes = [2, 256], strides = [1, 1]} : vector<4x256xf32> to vector<2x256xf32>
    %c7_i32_43 = arith.constant 7 : i32
    %181 = arith.subi %c7_i32_43, %c3_i32 : i32
    %182 = arith.index_cast %181 : i32 to index
    %c0_44 = arith.constant 0 : index
    %c256_45 = arith.constant 256 : index
    %183 = vector.load %arg3[%182, %c0_44, %c256_45] : memref<8x2x512xf32, #tpu.memory_space<vmem>>, vector<1x2x256xf32>
    %184 = vector.shape_cast %183 : vector<1x2x256xf32> to vector<2x256xf32>
    %185 = vector.shape_cast %180 : vector<2x256xf32> to vector<1x2x256xf32>
    tpu.vector_store %arg3[%182, %c0_44, %c256_45], %185 {strides = array<i32>} : memref<8x2x512xf32, #tpu.memory_space<vmem>>, vector<1x2x256xf32>,
    %186 = tpu.concatenate %174, %174 in 1 : vector<4x256xf32>, vector<4x256xf32> -> vector<4x512xf32>
    %187 = arith.mulf %186, %10 : vector<4x512xf32>
    %188 = arith.truncf %187 : vector<4x512xf32> to vector<4x512xbf16>
    %c4_i32 = arith.constant 4 : i32
    %cst_46 = arith.constant dense<0.000000e+00> : vector<4x1024xf32>
    %189 = tpu.matmul %188, %0, %cst_46 {dimension_numbers = #tpu.dot_dimension_numbers<[1], [0], [0], [1], [0, 0, 1, 1], [], []>} : vector<4x512xbf16>, vector<512x1024xbf16>, vector<4x1024xf32> -> vector<4x1024xf32>
    %190 = arith.index_cast %c4_i32 : i32 to index
    %c0_47 = arith.constant 0 : index
    %c0_48 = arith.constant 0 : index
    %191 = vector.load %arg1[%190, %c0_47, %c0_48] : memref<8x4x1024xf32, #tpu.memory_space<vmem>>, vector<1x4x1024xf32>
    %192 = vector.shape_cast %191 : vector<1x4x1024xf32> to vector<4x1024xf32>
    %193 = arith.addf %192, %189 : vector<4x1024xf32>
    %194 = vector.extract_strided_slice %193 {offsets = [0, 0], sizes = [4, 256], strides = [1, 1]} : vector<4x1024xf32> to vector<4x256xf32>
    %195 = arith.negf %194 : vector<4x256xf32>
    %196 = math.exp %195 : vector<4x256xf32>
    %cst_49 = arith.constant 1.000000e+00 : f32
    %197 = vector.broadcast %cst_49 : f32 to vector<4x256xf32>
    %198 = arith.addf %197, %196 : vector<4x256xf32>
    %199 = arith.divf %197, %198 : vector<4x256xf32>
    %200 = vector.extract_strided_slice %193 {offsets = [0, 256], sizes = [4, 256], strides = [1, 1]} : vector<4x1024xf32> to vector<4x256xf32>
    %201 = arith.negf %200 : vector<4x256xf32>
    %202 = math.exp %201 : vector<4x256xf32>
    %cst_50 = arith.constant 1.000000e+00 : f32
    %203 = vector.broadcast %cst_50 : f32 to vector<4x256xf32>
    %204 = arith.addf %203, %202 : vector<4x256xf32>
    %205 = arith.divf %203, %204 : vector<4x256xf32>
    %206 = vector.extract_strided_slice %193 {offsets = [0, 512], sizes = [4, 256], strides = [1, 1]} : vector<4x1024xf32> to vector<4x256xf32>
    %207 = math.tanh %206 : vector<4x256xf32>
    %208 = vector.extract_strided_slice %193 {offsets = [0, 768], sizes = [4, 256], strides = [1, 1]} : vector<4x1024xf32> to vector<4x256xf32>
    %209 = arith.negf %208 : vector<4x256xf32>
    %210 = math.exp %209 : vector<4x256xf32>
    %cst_51 = arith.constant 1.000000e+00 : f32
    %211 = vector.broadcast %cst_51 : f32 to vector<4x256xf32>
    %212 = arith.addf %211, %210 : vector<4x256xf32>
    %213 = arith.divf %211, %212 : vector<4x256xf32>
    %214 = arith.mulf %205, %172 : vector<4x256xf32>
    %215 = arith.mulf %199, %207 : vector<4x256xf32>
    %216 = arith.addf %214, %215 : vector<4x256xf32>
    %217 = math.tanh %216 : vector<4x256xf32>
    %218 = arith.mulf %213, %217 : vector<4x256xf32>
    %219 = vector.extract_strided_slice %218 {offsets = [0, 0], sizes = [2, 256], strides = [1, 1]} : vector<4x256xf32> to vector<2x256xf32>
    %220 = arith.index_cast %c4_i32 : i32 to index
    %c0_52 = arith.constant 0 : index
    %c0_53 = arith.constant 0 : index
    %221 = vector.load %arg3[%220, %c0_52, %c0_53] : memref<8x2x512xf32, #tpu.memory_space<vmem>>, vector<1x2x256xf32>
    %222 = vector.shape_cast %221 : vector<1x2x256xf32> to vector<2x256xf32>
    %223 = vector.shape_cast %219 : vector<2x256xf32> to vector<1x2x256xf32>
    tpu.vector_store %arg3[%220, %c0_52, %c0_53], %223 {strides = array<i32>} : memref<8x2x512xf32, #tpu.memory_space<vmem>>, vector<1x2x256xf32>,
    %224 = vector.extract_strided_slice %218 {offsets = [2, 0], sizes = [2, 256], strides = [1, 1]} : vector<4x256xf32> to vector<2x256xf32>
    %c7_i32_54 = arith.constant 7 : i32
    %225 = arith.subi %c7_i32_54, %c4_i32 : i32
    %226 = arith.index_cast %225 : i32 to index
    %c0_55 = arith.constant 0 : index
    %c256_56 = arith.constant 256 : index
    %227 = vector.load %arg3[%226, %c0_55, %c256_56] : memref<8x2x512xf32, #tpu.memory_space<vmem>>, vector<1x2x256xf32>
    %228 = vector.shape_cast %227 : vector<1x2x256xf32> to vector<2x256xf32>
    %229 = vector.shape_cast %224 : vector<2x256xf32> to vector<1x2x256xf32>
    tpu.vector_store %arg3[%226, %c0_55, %c256_56], %229 {strides = array<i32>} : memref<8x2x512xf32, #tpu.memory_space<vmem>>, vector<1x2x256xf32>,
    %230 = tpu.concatenate %218, %218 in 1 : vector<4x256xf32>, vector<4x256xf32> -> vector<4x512xf32>
    %231 = arith.mulf %230, %10 : vector<4x512xf32>
    %232 = arith.truncf %231 : vector<4x512xf32> to vector<4x512xbf16>
    %c5_i32 = arith.constant 5 : i32
    %cst_57 = arith.constant dense<0.000000e+00> : vector<4x1024xf32>
    %233 = tpu.matmul %232, %0, %cst_57 {dimension_numbers = #tpu.dot_dimension_numbers<[1], [0], [0], [1], [0, 0, 1, 1], [], []>} : vector<4x512xbf16>, vector<512x1024xbf16>, vector<4x1024xf32> -> vector<4x1024xf32>
    %234 = arith.index_cast %c5_i32 : i32 to index
    %c0_58 = arith.constant 0 : index
    %c0_59 = arith.constant 0 : index
    %235 = vector.load %arg1[%234, %c0_58, %c0_59] : memref<8x4x1024xf32, #tpu.memory_space<vmem>>, vector<1x4x1024xf32>
    %236 = vector.shape_cast %235 : vector<1x4x1024xf32> to vector<4x1024xf32>
    %237 = arith.addf %236, %233 : vector<4x1024xf32>
    %238 = vector.extract_strided_slice %237 {offsets = [0, 0], sizes = [4, 256], strides = [1, 1]} : vector<4x1024xf32> to vector<4x256xf32>
    %239 = arith.negf %238 : vector<4x256xf32>
    %240 = math.exp %239 : vector<4x256xf32>
    %cst_60 = arith.constant 1.000000e+00 : f32
    %241 = vector.broadcast %cst_60 : f32 to vector<4x256xf32>
    %242 = arith.addf %241, %240 : vector<4x256xf32>
    %243 = arith.divf %241, %242 : vector<4x256xf32>
    %244 = vector.extract_strided_slice %237 {offsets = [0, 256], sizes = [4, 256], strides = [1, 1]} : vector<4x1024xf32> to vector<4x256xf32>
    %245 = arith.negf %244 : vector<4x256xf32>
    %246 = math.exp %245 : vector<4x256xf32>
    %cst_61 = arith.constant 1.000000e+00 : f32
    %247 = vector.broadcast %cst_61 : f32 to vector<4x256xf32>
    %248 = arith.addf %247, %246 : vector<4x256xf32>
    %249 = arith.divf %247, %248 : vector<4x256xf32>
    %250 = vector.extract_strided_slice %237 {offsets = [0, 512], sizes = [4, 256], strides = [1, 1]} : vector<4x1024xf32> to vector<4x256xf32>
    %251 = math.tanh %250 : vector<4x256xf32>
    %252 = vector.extract_strided_slice %237 {offsets = [0, 768], sizes = [4, 256], strides = [1, 1]} : vector<4x1024xf32> to vector<4x256xf32>
    %253 = arith.negf %252 : vector<4x256xf32>
    %254 = math.exp %253 : vector<4x256xf32>
    %cst_62 = arith.constant 1.000000e+00 : f32
    %255 = vector.broadcast %cst_62 : f32 to vector<4x256xf32>
    %256 = arith.addf %255, %254 : vector<4x256xf32>
    %257 = arith.divf %255, %256 : vector<4x256xf32>
    %258 = arith.mulf %249, %216 : vector<4x256xf32>
    %259 = arith.mulf %243, %251 : vector<4x256xf32>
    %260 = arith.addf %258, %259 : vector<4x256xf32>
    %261 = math.tanh %260 : vector<4x256xf32>
    %262 = arith.mulf %257, %261 : vector<4x256xf32>
    %263 = vector.extract_strided_slice %262 {offsets = [0, 0], sizes = [2, 256], strides = [1, 1]} : vector<4x256xf32> to vector<2x256xf32>
    %264 = arith.index_cast %c5_i32 : i32 to index
    %c0_63 = arith.constant 0 : index
    %c0_64 = arith.constant 0 : index
    %265 = vector.load %arg3[%264, %c0_63, %c0_64] : memref<8x2x512xf32, #tpu.memory_space<vmem>>, vector<1x2x256xf32>
    %266 = vector.shape_cast %265 : vector<1x2x256xf32> to vector<2x256xf32>
    %267 = vector.shape_cast %263 : vector<2x256xf32> to vector<1x2x256xf32>
    tpu.vector_store %arg3[%264, %c0_63, %c0_64], %267 {strides = array<i32>} : memref<8x2x512xf32, #tpu.memory_space<vmem>>, vector<1x2x256xf32>,
    %268 = vector.extract_strided_slice %262 {offsets = [2, 0], sizes = [2, 256], strides = [1, 1]} : vector<4x256xf32> to vector<2x256xf32>
    %c7_i32_65 = arith.constant 7 : i32
    %269 = arith.subi %c7_i32_65, %c5_i32 : i32
    %270 = arith.index_cast %269 : i32 to index
    %c0_66 = arith.constant 0 : index
    %c256_67 = arith.constant 256 : index
    %271 = vector.load %arg3[%270, %c0_66, %c256_67] : memref<8x2x512xf32, #tpu.memory_space<vmem>>, vector<1x2x256xf32>
    %272 = vector.shape_cast %271 : vector<1x2x256xf32> to vector<2x256xf32>
    %273 = vector.shape_cast %268 : vector<2x256xf32> to vector<1x2x256xf32>
    tpu.vector_store %arg3[%270, %c0_66, %c256_67], %273 {strides = array<i32>} : memref<8x2x512xf32, #tpu.memory_space<vmem>>, vector<1x2x256xf32>,
    %274 = tpu.concatenate %262, %262 in 1 : vector<4x256xf32>, vector<4x256xf32> -> vector<4x512xf32>
    %275 = arith.mulf %274, %10 : vector<4x512xf32>
    %276 = arith.truncf %275 : vector<4x512xf32> to vector<4x512xbf16>
    %c6_i32 = arith.constant 6 : i32
    %cst_68 = arith.constant dense<0.000000e+00> : vector<4x1024xf32>
    %277 = tpu.matmul %276, %0, %cst_68 {dimension_numbers = #tpu.dot_dimension_numbers<[1], [0], [0], [1], [0, 0, 1, 1], [], []>} : vector<4x512xbf16>, vector<512x1024xbf16>, vector<4x1024xf32> -> vector<4x1024xf32>
    %278 = arith.index_cast %c6_i32 : i32 to index
    %c0_69 = arith.constant 0 : index
    %c0_70 = arith.constant 0 : index
    %279 = vector.load %arg1[%278, %c0_69, %c0_70] : memref<8x4x1024xf32, #tpu.memory_space<vmem>>, vector<1x4x1024xf32>
    %280 = vector.shape_cast %279 : vector<1x4x1024xf32> to vector<4x1024xf32>
    %281 = arith.addf %280, %277 : vector<4x1024xf32>
    %282 = vector.extract_strided_slice %281 {offsets = [0, 0], sizes = [4, 256], strides = [1, 1]} : vector<4x1024xf32> to vector<4x256xf32>
    %283 = arith.negf %282 : vector<4x256xf32>
    %284 = math.exp %283 : vector<4x256xf32>
    %cst_71 = arith.constant 1.000000e+00 : f32
    %285 = vector.broadcast %cst_71 : f32 to vector<4x256xf32>
    %286 = arith.addf %285, %284 : vector<4x256xf32>
    %287 = arith.divf %285, %286 : vector<4x256xf32>
    %288 = vector.extract_strided_slice %281 {offsets = [0, 256], sizes = [4, 256], strides = [1, 1]} : vector<4x1024xf32> to vector<4x256xf32>
    %289 = arith.negf %288 : vector<4x256xf32>
    %290 = math.exp %289 : vector<4x256xf32>
    %cst_72 = arith.constant 1.000000e+00 : f32
    %291 = vector.broadcast %cst_72 : f32 to vector<4x256xf32>
    %292 = arith.addf %291, %290 : vector<4x256xf32>
    %293 = arith.divf %291, %292 : vector<4x256xf32>
    %294 = vector.extract_strided_slice %281 {offsets = [0, 512], sizes = [4, 256], strides = [1, 1]} : vector<4x1024xf32> to vector<4x256xf32>
    %295 = math.tanh %294 : vector<4x256xf32>
    %296 = vector.extract_strided_slice %281 {offsets = [0, 768], sizes = [4, 256], strides = [1, 1]} : vector<4x1024xf32> to vector<4x256xf32>
    %297 = arith.negf %296 : vector<4x256xf32>
    %298 = math.exp %297 : vector<4x256xf32>
    %cst_73 = arith.constant 1.000000e+00 : f32
    %299 = vector.broadcast %cst_73 : f32 to vector<4x256xf32>
    %300 = arith.addf %299, %298 : vector<4x256xf32>
    %301 = arith.divf %299, %300 : vector<4x256xf32>
    %302 = arith.mulf %293, %260 : vector<4x256xf32>
    %303 = arith.mulf %287, %295 : vector<4x256xf32>
    %304 = arith.addf %302, %303 : vector<4x256xf32>
    %305 = math.tanh %304 : vector<4x256xf32>
    %306 = arith.mulf %301, %305 : vector<4x256xf32>
    %307 = vector.extract_strided_slice %306 {offsets = [0, 0], sizes = [2, 256], strides = [1, 1]} : vector<4x256xf32> to vector<2x256xf32>
    %308 = arith.index_cast %c6_i32 : i32 to index
    %c0_74 = arith.constant 0 : index
    %c0_75 = arith.constant 0 : index
    %309 = vector.load %arg3[%308, %c0_74, %c0_75] : memref<8x2x512xf32, #tpu.memory_space<vmem>>, vector<1x2x256xf32>
    %310 = vector.shape_cast %309 : vector<1x2x256xf32> to vector<2x256xf32>
    %311 = vector.shape_cast %307 : vector<2x256xf32> to vector<1x2x256xf32>
    tpu.vector_store %arg3[%308, %c0_74, %c0_75], %311 {strides = array<i32>} : memref<8x2x512xf32, #tpu.memory_space<vmem>>, vector<1x2x256xf32>,
    %312 = vector.extract_strided_slice %306 {offsets = [2, 0], sizes = [2, 256], strides = [1, 1]} : vector<4x256xf32> to vector<2x256xf32>
    %c7_i32_76 = arith.constant 7 : i32
    %313 = arith.subi %c7_i32_76, %c6_i32 : i32
    %314 = arith.index_cast %313 : i32 to index
    %c0_77 = arith.constant 0 : index
    %c256_78 = arith.constant 256 : index
    %315 = vector.load %arg3[%314, %c0_77, %c256_78] : memref<8x2x512xf32, #tpu.memory_space<vmem>>, vector<1x2x256xf32>
    %316 = vector.shape_cast %315 : vector<1x2x256xf32> to vector<2x256xf32>
    %317 = vector.shape_cast %312 : vector<2x256xf32> to vector<1x2x256xf32>
    tpu.vector_store %arg3[%314, %c0_77, %c256_78], %317 {strides = array<i32>} : memref<8x2x512xf32, #tpu.memory_space<vmem>>, vector<1x2x256xf32>,
    %318 = tpu.concatenate %306, %306 in 1 : vector<4x256xf32>, vector<4x256xf32> -> vector<4x512xf32>
    %319 = arith.mulf %318, %10 : vector<4x512xf32>
    %320 = arith.truncf %319 : vector<4x512xf32> to vector<4x512xbf16>
    %c7_i32_79 = arith.constant 7 : i32
    %cst_80 = arith.constant dense<0.000000e+00> : vector<4x1024xf32>
    %321 = tpu.matmul %320, %0, %cst_80 {dimension_numbers = #tpu.dot_dimension_numbers<[1], [0], [0], [1], [0, 0, 1, 1], [], []>} : vector<4x512xbf16>, vector<512x1024xbf16>, vector<4x1024xf32> -> vector<4x1024xf32>
    %322 = arith.index_cast %c7_i32_79 : i32 to index
    %c0_81 = arith.constant 0 : index
    %c0_82 = arith.constant 0 : index
    %323 = vector.load %arg1[%322, %c0_81, %c0_82] : memref<8x4x1024xf32, #tpu.memory_space<vmem>>, vector<1x4x1024xf32>
    %324 = vector.shape_cast %323 : vector<1x4x1024xf32> to vector<4x1024xf32>
    %325 = arith.addf %324, %321 : vector<4x1024xf32>
    %326 = vector.extract_strided_slice %325 {offsets = [0, 0], sizes = [4, 256], strides = [1, 1]} : vector<4x1024xf32> to vector<4x256xf32>
    %327 = arith.negf %326 : vector<4x256xf32>
    %328 = math.exp %327 : vector<4x256xf32>
    %cst_83 = arith.constant 1.000000e+00 : f32
    %329 = vector.broadcast %cst_83 : f32 to vector<4x256xf32>
    %330 = arith.addf %329, %328 : vector<4x256xf32>
    %331 = arith.divf %329, %330 : vector<4x256xf32>
    %332 = vector.extract_strided_slice %325 {offsets = [0, 256], sizes = [4, 256], strides = [1, 1]} : vector<4x1024xf32> to vector<4x256xf32>
    %333 = arith.negf %332 : vector<4x256xf32>
    %334 = math.exp %333 : vector<4x256xf32>
    %cst_84 = arith.constant 1.000000e+00 : f32
    %335 = vector.broadcast %cst_84 : f32 to vector<4x256xf32>
    %336 = arith.addf %335, %334 : vector<4x256xf32>
    %337 = arith.divf %335, %336 : vector<4x256xf32>
    %338 = vector.extract_strided_slice %325 {offsets = [0, 512], sizes = [4, 256], strides = [1, 1]} : vector<4x1024xf32> to vector<4x256xf32>
    %339 = math.tanh %338 : vector<4x256xf32>
    %340 = vector.extract_strided_slice %325 {offsets = [0, 768], sizes = [4, 256], strides = [1, 1]} : vector<4x1024xf32> to vector<4x256xf32>
    %341 = arith.negf %340 : vector<4x256xf32>
    %342 = math.exp %341 : vector<4x256xf32>
    %cst_85 = arith.constant 1.000000e+00 : f32
    %343 = vector.broadcast %cst_85 : f32 to vector<4x256xf32>
    %344 = arith.addf %343, %342 : vector<4x256xf32>
    %345 = arith.divf %343, %344 : vector<4x256xf32>
    %346 = arith.mulf %337, %304 : vector<4x256xf32>
    %347 = arith.mulf %331, %339 : vector<4x256xf32>
    %348 = arith.addf %346, %347 : vector<4x256xf32>
    %349 = math.tanh %348 : vector<4x256xf32>
    %350 = arith.mulf %345, %349 : vector<4x256xf32>
    %351 = vector.extract_strided_slice %350 {offsets = [0, 0], sizes = [2, 256], strides = [1, 1]} : vector<4x256xf32> to vector<2x256xf32>
    %352 = arith.index_cast %c7_i32_79 : i32 to index
    %c0_86 = arith.constant 0 : index
    %c0_87 = arith.constant 0 : index
    %353 = vector.load %arg3[%352, %c0_86, %c0_87] : memref<8x2x512xf32, #tpu.memory_space<vmem>>, vector<1x2x256xf32>
    %354 = vector.shape_cast %353 : vector<1x2x256xf32> to vector<2x256xf32>
    %355 = vector.shape_cast %351 : vector<2x256xf32> to vector<1x2x256xf32>
    tpu.vector_store %arg3[%352, %c0_86, %c0_87], %355 {strides = array<i32>} : memref<8x2x512xf32, #tpu.memory_space<vmem>>, vector<1x2x256xf32>,
    %356 = vector.extract_strided_slice %350 {offsets = [2, 0], sizes = [2, 256], strides = [1, 1]} : vector<4x256xf32> to vector<2x256xf32>
    %c7_i32_88 = arith.constant 7 : i32
    %357 = arith.subi %c7_i32_88, %c7_i32_79 : i32
    %358 = arith.index_cast %357 : i32 to index
    %c0_89 = arith.constant 0 : index
    %c256_90 = arith.constant 256 : index
    %359 = vector.load %arg3[%358, %c0_89, %c256_90] : memref<8x2x512xf32, #tpu.memory_space<vmem>>, vector<1x2x256xf32>
    %360 = vector.shape_cast %359 : vector<1x2x256xf32> to vector<2x256xf32>
    %361 = vector.shape_cast %356 : vector<2x256xf32> to vector<1x2x256xf32>
    tpu.vector_store %arg3[%358, %c0_89, %c256_90], %361 {strides = array<i32>} : memref<8x2x512xf32, #tpu.memory_space<vmem>>, vector<1x2x256xf32>,
    %362 = tpu.concatenate %350, %350 in 1 : vector<4x256xf32>, vector<4x256xf32> -> vector<4x512xf32>
    %363 = arith.mulf %362, %10 : vector<4x512xf32>
    %364 = arith.truncf %363 : vector<4x512xf32> to vector<4x512xbf16>
    %c8_i32 = arith.constant 8 : i32
    return
  }
  func.func @transform_0(%arg0: i32) -> (i32, i32, i32) {
    %c0_i32 = arith.constant 0 : i32
    %c0_i32_0 = arith.constant 0 : i32
    %c0_i32_1 = arith.constant 0 : i32
    %c0_i32_2 = arith.constant 0 : i32
    return %c0_i32, %c0_i32_0, %c0_i32_1 : i32, i32, i32
  }
  func.func @transform_1(%arg0: i32) -> (i32, i32) {
    %c0_i32 = arith.constant 0 : i32
    %c0_i32_0 = arith.constant 0 : i32
    %c0_i32_1 = arith.constant 0 : i32
    return %c0_i32, %c0_i32_0 : i32, i32
  }
  func.func @transform_2(%arg0: i32) -> (i32, i32, i32) {
    %c0_i32 = arith.constant 0 : i32
    %c0_i32_0 = arith.constant 0 : i32
    %c0_i32_1 = arith.constant 0 : i32
    %c0_i32_2 = arith.constant 0 : i32
    return %c0_i32, %c0_i32_0, %c0_i32_1 : i32, i32, i32
  }
}

</mosaic_0001>

<llo_original>
// kernel: lstm_backbone_forward.1
$region0: #{lstm_backbone_forward.1}
  #allocation0 [shape = 'u32[]', space=smem, size = 0x4, offset = 0x4, fixed_abs, tag = 'smem constant byte address 0x4 - core index']
  #allocation1 [shape = 'u32[72,128]{1,0:T(1,128)}', space=vmem, size = 0x9000, scoped, tag = 'internal scratch']
  %s0 = inlined_call_operand.vmem [shape: f32[8,4,1024], index: 0, kind: input, shape index: {}]
  %s1 = inlined_call_operand.vmem [shape: bf16[512,1024], index: 1, kind: input, shape index: {}]
  %s2 = inlined_call_operand.vmem [shape: f32[8,2,512], index: 2, kind: output, shape index: {}]
  %s3 = sld [smem:[#allocation0]]
  $region18: #{lstm_backbone_forward.1} parent=0
    _
  %s5 = ssub.s32 1, %s3
  %s6 = scalar_select 0, %s5, %s3
  // Predicated region
  $region2: #{lstm_backbone_forward.1} parent=0 // pred_check
    _
  $region3: #{lstm_backbone_forward.1} parent=0 // pred_check_branch
    %8 = sbr.rel (0) target = $region5
  $region4: #{lstm_backbone_forward.1} parent=0 // pred_region
    _
  $region5: #{lstm_backbone_forward.1} parent=0 // pred_fallthru
    _
  // Predicated region
  $region6: #{lstm_backbone_forward.1} parent=0 // pred_check
    _
  $region7: #{lstm_backbone_forward.1} parent=0 // pred_check_branch
    %10 = sbr.rel (0) target = $region9
  $region8: #{lstm_backbone_forward.1} parent=0 // pred_region
    _
  $region9: #{lstm_backbone_forward.1} parent=0 // pred_fallthru
    _
  %v12 = vld [vmem:[%s1] sm:$0xff]
  %v13 = vld [vmem:[%s1 + $0x8] sm:$0xff]
  %v14 = vld [vmem:[%s1 + $0x10] sm:$0xff]
  %v15 = vld [vmem:[%s1 + $0x18] sm:$0xff]
  %v16 = vld [vmem:[%s1 + $0x20] sm:$0xff]
  %v17 = vld [vmem:[%s1 + $0x28] sm:$0xff]
  %v18 = vld [vmem:[%s1 + $0x30] sm:$0xff]
  %v19 = vld [vmem:[%s1 + $0x38] sm:$0xff]
  %v20 = vld [vmem:[%s1 + $0x40] sm:$0xff]
  %v21 = vld [vmem:[%s1 + $0x48] sm:$0xff]
  %v22 = vld [vmem:[%s1 + $0x50] sm:$0xff]
  %v23 = vld [vmem:[%s1 + $0x58] sm:$0xff]
  %v24 = vld [vmem:[%s1 + $0x60] sm:$0xff]
  %v25 = vld [vmem:[%s1 + $0x68] sm:$0xff]
  %v26 = vld [vmem:[%s1 + $0x70] sm:$0xff]
  %v27 = vld [vmem:[%s1 + $0x78] sm:$0xff]
  %v28 = vld [vmem:[%s1 + $0x80] sm:$0xff]
  %v29 = vld [vmem:[%s1 + $0x88] sm:$0xff]
  %v30 = vld [vmem:[%s1 + $0x90] sm:$0xff]
  %v31 = vld [vmem:[%s1 + $0x98] sm:$0xff]
  %v32 = vld [vmem:[%s1 + $0xa0] sm:$0xff]
  %v33 = vld [vmem:[%s1 + $0xa8] sm:$0xff]
  %v34 = vld [vmem:[%s1 + $0xb0] sm:$0xff]
  %v35 = vld [vmem:[%s1 + $0xb8] sm:$0xff]
  %v36 = vld [vmem:[%s1 + $0xc0] sm:$0xff]
  %v37 = vld [vmem:[%s1 + $0xc8] sm:$0xff]
  %v38 = vld [vmem:[%s1 + $0xd0] sm:$0xff]
  %v39 = vld [vmem:[%s1 + $0xd8] sm:$0xff]
  %v40 = vld [vmem:[%s1 + $0xe0] sm:$0xff]
  %v41 = vld [vmem:[%s1 + $0xe8] sm:$0xff]
  %v42 = vld [vmem:[%s1 + $0xf0] sm:$0xff]
  %v43 = vld [vmem:[%s1 + $0xf8] sm:$0xff]
  %v44 = vld [vmem:[%s1 + $0x100] sm:$0xff]
  %v45 = vld [vmem:[%s1 + $0x108] sm:$0xff]
  %v46 = vld [vmem:[%s1 + $0x110] sm:$0xff]
  %v47 = vld [vmem:[%s1 + $0x118] sm:$0xff]
  %v48 = vld [vmem:[%s1 + $0x120] sm:$0xff]
  %v49 = vld [vmem:[%s1 + $0x128] sm:$0xff]
  %v50 = vld [vmem:[%s1 + $0x130] sm:$0xff]
  %v51 = vld [vmem:[%s1 + $0x138] sm:$0xff]
  %v52 = vld [vmem:[%s1 + $0x140] sm:$0xff]
  %v53 = vld [vmem:[%s1 + $0x148] sm:$0xff]
  %v54 = vld [vmem:[%s1 + $0x150] sm:$0xff]
  %v55 = vld [vmem:[%s1 + $0x158] sm:$0xff]
  %v56 = vld [vmem:[%s1 + $0x160] sm:$0xff]
  %v57 = vld [vmem:[%s1 + $0x168] sm:$0xff]
  %v58 = vld [vmem:[%s1 + $0x170] sm:$0xff]
  %v59 = vld [vmem:[%s1 + $0x178] sm:$0xff]
  %v60 = vld [vmem:[%s1 + $0x180] sm:$0xff]
  %v61 = vld [vmem:[%s1 + $0x188] sm:$0xff]
  %v62 = vld [vmem:[%s1 + $0x190] sm:$0xff]
  %v63 = vld [vmem:[%s1 + $0x198] sm:$0xff]
  %v64 = vld [vmem:[%s1 + $0x1a0] sm:$0xff]
  %v65 = vld [vmem:[%s1 + $0x1a8] sm:$0xff]
  %v66 = vld [vmem:[%s1 + $0x1b0] sm:$0xff]
  %v67 = vld [vmem:[%s1 + $0x1b8] sm:$0xff]
  %v68 = vld [vmem:[%s1 + $0x1c0] sm:$0xff]
  %v69 = vld [vmem:[%s1 + $0x1c8] sm:$0xff]
  %v70 = vld [vmem:[%s1 + $0x1d0] sm:$0xff]
  %v71 = vld [vmem:[%s1 + $0x1d8] sm:$0xff]
  %v72 = vld [vmem:[%s1 + $0x1e0] sm:$0xff]
  %v73 = vld [vmem:[%s1 + $0x1e8] sm:$0xff]
  %v74 = vld [vmem:[%s1 + $0x1f0] sm:$0xff]
  %v75 = vld [vmem:[%s1 + $0x1f8] sm:$0xff]
  %v76 = vld [vmem:[%s1 + $0x200] sm:$0xff]
  %v77 = vld [vmem:[%s1 + $0x208] sm:$0xff]
  %v78 = vld [vmem:[%s1 + $0x210] sm:$0xff]
  %v79 = vld [vmem:[%s1 + $0x218] sm:$0xff]
  %v80 = vld [vmem:[%s1 + $0x220] sm:$0xff]
  %v81 = vld [vmem:[%s1 + $0x228] sm:$0xff]
  %v82 = vld [vmem:[%s1 + $0x230] sm:$0xff]
  %v83 = vld [vmem:[%s1 + $0x238] sm:$0xff]
  %v84 = vld [vmem:[%s1 + $0x240] sm:$0xff]
  %v85 = vld [vmem:[%s1 + $0x248] sm:$0xff]
  %v86 = vld [vmem:[%s1 + $0x250] sm:$0xff]
  %v87 = vld [vmem:[%s1 + $0x258] sm:$0xff]
  %v88 = vld [vmem:[%s1 + $0x260] sm:$0xff]
  %v89 = vld [vmem:[%s1 + $0x268] sm:$0xff]
  %v90 = vld [vmem:[%s1 + $0x270] sm:$0xff]
  %v91 = vld [vmem:[%s1 + $0x278] sm:$0xff]
  %v92 = vld [vmem:[%s1 + $0x280] sm:$0xff]
  %v93 = vld [vmem:[%s1 + $0x288] sm:$0xff]
  %v94 = vld [vmem:[%s1 + $0x290] sm:$0xff]
  %v95 = vld [vmem:[%s1 + $0x298] sm:$0xff]
  %v96 = vld [vmem:[%s1 + $0x2a0] sm:$0xff]
  %v97 = vld [vmem:[%s1 + $0x2a8] sm:$0xff]
  %v98 = vld [vmem:[%s1 + $0x2b0] sm:$0xff]
  %v99 = vld [vmem:[%s1 + $0x2b8] sm:$0xff]
  %v100 = vld [vmem:[%s1 + $0x2c0] sm:$0xff]
  %v101 = vld [vmem:[%s1 + $0x2c8] sm:$0xff]
  %v102 = vld [vmem:[%s1 + $0x2d0] sm:$0xff]
  %v103 = vld [vmem:[%s1 + $0x2d8] sm:$0xff]
  %v104 = vld [vmem:[%s1 + $0x2e0] sm:$0xff]
  %v105 = vld [vmem:[%s1 + $0x2e8] sm:$0xff]
  %v106 = vld [vmem:[%s1 + $0x2f0] sm:$0xff]
  %v107 = vld [vmem:[%s1 + $0x2f8] sm:$0xff]
  %v108 = vld [vmem:[%s1 + $0x300] sm:$0xff]
  %v109 = vld [vmem:[%s1 + $0x308] sm:$0xff]
  %v110 = vld [vmem:[%s1 + $0x310] sm:$0xff]
  %v111 = vld [vmem:[%s1 + $0x318] sm:$0xff]
  %v112 = vld [vmem:[%s1 + $0x320] sm:$0xff]
  %v113 = vld [vmem:[%s1 + $0x328] sm:$0xff]
  %v114 = vld [vmem:[%s1 + $0x330] sm:$0xff]
  %v115 = vld [vmem:[%s1 + $0x338] sm:$0xff]
  %v116 = vld [vmem:[%s1 + $0x340] sm:$0xff]
  %v117 = vld [vmem:[%s1 + $0x348] sm:$0xff]
  %v118 = vld [vmem:[%s1 + $0x350] sm:$0xff]
  %v119 = vld [vmem:[%s1 + $0x358] sm:$0xff]
  %v120 = vld [vmem:[%s1 + $0x360] sm:$0xff]
  %v121 = vld [vmem:[%s1 + $0x368] sm:$0xff]
  %v122 = vld [vmem:[%s1 + $0x370] sm:$0xff]
  %v123 = vld [vmem:[%s1 + $0x378] sm:$0xff]
  %v124 = vld [vmem:[%s1 + $0x380] sm:$0xff]
  %v125 = vld [vmem:[%s1 + $0x388] sm:$0xff]
  %v126 = vld [vmem:[%s1 + $0x390] sm:$0xff]
  %v127 = vld [vmem:[%s1 + $0x398] sm:$0xff]
  %v128 = vld [vmem:[%s1 + $0x3a0] sm:$0xff]
  %v129 = vld [vmem:[%s1 + $0x3a8] sm:$0xff]
  %v130 = vld [vmem:[%s1 + $0x3b0] sm:$0xff]
  %v131 = vld [vmem:[%s1 + $0x3b8] sm:$0xff]
  %v132 = vld [vmem:[%s1 + $0x3c0] sm:$0xff]
  %v133 = vld [vmem:[%s1 + $0x3c8] sm:$0xff]
  %v134 = vld [vmem:[%s1 + $0x3d0] sm:$0xff]
  %v135 = vld [vmem:[%s1 + $0x3d8] sm:$0xff]
  %v136 = vld [vmem:[%s1 + $0x3e0] sm:$0xff]
  %v137 = vld [vmem:[%s1 + $0x3e8] sm:$0xff]
  %v138 = vld [vmem:[%s1 + $0x3f0] sm:$0xff]
  %v139 = vld [vmem:[%s1 + $0x3f8] sm:$0xff]
  %v140 = vld [vmem:[%s1 + $0x400] sm:$0xff]
  %v141 = vld [vmem:[%s1 + $0x408] sm:$0xff]
  %v142 = vld [vmem:[%s1 + $0x410] sm:$0xff]
  %v143 = vld [vmem:[%s1 + $0x418] sm:$0xff]
  %v144 = vld [vmem:[%s1 + $0x420] sm:$0xff]
  %v145 = vld [vmem:[%s1 + $0x428] sm:$0xff]
  %v146 = vld [vmem:[%s1 + $0x430] sm:$0xff]
  %v147 = vld [vmem:[%s1 + $0x438] sm:$0xff]
  %v148 = vld [vmem:[%s1 + $0x440] sm:$0xff]
  %v149 = vld [vmem:[%s1 + $0x448] sm:$0xff]
  %v150 = vld [vmem:[%s1 + $0x450] sm:$0xff]
  %v151 = vld [vmem:[%s1 + $0x458] sm:$0xff]
  %v152 = vld [vmem:[%s1 + $0x460] sm:$0xff]
  %v153 = vld [vmem:[%s1 + $0x468] sm:$0xff]
  %v154 = vld [vmem:[%s1 + $0x470] sm:$0xff]
  %v155 = vld [vmem:[%s1 + $0x478] sm:$0xff]
  %v156 = vld [vmem:[%s1 + $0x480] sm:$0xff]
  %v157 = vld [vmem:[%s1 + $0x488] sm:$0xff]
  %v158 = vld [vmem:[%s1 + $0x490] sm:$0xff]
  %v159 = vld [vmem:[%s1 + $0x498] sm:$0xff]
  %v160 = vld [vmem:[%s1 + $0x4a0] sm:$0xff]
  %v161 = vld [vmem:[%s1 + $0x4a8] sm:$0xff]
  %v162 = vld [vmem:[%s1 + $0x4b0] sm:$0xff]
  %v163 = vld [vmem:[%s1 + $0x4b8] sm:$0xff]
  %v164 = vld [vmem:[%s1 + $0x4c0] sm:$0xff]
  %v165 = vld [vmem:[%s1 + $0x4c8] sm:$0xff]
  %v166 = vld [vmem:[%s1 + $0x4d0] sm:$0xff]
  %v167 = vld [vmem:[%s1 + $0x4d8] sm:$0xff]
  %v168 = vld [vmem:[%s1 + $0x4e0] sm:$0xff]
  %v169 = vld [vmem:[%s1 + $0x4e8] sm:$0xff]
  %v170 = vld [vmem:[%s1 + $0x4f0] sm:$0xff]
  %v171 = vld [vmem:[%s1 + $0x4f8] sm:$0xff]
  %v172 = vld [vmem:[%s1 + $0x500] sm:$0xff]
  %v173 = vld [vmem:[%s1 + $0x508] sm:$0xff]
  %v174 = vld [vmem:[%s1 + $0x510] sm:$0xff]
  %v175 = vld [vmem:[%s1 + $0x518] sm:$0xff]
  %v176 = vld [vmem:[%s1 + $0x520] sm:$0xff]
  %v177 = vld [vmem:[%s1 + $0x528] sm:$0xff]
  %v178 = vld [vmem:[%s1 + $0x530] sm:$0xff]
  %v179 = vld [vmem:[%s1 + $0x538] sm:$0xff]
  %v180 = vld [vmem:[%s1 + $0x540] sm:$0xff]
  %v181 = vld [vmem:[%s1 + $0x548] sm:$0xff]
  %v182 = vld [vmem:[%s1 + $0x550] sm:$0xff]
  %v183 = vld [vmem:[%s1 + $0x558] sm:$0xff]
  %v184 = vld [vmem:[%s1 + $0x560] sm:$0xff]
  %v185 = vld [vmem:[%s1 + $0x568] sm:$0xff]
  %v186 = vld [vmem:[%s1 + $0x570] sm:$0xff]
  %v187 = vld [vmem:[%s1 + $0x578] sm:$0xff]
  %v188 = vld [vmem:[%s1 + $0x580] sm:$0xff]
  %v189 = vld [vmem:[%s1 + $0x588] sm:$0xff]
  %v190 = vld [vmem:[%s1 + $0x590] sm:$0xff]
  %v191 = vld [vmem:[%s1 + $0x598] sm:$0xff]
  %v192 = vld [vmem:[%s1 + $0x5a0] sm:$0xff]
  %v193 = vld [vmem:[%s1 + $0x5a8] sm:$0xff]
  %v194 = vld [vmem:[%s1 + $0x5b0] sm:$0xff]
  %v195 = vld [vmem:[%s1 + $0x5b8] sm:$0xff]
  %v196 = vld [vmem:[%s1 + $0x5c0] sm:$0xff]
  %v197 = vld [vmem:[%s1 + $0x5c8] sm:$0xff]
  %v198 = vld [vmem:[%s1 + $0x5d0] sm:$0xff]
  %v199 = vld [vmem:[%s1 + $0x5d8] sm:$0xff]
  %v200 = vld [vmem:[%s1 + $0x5e0] sm:$0xff]
  %v201 = vld [vmem:[%s1 + $0x5e8] sm:$0xff]
  %v202 = vld [vmem:[%s1 + $0x5f0] sm:$0xff]
  %v203 = vld [vmem:[%s1 + $0x5f8] sm:$0xff]
  %v204 = vld [vmem:[%s1 + $0x600] sm:$0xff]
  %v205 = vld [vmem:[%s1 + $0x608] sm:$0xff]
  %v206 = vld [vmem:[%s1 + $0x610] sm:$0xff]
  %v207 = vld [vmem:[%s1 + $0x618] sm:$0xff]
  %v208 = vld [vmem:[%s1 + $0x620] sm:$0xff]
  %v209 = vld [vmem:[%s1 + $0x628] sm:$0xff]
  %v210 = vld [vmem:[%s1 + $0x630] sm:$0xff]
  %v211 = vld [vmem:[%s1 + $0x638] sm:$0xff]
  %v212 = vld [vmem:[%s1 + $0x640] sm:$0xff]
  %v213 = vld [vmem:[%s1 + $0x648] sm:$0xff]
  %v214 = vld [vmem:[%s1 + $0x650] sm:$0xff]
  %v215 = vld [vmem:[%s1 + $0x658] sm:$0xff]
  %v216 = vld [vmem:[%s1 + $0x660] sm:$0xff]
  %v217 = vld [vmem:[%s1 + $0x668] sm:$0xff]
  %v218 = vld [vmem:[%s1 + $0x670] sm:$0xff]
  %v219 = vld [vmem:[%s1 + $0x678] sm:$0xff]
  %v220 = vld [vmem:[%s1 + $0x680] sm:$0xff]
  %v221 = vld [vmem:[%s1 + $0x688] sm:$0xff]
  %v222 = vld [vmem:[%s1 + $0x690] sm:$0xff]
  %v223 = vld [vmem:[%s1 + $0x698] sm:$0xff]
  %v224 = vld [vmem:[%s1 + $0x6a0] sm:$0xff]
  %v225 = vld [vmem:[%s1 + $0x6a8] sm:$0xff]
  %v226 = vld [vmem:[%s1 + $0x6b0] sm:$0xff]
  %v227 = vld [vmem:[%s1 + $0x6b8] sm:$0xff]
  %v228 = vld [vmem:[%s1 + $0x6c0] sm:$0xff]
  %v229 = vld [vmem:[%s1 + $0x6c8] sm:$0xff]
  %v230 = vld [vmem:[%s1 + $0x6d0] sm:$0xff]
  %v231 = vld [vmem:[%s1 + $0x6d8] sm:$0xff]
  %v232 = vld [vmem:[%s1 + $0x6e0] sm:$0xff]
  %v233 = vld [vmem:[%s1 + $0x6e8] sm:$0xff]
  %v234 = vld [vmem:[%s1 + $0x6f0] sm:$0xff]
  %v235 = vld [vmem:[%s1 + $0x6f8] sm:$0xff]
  %v236 = vld [vmem:[%s1 + $0x700] sm:$0xff]
  %v237 = vld [vmem:[%s1 + $0x708] sm:$0xff]
  %v238 = vld [vmem:[%s1 + $0x710] sm:$0xff]
  %v239 = vld [vmem:[%s1 + $0x718] sm:$0xff]
  %v240 = vld [vmem:[%s1 + $0x720] sm:$0xff]
  %v241 = vld [vmem:[%s1 + $0x728] sm:$0xff]
  %v242 = vld [vmem:[%s1 + $0x730] sm:$0xff]
  %v243 = vld [vmem:[%s1 + $0x738] sm:$0xff]
  %v244 = vld [vmem:[%s1 + $0x740] sm:$0xff]
  %v245 = vld [vmem:[%s1 + $0x748] sm:$0xff]
  %v246 = vld [vmem:[%s1 + $0x750] sm:$0xff]
  %v247 = vld [vmem:[%s1 + $0x758] sm:$0xff]
  %v248 = vld [vmem:[%s1 + $0x760] sm:$0xff]
  %v249 = vld [vmem:[%s1 + $0x768] sm:$0xff]
  %v250 = vld [vmem:[%s1 + $0x770] sm:$0xff]
  %v251 = vld [vmem:[%s1 + $0x778] sm:$0xff]
  %v252 = vld [vmem:[%s1 + $0x780] sm:$0xff]
  %v253 = vld [vmem:[%s1 + $0x788] sm:$0xff]
  %v254 = vld [vmem:[%s1 + $0x790] sm:$0xff]
  %v255 = vld [vmem:[%s1 + $0x798] sm:$0xff]
  %v256 = vld [vmem:[%s1 + $0x7a0] sm:$0xff]
  %v257 = vld [vmem:[%s1 + $0x7a8] sm:$0xff]
  %v258 = vld [vmem:[%s1 + $0x7b0] sm:$0xff]
  %v259 = vld [vmem:[%s1 + $0x7b8] sm:$0xff]
  %v260 = vld [vmem:[%s1 + $0x7c0] sm:$0xff]
  %v261 = vld [vmem:[%s1 + $0x7c8] sm:$0xff]
  %v262 = vld [vmem:[%s1 + $0x7d0] sm:$0xff]
  %v263 = vld [vmem:[%s1 + $0x7d8] sm:$0xff]
  %v264 = vld [vmem:[%s1 + $0x7e0] sm:$0xff]
  %v265 = vld [vmem:[%s1 + $0x7e8] sm:$0xff]
  %v266 = vld [vmem:[%s1 + $0x7f0] sm:$0xff]
  %v267 = vld [vmem:[%s1 + $0x7f8] sm:$0xff]
  %v268 = vlaneseq
  %v269 = vshrl.u32 %v268, 7
  %v270 = vlaneseq
  %v271 = vand.u32 %v270, 127
  %v272 = vadd.s32 %v271, 128
  %v273 = vadd.s32 %v271, 256
  %v274 = vadd.s32 %v271, 384
  %vm275 = vcmp.lt.s32.totalorder %v269, 2
  %vm276 = vcmp.lt.s32.totalorder %v271, 256
  %vm277 = vcmp.lt.s32.totalorder %v272, 256
  %vm278 = vcmp.lt.s32.totalorder %v273, 256
  %vm279 = vcmp.lt.s32.totalorder %v274, 256
  %vm280 = vmxor %vm275, %vm276
  %vm281 = vmxor %vm275, %vm277
  %vm282 = vmxor %vm275, %vm278
  %vm283 = vmxor %vm275, %vm279
  %vm284 = vmxor %vm280, 1
  %vm285 = vmxor %vm281, 1
  %vm286 = vmxor %vm282, 1
  %vm287 = vmxor %vm283, 1
  %v288 = vsel %vm284, 1, 0
  %v289 = vsel %vm285, 1, 0
  %v290 = vsel %vm286, 1, 0
  %v291 = vsel %vm287, 1, 0
  %v292 = vcvt.s32.f32 %v288
  %v293 = vcvt.s32.f32 %v289
  %v294 = vcvt.s32.f32 %v290
  %v295 = vcvt.s32.f32 %v291
  %v552 = vunpack.c.l.b16 %v12
  %v553 = vunpack.c.h.b16 %v12
  %v554 = vunpack.c.l.b16 %v13
  %v555 = vunpack.c.h.b16 %v13
  %v556 = vunpack.c.l.b16 %v14
  %v557 = vunpack.c.h.b16 %v14
  %v558 = vunpack.c.l.b16 %v15
  %v559 = vunpack.c.h.b16 %v15
  %v560 = vunpack.c.l.b16 %v16
  %v561 = vunpack.c.h.b16 %v16
  %v562 = vunpack.c.l.b16 %v17
  %v563 = vunpack.c.h.b16 %v17
  %v564 = vunpack.c.l.b16 %v18
  %v565 = vunpack.c.h.b16 %v18
  %v566 = vunpack.c.l.b16 %v19
  %v567 = vunpack.c.h.b16 %v19
  %v568 = vunpack.c.l.b16 %v20
  %v569 = vunpack.c.h.b16 %v20
  %v570 = vunpack.c.l.b16 %v21
  %v571 = vunpack.c.h.b16 %v21
  %v572 = vunpack.c.l.b16 %v22
  %v573 = vunpack.c.h.b16 %v22
  %v574 = vunpack.c.l.b16 %v23
  %v575 = vunpack.c.h.b16 %v23
  %v576 = vunpack.c.l.b16 %v24
  %v577 = vunpack.c.h.b16 %v24
  %v578 = vunpack.c.l.b16 %v25
  %v579 = vunpack.c.h.b16 %v25
  %v580 = vunpack.c.l.b16 %v26
  %v581 = vunpack.c.h.b16 %v26
  %v582 = vunpack.c.l.b16 %v27
  %v583 = vunpack.c.h.b16 %v27
  %v584 = vunpack.c.l.b16 %v28
  %v585 = vunpack.c.h.b16 %v28
  %v586 = vunpack.c.l.b16 %v29
  %v587 = vunpack.c.h.b16 %v29
  %v588 = vunpack.c.l.b16 %v30
  %v589 = vunpack.c.h.b16 %v30
  %v590 = vunpack.c.l.b16 %v31
  %v591 = vunpack.c.h.b16 %v31
  %v592 = vunpack.c.l.b16 %v32
  %v593 = vunpack.c.h.b16 %v32
  %v594 = vunpack.c.l.b16 %v33
  %v595 = vunpack.c.h.b16 %v33
  %v596 = vunpack.c.l.b16 %v34
  %v597 = vunpack.c.h.b16 %v34
  %v598 = vunpack.c.l.b16 %v35
  %v599 = vunpack.c.h.b16 %v35
  %v600 = vunpack.c.l.b16 %v36
  %v601 = vunpack.c.h.b16 %v36
  %v602 = vunpack.c.l.b16 %v37
  %v603 = vunpack.c.h.b16 %v37
  %v604 = vunpack.c.l.b16 %v38
  %v605 = vunpack.c.h.b16 %v38
  %v606 = vunpack.c.l.b16 %v39
  %v607 = vunpack.c.h.b16 %v39
  %v608 = vunpack.c.l.b16 %v40
  %v609 = vunpack.c.h.b16 %v40
  %v610 = vunpack.c.l.b16 %v41
  %v611 = vunpack.c.h.b16 %v41
  %v612 = vunpack.c.l.b16 %v42
  %v613 = vunpack.c.h.b16 %v42
  %v614 = vunpack.c.l.b16 %v43
  %v615 = vunpack.c.h.b16 %v43
  %v616 = vunpack.c.l.b16 %v44
  %v617 = vunpack.c.h.b16 %v44
  %v618 = vunpack.c.l.b16 %v45
  %v619 = vunpack.c.h.b16 %v45
  %v620 = vunpack.c.l.b16 %v46
  %v621 = vunpack.c.h.b16 %v46
  %v622 = vunpack.c.l.b16 %v47
  %v623 = vunpack.c.h.b16 %v47
  %v624 = vunpack.c.l.b16 %v48
  %v625 = vunpack.c.h.b16 %v48
  %v626 = vunpack.c.l.b16 %v49
  %v627 = vunpack.c.h.b16 %v49
  %v628 = vunpack.c.l.b16 %v50
  %v629 = vunpack.c.h.b16 %v50
  %v630 = vunpack.c.l.b16 %v51
  %v631 = vunpack.c.h.b16 %v51
  %v632 = vunpack.c.l.b16 %v52
  %v633 = vunpack.c.h.b16 %v52
  %v634 = vunpack.c.l.b16 %v53
  %v635 = vunpack.c.h.b16 %v53
  %v636 = vunpack.c.l.b16 %v54
  %v637 = vunpack.c.h.b16 %v54
  %v638 = vunpack.c.l.b16 %v55
  %v639 = vunpack.c.h.b16 %v55
  %v640 = vunpack.c.l.b16 %v56
  %v641 = vunpack.c.h.b16 %v56
  %v642 = vunpack.c.l.b16 %v57
  %v643 = vunpack.c.h.b16 %v57
  %v644 = vunpack.c.l.b16 %v58
  %v645 = vunpack.c.h.b16 %v58
  %v646 = vunpack.c.l.b16 %v59
  %v647 = vunpack.c.h.b16 %v59
  %v648 = vunpack.c.l.b16 %v60
  %v649 = vunpack.c.h.b16 %v60
  %v650 = vunpack.c.l.b16 %v61
  %v651 = vunpack.c.h.b16 %v61
  %v652 = vunpack.c.l.b16 %v62
  %v653 = vunpack.c.h.b16 %v62
  %v654 = vunpack.c.l.b16 %v63
  %v655 = vunpack.c.h.b16 %v63
  %v656 = vunpack.c.l.b16 %v64
  %v657 = vunpack.c.h.b16 %v64
  %v658 = vunpack.c.l.b16 %v65
  %v659 = vunpack.c.h.b16 %v65
  %v660 = vunpack.c.l.b16 %v66
  %v661 = vunpack.c.h.b16 %v66
  %v662 = vunpack.c.l.b16 %v67
  %v663 = vunpack.c.h.b16 %v67
  %v664 = vunpack.c.l.b16 %v68
  %v665 = vunpack.c.h.b16 %v68
  %v666 = vunpack.c.l.b16 %v69
  %v667 = vunpack.c.h.b16 %v69
  %v668 = vunpack.c.l.b16 %v70
  %v669 = vunpack.c.h.b16 %v70
  %v670 = vunpack.c.l.b16 %v71
  %v671 = vunpack.c.h.b16 %v71
  %v672 = vunpack.c.l.b16 %v72
  %v673 = vunpack.c.h.b16 %v72
  %v674 = vunpack.c.l.b16 %v73
  %v675 = vunpack.c.h.b16 %v73
  %v676 = vunpack.c.l.b16 %v74
  %v677 = vunpack.c.h.b16 %v74
  %v678 = vunpack.c.l.b16 %v75
  %v679 = vunpack.c.h.b16 %v75
  %v680 = vunpack.c.l.b16 %v76
  %v681 = vunpack.c.h.b16 %v76
  %v682 = vunpack.c.l.b16 %v77
  %v683 = vunpack.c.h.b16 %v77
  %v684 = vunpack.c.l.b16 %v78
  %v685 = vunpack.c.h.b16 %v78
  %v686 = vunpack.c.l.b16 %v79
  %v687 = vunpack.c.h.b16 %v79
  %v688 = vunpack.c.l.b16 %v80
  %v689 = vunpack.c.h.b16 %v80
  %v690 = vunpack.c.l.b16 %v81
  %v691 = vunpack.c.h.b16 %v81
  %v692 = vunpack.c.l.b16 %v82
  %v693 = vunpack.c.h.b16 %v82
  %v694 = vunpack.c.l.b16 %v83
  %v695 = vunpack.c.h.b16 %v83
  %v696 = vunpack.c.l.b16 %v84
  %v697 = vunpack.c.h.b16 %v84
  %v698 = vunpack.c.l.b16 %v85
  %v699 = vunpack.c.h.b16 %v85
  %v700 = vunpack.c.l.b16 %v86
  %v701 = vunpack.c.h.b16 %v86
  %v702 = vunpack.c.l.b16 %v87
  %v703 = vunpack.c.h.b16 %v87
  %v704 = vunpack.c.l.b16 %v88
  %v705 = vunpack.c.h.b16 %v88
  %v706 = vunpack.c.l.b16 %v89
  %v707 = vunpack.c.h.b16 %v89
  %v708 = vunpack.c.l.b16 %v90
  %v709 = vunpack.c.h.b16 %v90
  %v710 = vunpack.c.l.b16 %v91
  %v711 = vunpack.c.h.b16 %v91
  %v712 = vunpack.c.l.b16 %v92
  %v713 = vunpack.c.h.b16 %v92
  %v714 = vunpack.c.l.b16 %v93
  %v715 = vunpack.c.h.b16 %v93
  %v716 = vunpack.c.l.b16 %v94
  %v717 = vunpack.c.h.b16 %v94
  %v718 = vunpack.c.l.b16 %v95
  %v719 = vunpack.c.h.b16 %v95
  %v720 = vunpack.c.l.b16 %v96
  %v721 = vunpack.c.h.b16 %v96
  %v722 = vunpack.c.l.b16 %v97
  %v723 = vunpack.c.h.b16 %v97
  %v724 = vunpack.c.l.b16 %v98
  %v725 = vunpack.c.h.b16 %v98
  %v726 = vunpack.c.l.b16 %v99
  %v727 = vunpack.c.h.b16 %v99
  %v728 = vunpack.c.l.b16 %v100
  %v729 = vunpack.c.h.b16 %v100
  %v730 = vunpack.c.l.b16 %v101
  %v731 = vunpack.c.h.b16 %v101
  %v732 = vunpack.c.l.b16 %v102
  %v733 = vunpack.c.h.b16 %v102
  %v734 = vunpack.c.l.b16 %v103
  %v735 = vunpack.c.h.b16 %v103
  %v736 = vunpack.c.l.b16 %v104
  %v737 = vunpack.c.h.b16 %v104
  %v738 = vunpack.c.l.b16 %v105
  %v739 = vunpack.c.h.b16 %v105
  %v740 = vunpack.c.l.b16 %v106
  %v741 = vunpack.c.h.b16 %v106
  %v742 = vunpack.c.l.b16 %v107
  %v743 = vunpack.c.h.b16 %v107
  %v744 = vunpack.c.l.b16 %v108
  %v745 = vunpack.c.h.b16 %v108
  %v746 = vunpack.c.l.b16 %v109
  %v747 = vunpack.c.h.b16 %v109
  %v748 = vunpack.c.l.b16 %v110
  %v749 = vunpack.c.h.b16 %v110
  %v750 = vunpack.c.l.b16 %v111
  %v751 = vunpack.c.h.b16 %v111
  %v752 = vunpack.c.l.b16 %v112
  %v753 = vunpack.c.h.b16 %v112
  %v754 = vunpack.c.l.b16 %v113
  %v755 = vunpack.c.h.b16 %v113
  %v756 = vunpack.c.l.b16 %v114
  %v757 = vunpack.c.h.b16 %v114
  %v758 = vunpack.c.l.b16 %v115
  %v759 = vunpack.c.h.b16 %v115
  %v760 = vunpack.c.l.b16 %v116
  %v761 = vunpack.c.h.b16 %v116
  %v762 = vunpack.c.l.b16 %v117
  %v763 = vunpack.c.h.b16 %v117
  %v764 = vunpack.c.l.b16 %v118
  %v765 = vunpack.c.h.b16 %v118
  %v766 = vunpack.c.l.b16 %v119
  %v767 = vunpack.c.h.b16 %v119
  %v768 = vunpack.c.l.b16 %v120
  %v769 = vunpack.c.h.b16 %v120
  %v770 = vunpack.c.l.b16 %v121
  %v771 = vunpack.c.h.b16 %v121
  %v772 = vunpack.c.l.b16 %v122
  %v773 = vunpack.c.h.b16 %v122
  %v774 = vunpack.c.l.b16 %v123
  %v775 = vunpack.c.h.b16 %v123
  %v776 = vunpack.c.l.b16 %v124
  %v777 = vunpack.c.h.b16 %v124
  %v778 = vunpack.c.l.b16 %v125
  %v779 = vunpack.c.h.b16 %v125
  %v780 = vunpack.c.l.b16 %v126
  %v781 = vunpack.c.h.b16 %v126
  %v782 = vunpack.c.l.b16 %v127
  %v783 = vunpack.c.h.b16 %v127
  %v784 = vunpack.c.l.b16 %v128
  %v785 = vunpack.c.h.b16 %v128
  %v786 = vunpack.c.l.b16 %v129
  %v787 = vunpack.c.h.b16 %v129
  %v788 = vunpack.c.l.b16 %v130
  %v789 = vunpack.c.h.b16 %v130
  %v790 = vunpack.c.l.b16 %v131
  %v791 = vunpack.c.h.b16 %v131
  %v792 = vunpack.c.l.b16 %v132
  %v793 = vunpack.c.h.b16 %v132
  %v794 = vunpack.c.l.b16 %v133
  %v795 = vunpack.c.h.b16 %v133
  %v796 = vunpack.c.l.b16 %v134
  %v797 = vunpack.c.h.b16 %v134
  %v798 = vunpack.c.l.b16 %v135
  %v799 = vunpack.c.h.b16 %v135
  %v800 = vunpack.c.l.b16 %v136
  %v801 = vunpack.c.h.b16 %v136
  %v802 = vunpack.c.l.b16 %v137
  %v803 = vunpack.c.h.b16 %v137
  %v804 = vunpack.c.l.b16 %v138
  %v805 = vunpack.c.h.b16 %v138
  %v806 = vunpack.c.l.b16 %v139
  %v807 = vunpack.c.h.b16 %v139
  %v808 = vunpack.c.l.b16 %v140
  %v809 = vunpack.c.h.b16 %v140
  %v810 = vunpack.c.l.b16 %v141
  %v811 = vunpack.c.h.b16 %v141
  %v812 = vunpack.c.l.b16 %v142
  %v813 = vunpack.c.h.b16 %v142
  %v814 = vunpack.c.l.b16 %v143
  %v815 = vunpack.c.h.b16 %v143
  %v816 = vunpack.c.l.b16 %v144
  %v817 = vunpack.c.h.b16 %v144
  %v818 = vunpack.c.l.b16 %v145
  %v819 = vunpack.c.h.b16 %v145
  %v820 = vunpack.c.l.b16 %v146
  %v821 = vunpack.c.h.b16 %v146
  %v822 = vunpack.c.l.b16 %v147
  %v823 = vunpack.c.h.b16 %v147
  %v824 = vunpack.c.l.b16 %v148
  %v825 = vunpack.c.h.b16 %v148
  %v826 = vunpack.c.l.b16 %v149
  %v827 = vunpack.c.h.b16 %v149
  %v828 = vunpack.c.l.b16 %v150
  %v829 = vunpack.c.h.b16 %v150
  %v830 = vunpack.c.l.b16 %v151
  %v831 = vunpack.c.h.b16 %v151
  %v832 = vunpack.c.l.b16 %v152
  %v833 = vunpack.c.h.b16 %v152
  %v834 = vunpack.c.l.b16 %v153
  %v835 = vunpack.c.h.b16 %v153
  %v836 = vunpack.c.l.b16 %v154
  %v837 = vunpack.c.h.b16 %v154
  %v838 = vunpack.c.l.b16 %v155
  %v839 = vunpack.c.h.b16 %v155
  %v840 = vunpack.c.l.b16 %v156
  %v841 = vunpack.c.h.b16 %v156
  %v842 = vunpack.c.l.b16 %v157
  %v843 = vunpack.c.h.b16 %v157
  %v844 = vunpack.c.l.b16 %v158
  %v845 = vunpack.c.h.b16 %v158
  %v846 = vunpack.c.l.b16 %v159
  %v847 = vunpack.c.h.b16 %v159
  %v848 = vunpack.c.l.b16 %v160
  %v849 = vunpack.c.h.b16 %v160
  %v850 = vunpack.c.l.b16 %v161
  %v851 = vunpack.c.h.b16 %v161
  %v852 = vunpack.c.l.b16 %v162
  %v853 = vunpack.c.h.b16 %v162
  %v854 = vunpack.c.l.b16 %v163
  %v855 = vunpack.c.h.b16 %v163
  %v856 = vunpack.c.l.b16 %v164
  %v857 = vunpack.c.h.b16 %v164
  %v858 = vunpack.c.l.b16 %v165
  %v859 = vunpack.c.h.b16 %v165
  %v860 = vunpack.c.l.b16 %v166
  %v861 = vunpack.c.h.b16 %v166
  %v862 = vunpack.c.l.b16 %v167
  %v863 = vunpack.c.h.b16 %v167
  %v864 = vunpack.c.l.b16 %v168
  %v865 = vunpack.c.h.b16 %v168
  %v866 = vunpack.c.l.b16 %v169
  %v867 = vunpack.c.h.b16 %v169
  %v868 = vunpack.c.l.b16 %v170
  %v869 = vunpack.c.h.b16 %v170
  %v870 = vunpack.c.l.b16 %v171
  %v871 = vunpack.c.h.b16 %v171
  %v872 = vunpack.c.l.b16 %v172
  %v873 = vunpack.c.h.b16 %v172
  %v874 = vunpack.c.l.b16 %v173
  %v875 = vunpack.c.h.b16 %v173
  %v876 = vunpack.c.l.b16 %v174
  %v877 = vunpack.c.h.b16 %v174
  %v878 = vunpack.c.l.b16 %v175
  %v879 = vunpack.c.h.b16 %v175
  %v880 = vunpack.c.l.b16 %v176
  %v881 = vunpack.c.h.b16 %v176
  %v882 = vunpack.c.l.b16 %v177
  %v883 = vunpack.c.h.b16 %v177
  %v884 = vunpack.c.l.b16 %v178
  %v885 = vunpack.c.h.b16 %v178
  %v886 = vunpack.c.l.b16 %v179
  %v887 = vunpack.c.h.b16 %v179
  %v888 = vunpack.c.l.b16 %v180
  %v889 = vunpack.c.h.b16 %v180
  %v890 = vunpack.c.l.b16 %v181
  %v891 = vunpack.c.h.b16 %v181
  %v892 = vunpack.c.l.b16 %v182
  %v893 = vunpack.c.h.b16 %v182
  %v894 = vunpack.c.l.b16 %v183
  %v895 = vunpack.c.h.b16 %v183
  %v896 = vunpack.c.l.b16 %v184
  %v897 = vunpack.c.h.b16 %v184
  %v898 = vunpack.c.l.b16 %v185
  %v899 = vunpack.c.h.b16 %v185
  %v900 = vunpack.c.l.b16 %v186
  %v901 = vunpack.c.h.b16 %v186
  %v902 = vunpack.c.l.b16 %v187
  %v903 = vunpack.c.h.b16 %v187
  %v904 = vunpack.c.l.b16 %v188
  %v905 = vunpack.c.h.b16 %v188
  %v906 = vunpack.c.l.b16 %v189
  %v907 = vunpack.c.h.b16 %v189
  %v908 = vunpack.c.l.b16 %v190
  %v909 = vunpack.c.h.b16 %v190
  %v910 = vunpack.c.l.b16 %v191
  %v911 = vunpack.c.h.b16 %v191
  %v912 = vunpack.c.l.b16 %v192
  %v913 = vunpack.c.h.b16 %v192
  %v914 = vunpack.c.l.b16 %v193
  %v915 = vunpack.c.h.b16 %v193
  %v916 = vunpack.c.l.b16 %v194
  %v917 = vunpack.c.h.b16 %v194
  %v918 = vunpack.c.l.b16 %v195
  %v919 = vunpack.c.h.b16 %v195
  %v920 = vunpack.c.l.b16 %v196
  %v921 = vunpack.c.h.b16 %v196
  %v922 = vunpack.c.l.b16 %v197
  %v923 = vunpack.c.h.b16 %v197
  %v924 = vunpack.c.l.b16 %v198
  %v925 = vunpack.c.h.b16 %v198
  %v926 = vunpack.c.l.b16 %v199
  %v927 = vunpack.c.h.b16 %v199
  %v928 = vunpack.c.l.b16 %v200
  %v929 = vunpack.c.h.b16 %v200
  %v930 = vunpack.c.l.b16 %v201
  %v931 = vunpack.c.h.b16 %v201
  %v932 = vunpack.c.l.b16 %v202
  %v933 = vunpack.c.h.b16 %v202
  %v934 = vunpack.c.l.b16 %v203
  %v935 = vunpack.c.h.b16 %v203
  %v936 = vunpack.c.l.b16 %v204
  %v937 = vunpack.c.h.b16 %v204
  %v938 = vunpack.c.l.b16 %v205
  %v939 = vunpack.c.h.b16 %v205
  %v940 = vunpack.c.l.b16 %v206
  %v941 = vunpack.c.h.b16 %v206
  %v942 = vunpack.c.l.b16 %v207
  %v943 = vunpack.c.h.b16 %v207
  %v944 = vunpack.c.l.b16 %v208
  %v945 = vunpack.c.h.b16 %v208
  %v946 = vunpack.c.l.b16 %v209
  %v947 = vunpack.c.h.b16 %v209
  %v948 = vunpack.c.l.b16 %v210
  %v949 = vunpack.c.h.b16 %v210
  %v950 = vunpack.c.l.b16 %v211
  %v951 = vunpack.c.h.b16 %v211
  %v952 = vunpack.c.l.b16 %v212
  %v953 = vunpack.c.h.b16 %v212
  %v954 = vunpack.c.l.b16 %v213
  %v955 = vunpack.c.h.b16 %v213
  %v956 = vunpack.c.l.b16 %v214
  %v957 = vunpack.c.h.b16 %v214
  %v958 = vunpack.c.l.b16 %v215
  %v959 = vunpack.c.h.b16 %v215
  %v960 = vunpack.c.l.b16 %v216
  %v961 = vunpack.c.h.b16 %v216
  %v962 = vunpack.c.l.b16 %v217
  %v963 = vunpack.c.h.b16 %v217
  %v964 = vunpack.c.l.b16 %v218
  %v965 = vunpack.c.h.b16 %v218
  %v966 = vunpack.c.l.b16 %v219
  %v967 = vunpack.c.h.b16 %v219
  %v968 = vunpack.c.l.b16 %v220
  %v969 = vunpack.c.h.b16 %v220
  %v970 = vunpack.c.l.b16 %v221
  %v971 = vunpack.c.h.b16 %v221
  %v972 = vunpack.c.l.b16 %v222
  %v973 = vunpack.c.h.b16 %v222
  %v974 = vunpack.c.l.b16 %v223
  %v975 = vunpack.c.h.b16 %v223
  %v976 = vunpack.c.l.b16 %v224
  %v977 = vunpack.c.h.b16 %v224
  %v978 = vunpack.c.l.b16 %v225
  %v979 = vunpack.c.h.b16 %v225
  %v980 = vunpack.c.l.b16 %v226
  %v981 = vunpack.c.h.b16 %v226
  %v982 = vunpack.c.l.b16 %v227
  %v983 = vunpack.c.h.b16 %v227
  %v984 = vunpack.c.l.b16 %v228
  %v985 = vunpack.c.h.b16 %v228
  %v986 = vunpack.c.l.b16 %v229
  %v987 = vunpack.c.h.b16 %v229
  %v988 = vunpack.c.l.b16 %v230
  %v989 = vunpack.c.h.b16 %v230
  %v990 = vunpack.c.l.b16 %v231
  %v991 = vunpack.c.h.b16 %v231
  %v992 = vunpack.c.l.b16 %v232
  %v993 = vunpack.c.h.b16 %v232
  %v994 = vunpack.c.l.b16 %v233
  %v995 = vunpack.c.h.b16 %v233
  %v996 = vunpack.c.l.b16 %v234
  %v997 = vunpack.c.h.b16 %v234
  %v998 = vunpack.c.l.b16 %v235
  %v999 = vunpack.c.h.b16 %v235
  %v1000 = vunpack.c.l.b16 %v236
  %v1001 = vunpack.c.h.b16 %v236
  %v1002 = vunpack.c.l.b16 %v237
  %v1003 = vunpack.c.h.b16 %v237
  %v1004 = vunpack.c.l.b16 %v238
  %v1005 = vunpack.c.h.b16 %v238
  %v1006 = vunpack.c.l.b16 %v239
  %v1007 = vunpack.c.h.b16 %v239
  %v1008 = vunpack.c.l.b16 %v240
  %v1009 = vunpack.c.h.b16 %v240
  %v1010 = vunpack.c.l.b16 %v241
  %v1011 = vunpack.c.h.b16 %v241
  %v1012 = vunpack.c.l.b16 %v242
  %v1013 = vunpack.c.h.b16 %v242
  %v1014 = vunpack.c.l.b16 %v243
  %v1015 = vunpack.c.h.b16 %v243
  %v1016 = vunpack.c.l.b16 %v244
  %v1017 = vunpack.c.h.b16 %v244
  %v1018 = vunpack.c.l.b16 %v245
  %v1019 = vunpack.c.h.b16 %v245
  %v1020 = vunpack.c.l.b16 %v246
  %v1021 = vunpack.c.h.b16 %v246
  %v1022 = vunpack.c.l.b16 %v247
  %v1023 = vunpack.c.h.b16 %v247
  %v1024 = vunpack.c.l.b16 %v248
  %v1025 = vunpack.c.h.b16 %v248
  %v1026 = vunpack.c.l.b16 %v249
  %v1027 = vunpack.c.h.b16 %v249
  %v1028 = vunpack.c.l.b16 %v250
  %v1029 = vunpack.c.h.b16 %v250
  %v1030 = vunpack.c.l.b16 %v251
  %v1031 = vunpack.c.h.b16 %v251
  %v1032 = vunpack.c.l.b16 %v252
  %v1033 = vunpack.c.h.b16 %v252
  %v1034 = vunpack.c.l.b16 %v253
  %v1035 = vunpack.c.h.b16 %v253
  %v1036 = vunpack.c.l.b16 %v254
  %v1037 = vunpack.c.h.b16 %v254
  %v1038 = vunpack.c.l.b16 %v255
  %v1039 = vunpack.c.h.b16 %v255
  %v1040 = vunpack.c.l.b16 %v256
  %v1041 = vunpack.c.h.b16 %v256
  %v1042 = vunpack.c.l.b16 %v257
  %v1043 = vunpack.c.h.b16 %v257
  %v1044 = vunpack.c.l.b16 %v258
  %v1045 = vunpack.c.h.b16 %v258
  %v1046 = vunpack.c.l.b16 %v259
  %v1047 = vunpack.c.h.b16 %v259
  %v1048 = vunpack.c.l.b16 %v260
  %v1049 = vunpack.c.h.b16 %v260
  %v1050 = vunpack.c.l.b16 %v261
  %v1051 = vunpack.c.h.b16 %v261
  %v1052 = vunpack.c.l.b16 %v262
  %v1053 = vunpack.c.h.b16 %v262
  %v1054 = vunpack.c.l.b16 %v263
  %v1055 = vunpack.c.h.b16 %v263
  %v1056 = vunpack.c.l.b16 %v264
  %v1057 = vunpack.c.h.b16 %v264
  %v1058 = vunpack.c.l.b16 %v265
  %v1059 = vunpack.c.h.b16 %v265
  %v1060 = vunpack.c.l.b16 %v266
  %v1061 = vunpack.c.h.b16 %v266
  %v1062 = vunpack.c.l.b16 %v267
  %v1063 = vunpack.c.h.b16 %v267
  %v1064 = vpack.c.b16 %v560, %v552
  %v1065 = vpack.c.b16 %v561, %v553
  %v1066 = vpack.c.b16 %v562, %v554
  %v1067 = vpack.c.b16 %v563, %v555
  %v1068 = vpack.c.b16 %v564, %v556
  %v1069 = vpack.c.b16 %v565, %v557
  %v1070 = vpack.c.b16 %v566, %v558
  %v1071 = vpack.c.b16 %v567, %v559
  %v1072 = vpack.c.b16 %v576, %v568
  %v1073 = vpack.c.b16 %v577, %v569
  %v1074 = vpack.c.b16 %v578, %v570
  %v1075 = vpack.c.b16 %v579, %v571
  %v1076 = vpack.c.b16 %v580, %v572
  %v1077 = vpack.c.b16 %v581, %v573
  %v1078 = vpack.c.b16 %v582, %v574
  %v1079 = vpack.c.b16 %v583, %v575
  %v1080 = vpack.c.b16 %v592, %v584
  %v1081 = vpack.c.b16 %v593, %v585
  %v1082 = vpack.c.b16 %v594, %v586
  %v1083 = vpack.c.b16 %v595, %v587
  %v1084 = vpack.c.b16 %v596, %v588
  %v1085 = vpack.c.b16 %v597, %v589
  %v1086 = vpack.c.b16 %v598, %v590
  %v1087 = vpack.c.b16 %v599, %v591
  %v1088 = vpack.c.b16 %v608, %v600
  %v1089 = vpack.c.b16 %v609, %v601
  %v1090 = vpack.c.b16 %v610, %v602
  %v1091 = vpack.c.b16 %v611, %v603
  %v1092 = vpack.c.b16 %v612, %v604
  %v1093 = vpack.c.b16 %v613, %v605
  %v1094 = vpack.c.b16 %v614, %v606
  %v1095 = vpack.c.b16 %v615, %v607
  %v1096 = vpack.c.b16 %v624, %v616
  %v1097 = vpack.c.b16 %v625, %v617
  %v1098 = vpack.c.b16 %v626, %v618
  %v1099 = vpack.c.b16 %v627, %v619
  %v1100 = vpack.c.b16 %v628, %v620
  %v1101 = vpack.c.b16 %v629, %v621
  %v1102 = vpack.c.b16 %v630, %v622
  %v1103 = vpack.c.b16 %v631, %v623
  %v1104 = vpack.c.b16 %v640, %v632
  %v1105 = vpack.c.b16 %v641, %v633
  %v1106 = vpack.c.b16 %v642, %v634
  %v1107 = vpack.c.b16 %v643, %v635
  %v1108 = vpack.c.b16 %v644, %v636
  %v1109 = vpack.c.b16 %v645, %v637
  %v1110 = vpack.c.b16 %v646, %v638
  %v1111 = vpack.c.b16 %v647, %v639
  %v1112 = vpack.c.b16 %v656, %v648
  %v1113 = vpack.c.b16 %v657, %v649
  %v1114 = vpack.c.b16 %v658, %v650
  %v1115 = vpack.c.b16 %v659, %v651
  %v1116 = vpack.c.b16 %v660, %v652
  %v1117 = vpack.c.b16 %v661, %v653
  %v1118 = vpack.c.b16 %v662, %v654
  %v1119 = vpack.c.b16 %v663, %v655
  %v1120 = vpack.c.b16 %v672, %v664
  %v1121 = vpack.c.b16 %v673, %v665
  %v1122 = vpack.c.b16 %v674, %v666
  %v1123 = vpack.c.b16 %v675, %v667
  %v1124 = vpack.c.b16 %v676, %v668
  %v1125 = vpack.c.b16 %v677, %v669
  %v1126 = vpack.c.b16 %v678, %v670
  %v1127 = vpack.c.b16 %v679, %v671
  %v1128 = vpack.c.b16 %v688, %v680
  %v1129 = vpack.c.b16 %v689, %v681
  %v1130 = vpack.c.b16 %v690, %v682
  %v1131 = vpack.c.b16 %v691, %v683
  %v1132 = vpack.c.b16 %v692, %v684
  %v1133 = vpack.c.b16 %v693, %v685
  %v1134 = vpack.c.b16 %v694, %v686
  %v1135 = vpack.c.b16 %v695, %v687
  %v1136 = vpack.c.b16 %v704, %v696
  %v1137 = vpack.c.b16 %v705, %v697
  %v1138 = vpack.c.b16 %v706, %v698
  %v1139 = vpack.c.b16 %v707, %v699
  %v1140 = vpack.c.b16 %v708, %v700
  %v1141 = vpack.c.b16 %v709, %v701
  %v1142 = vpack.c.b16 %v710, %v702
  %v1143 = vpack.c.b16 %v711, %v703
  %v1144 = vpack.c.b16 %v720, %v712
  %v1145 = vpack.c.b16 %v721, %v713
  %v1146 = vpack.c.b16 %v722, %v714
  %v1147 = vpack.c.b16 %v723, %v715
  %v1148 = vpack.c.b16 %v724, %v716
  %v1149 = vpack.c.b16 %v725, %v717
  %v1150 = vpack.c.b16 %v726, %v718
  %v1151 = vpack.c.b16 %v727, %v719
  %v1152 = vpack.c.b16 %v736, %v728
  %v1153 = vpack.c.b16 %v737, %v729
  %v1154 = vpack.c.b16 %v738, %v730
  %v1155 = vpack.c.b16 %v739, %v731
  %v1156 = vpack.c.b16 %v740, %v732
  %v1157 = vpack.c.b16 %v741, %v733
  %v1158 = vpack.c.b16 %v742, %v734
  %v1159 = vpack.c.b16 %v743, %v735
  %v1160 = vpack.c.b16 %v752, %v744
  %v1161 = vpack.c.b16 %v753, %v745
  %v1162 = vpack.c.b16 %v754, %v746
  %v1163 = vpack.c.b16 %v755, %v747
  %v1164 = vpack.c.b16 %v756, %v748
  %v1165 = vpack.c.b16 %v757, %v749
  %v1166 = vpack.c.b16 %v758, %v750
  %v1167 = vpack.c.b16 %v759, %v751
  %v1168 = vpack.c.b16 %v768, %v760
  %v1169 = vpack.c.b16 %v769, %v761
  %v1170 = vpack.c.b16 %v770, %v762
  %v1171 = vpack.c.b16 %v771, %v763
  %v1172 = vpack.c.b16 %v772, %v764
  %v1173 = vpack.c.b16 %v773, %v765
  %v1174 = vpack.c.b16 %v774, %v766
  %v1175 = vpack.c.b16 %v775, %v767
  %v1176 = vpack.c.b16 %v784, %v776
  %v1177 = vpack.c.b16 %v785, %v777
  %v1178 = vpack.c.b16 %v786, %v778
  %v1179 = vpack.c.b16 %v787, %v779
  %v1180 = vpack.c.b16 %v788, %v780
  %v1181 = vpack.c.b16 %v789, %v781
  %v1182 = vpack.c.b16 %v790, %v782
  %v1183 = vpack.c.b16 %v791, %v783
  %v1184 = vpack.c.b16 %v800, %v792
  %v1185 = vpack.c.b16 %v801, %v793
  %v1186 = vpack.c.b16 %v802, %v794
  %v1187 = vpack.c.b16 %v803, %v795
  %v1188 = vpack.c.b16 %v804, %v796
  %v1189 = vpack.c.b16 %v805, %v797
  %v1190 = vpack.c.b16 %v806, %v798
  %v1191 = vpack.c.b16 %v807, %v799
  %v1192 = vpack.c.b16 %v816, %v808
  %v1193 = vpack.c.b16 %v817, %v809
  %v1194 = vpack.c.b16 %v818, %v810
  %v1195 = vpack.c.b16 %v819, %v811
  %v1196 = vpack.c.b16 %v820, %v812
  %v1197 = vpack.c.b16 %v821, %v813
  %v1198 = vpack.c.b16 %v822, %v814
  %v1199 = vpack.c.b16 %v823, %v815
  %v1200 = vpack.c.b16 %v832, %v824
  %v1201 = vpack.c.b16 %v833, %v825
  %v1202 = vpack.c.b16 %v834, %v826
  %v1203 = vpack.c.b16 %v835, %v827
  %v1204 = vpack.c.b16 %v836, %v828
  %v1205 = vpack.c.b16 %v837, %v829
  %v1206 = vpack.c.b16 %v838, %v830
  %v1207 = vpack.c.b16 %v839, %v831
  %v1208 = vpack.c.b16 %v848, %v840
  %v1209 = vpack.c.b16 %v849, %v841
  %v1210 = vpack.c.b16 %v850, %v842
  %v1211 = vpack.c.b16 %v851, %v843
  %v1212 = vpack.c.b16 %v852, %v844
  %v1213 = vpack.c.b16 %v853, %v845
  %v1214 = vpack.c.b16 %v854, %v846
  %v1215 = vpack.c.b16 %v855, %v847
  %v1216 = vpack.c.b16 %v864, %v856
  %v1217 = vpack.c.b16 %v865, %v857
  %v1218 = vpack.c.b16 %v866, %v858
  %v1219 = vpack.c.b16 %v867, %v859
  %v1220 = vpack.c.b16 %v868, %v860
  %v1221 = vpack.c.b16 %v869, %v861
  %v1222 = vpack.c.b16 %v870, %v862
  %v1223 = vpack.c.b16 %v871, %v863
  %v1224 = vpack.c.b16 %v880, %v872
  %v1225 = vpack.c.b16 %v881, %v873
  %v1226 = vpack.c.b16 %v882, %v874
  %v1227 = vpack.c.b16 %v883, %v875
  %v1228 = vpack.c.b16 %v884, %v876
  %v1229 = vpack.c.b16 %v885, %v877
  %v1230 = vpack.c.b16 %v886, %v878
  %v1231 = vpack.c.b16 %v887, %v879
  %v1232 = vpack.c.b16 %v896, %v888
  %v1233 = vpack.c.b16 %v897, %v889
  %v1234 = vpack.c.b16 %v898, %v890
  %v1235 = vpack.c.b16 %v899, %v891
  %v1236 = vpack.c.b16 %v900, %v892
  %v1237 = vpack.c.b16 %v901, %v893
  %v1238 = vpack.c.b16 %v902, %v894
  %v1239 = vpack.c.b16 %v903, %v895
  %v1240 = vpack.c.b16 %v912, %v904
  %v1241 = vpack.c.b16 %v913, %v905
  %v1242 = vpack.c.b16 %v914, %v906
  %v1243 = vpack.c.b16 %v915, %v907
  %v1244 = vpack.c.b16 %v916, %v908
  %v1245 = vpack.c.b16 %v917, %v909
  %v1246 = vpack.c.b16 %v918, %v910
  %v1247 = vpack.c.b16 %v919, %v911
  %v1248 = vpack.c.b16 %v928, %v920
  %v1249 = vpack.c.b16 %v929, %v921
  %v1250 = vpack.c.b16 %v930, %v922
  %v1251 = vpack.c.b16 %v931, %v923
  %v1252 = vpack.c.b16 %v932, %v924
  %v1253 = vpack.c.b16 %v933, %v925
  %v1254 = vpack.c.b16 %v934, %v926
  %v1255 = vpack.c.b16 %v935, %v927
  %v1256 = vpack.c.b16 %v944, %v936
  %v1257 = vpack.c.b16 %v945, %v937
  %v1258 = vpack.c.b16 %v946, %v938
  %v1259 = vpack.c.b16 %v947, %v939
  %v1260 = vpack.c.b16 %v948, %v940
  %v1261 = vpack.c.b16 %v949, %v941
  %v1262 = vpack.c.b16 %v950, %v942
  %v1263 = vpack.c.b16 %v951, %v943
  %v1264 = vpack.c.b16 %v960, %v952
  %v1265 = vpack.c.b16 %v961, %v953
  %v1266 = vpack.c.b16 %v962, %v954
  %v1267 = vpack.c.b16 %v963, %v955
  %v1268 = vpack.c.b16 %v964, %v956
  %v1269 = vpack.c.b16 %v965, %v957
  %v1270 = vpack.c.b16 %v966, %v958
  %v1271 = vpack.c.b16 %v967, %v959
  %v1272 = vpack.c.b16 %v976, %v968
  %v1273 = vpack.c.b16 %v977, %v969
  %v1274 = vpack.c.b16 %v978, %v970
  %v1275 = vpack.c.b16 %v979, %v971
  %v1276 = vpack.c.b16 %v980, %v972
  %v1277 = vpack.c.b16 %v981, %v973
  %v1278 = vpack.c.b16 %v982, %v974
  %v1279 = vpack.c.b16 %v983, %v975
  %v1280 = vpack.c.b16 %v992, %v984
  %v1281 = vpack.c.b16 %v993, %v985
  %v1282 = vpack.c.b16 %v994, %v986
  %v1283 = vpack.c.b16 %v995, %v987
  %v1284 = vpack.c.b16 %v996, %v988
  %v1285 = vpack.c.b16 %v997, %v989
  %v1286 = vpack.c.b16 %v998, %v990
  %v1287 = vpack.c.b16 %v999, %v991
  %v1288 = vpack.c.b16 %v1008, %v1000
  %v1289 = vpack.c.b16 %v1009, %v1001
  %v1290 = vpack.c.b16 %v1010, %v1002
  %v1291 = vpack.c.b16 %v1011, %v1003
  %v1292 = vpack.c.b16 %v1012, %v1004
  %v1293 = vpack.c.b16 %v1013, %v1005
  %v1294 = vpack.c.b16 %v1014, %v1006
  %v1295 = vpack.c.b16 %v1015, %v1007
  %v1296 = vpack.c.b16 %v1024, %v1016
  %v1297 = vpack.c.b16 %v1025, %v1017
  %v1298 = vpack.c.b16 %v1026, %v1018
  %v1299 = vpack.c.b16 %v1027, %v1019
  %v1300 = vpack.c.b16 %v1028, %v1020
  %v1301 = vpack.c.b16 %v1029, %v1021
  %v1302 = vpack.c.b16 %v1030, %v1022
  %v1303 = vpack.c.b16 %v1031, %v1023
  %v1304 = vpack.c.b16 %v1040, %v1032
  %v1305 = vpack.c.b16 %v1041, %v1033
  %v1306 = vpack.c.b16 %v1042, %v1034
  %v1307 = vpack.c.b16 %v1043, %v1035
  %v1308 = vpack.c.b16 %v1044, %v1036
  %v1309 = vpack.c.b16 %v1045, %v1037
  %v1310 = vpack.c.b16 %v1046, %v1038
  %v1311 = vpack.c.b16 %v1047, %v1039
  %v1312 = vpack.c.b16 %v1056, %v1048
  %v1313 = vpack.c.b16 %v1057, %v1049
  %v1314 = vpack.c.b16 %v1058, %v1050
  %v1315 = vpack.c.b16 %v1059, %v1051
  %v1316 = vpack.c.b16 %v1060, %v1052
  %v1317 = vpack.c.b16 %v1061, %v1053
  %v1318 = vpack.c.b16 %v1062, %v1054
  %v1319 = vpack.c.b16 %v1063, %v1055
  %1576 = vmatpush.bf16.msra.mxu0 %v1120
  %1577 = vmatpush.bf16.msra.mxu0 %v1112
  %1578 = vmatpush.bf16.msra.mxu0 %v1104
  %1579 = vmatpush.bf16.msra.mxu0 %v1096
  %1580 = vmatpush.bf16.msra.mxu0 %v1088
  %1581 = vmatpush.bf16.msra.mxu0 %v1080
  %1582 = vmatpush.bf16.msra.mxu0 %v1072
  %1583 = vmatpush.bf16.msra.mxu0 %v1064
  %1584 = vmatmul.bf16.gmra.mxu0 0
  %v1585 = vpop.f32.mrf.mxu0
  %v1586 = vadd.f32 0.0, %v1585
  %v1587 = vpop.f32.mrf.mxu0
  %1588 = vdwg.mxu0
  %1589 = vmatpush.bf16.msra.mxu0 %v1184
  %1590 = vmatpush.bf16.msra.mxu0 %v1176
  %1591 = vmatpush.bf16.msra.mxu0 %v1168
  %1592 = vmatpush.bf16.msra.mxu0 %v1160
  %1593 = vmatpush.bf16.msra.mxu0 %v1152
  %1594 = vmatpush.bf16.msra.mxu0 %v1144
  %1595 = vmatpush.bf16.msra.mxu0 %v1136
  %1596 = vmatpush.bf16.msra.mxu0 %v1128
  %1597 = vmatmul.bf16.gmra.mxu0 0
  %v1598 = vpop.f32.mrf.mxu0
  %v1599 = vadd.f32 %v1586, %v1598
  %v1600 = vpop.f32.mrf.mxu0
  %1601 = vdwg.mxu0
  %1602 = vmatpush.bf16.msra.mxu0 %v1248
  %1603 = vmatpush.bf16.msra.mxu0 %v1240
  %1604 = vmatpush.bf16.msra.mxu0 %v1232
  %1605 = vmatpush.bf16.msra.mxu0 %v1224
  %1606 = vmatpush.bf16.msra.mxu0 %v1216
  %1607 = vmatpush.bf16.msra.mxu0 %v1208
  %1608 = vmatpush.bf16.msra.mxu0 %v1200
  %1609 = vmatpush.bf16.msra.mxu0 %v1192
  %1610 = vmatmul.bf16.gmra.mxu0 0
  %v1611 = vpop.f32.mrf.mxu0
  %v1612 = vadd.f32 %v1599, %v1611
  %v1613 = vpop.f32.mrf.mxu0
  %1614 = vdwg.mxu0
  %1615 = vmatpush.bf16.msra.mxu0 %v1312
  %1616 = vmatpush.bf16.msra.mxu0 %v1304
  %1617 = vmatpush.bf16.msra.mxu0 %v1296
  %1618 = vmatpush.bf16.msra.mxu0 %v1288
  %1619 = vmatpush.bf16.msra.mxu0 %v1280
  %1620 = vmatpush.bf16.msra.mxu0 %v1272
  %1621 = vmatpush.bf16.msra.mxu0 %v1264
  %1622 = vmatpush.bf16.msra.mxu0 %v1256
  %1623 = vmatmul.bf16.gmra.mxu0 0
  %v1624 = vpop.f32.mrf.mxu0
  %v1625 = vadd.f32 %v1612, %v1624
  %v1626 = vpop.f32.mrf.mxu0
  %1627 = vdwg.mxu0
  %1628 = vmatpush.bf16.msra.mxu0 %v1121
  %1629 = vmatpush.bf16.msra.mxu0 %v1113
  %1630 = vmatpush.bf16.msra.mxu0 %v1105
  %1631 = vmatpush.bf16.msra.mxu0 %v1097
  %1632 = vmatpush.bf16.msra.mxu0 %v1089
  %1633 = vmatpush.bf16.msra.mxu0 %v1081
  %1634 = vmatpush.bf16.msra.mxu0 %v1073
  %1635 = vmatpush.bf16.msra.mxu0 %v1065
  %1636 = vmatmul.bf16.gmra.mxu0 0
  %v1637 = vpop.f32.mrf.mxu0
  %v1638 = vadd.f32 0.0, %v1637
  %v1639 = vpop.f32.mrf.mxu0
  %1640 = vdwg.mxu0
  %1641 = vmatpush.bf16.msra.mxu0 %v1185
  %1642 = vmatpush.bf16.msra.mxu0 %v1177
  %1643 = vmatpush.bf16.msra.mxu0 %v1169
  %1644 = vmatpush.bf16.msra.mxu0 %v1161
  %1645 = vmatpush.bf16.msra.mxu0 %v1153
  %1646 = vmatpush.bf16.msra.mxu0 %v1145
  %1647 = vmatpush.bf16.msra.mxu0 %v1137
  %1648 = vmatpush.bf16.msra.mxu0 %v1129
  %1649 = vmatmul.bf16.gmra.mxu0 0
  %v1650 = vpop.f32.mrf.mxu0
  %v1651 = vadd.f32 %v1638, %v1650
  %v1652 = vpop.f32.mrf.mxu0
  %1653 = vdwg.mxu0
  %1654 = vmatpush.bf16.msra.mxu0 %v1249
  %1655 = vmatpush.bf16.msra.mxu0 %v1241
  %1656 = vmatpush.bf16.msra.mxu0 %v1233
  %1657 = vmatpush.bf16.msra.mxu0 %v1225
  %1658 = vmatpush.bf16.msra.mxu0 %v1217
  %1659 = vmatpush.bf16.msra.mxu0 %v1209
  %1660 = vmatpush.bf16.msra.mxu0 %v1201
  %1661 = vmatpush.bf16.msra.mxu0 %v1193
  %1662 = vmatmul.bf16.gmra.mxu0 0
  %v1663 = vpop.f32.mrf.mxu0
  %v1664 = vadd.f32 %v1651, %v1663
  %v1665 = vpop.f32.mrf.mxu0
  %1666 = vdwg.mxu0
  %1667 = vmatpush.bf16.msra.mxu0 %v1313
  %1668 = vmatpush.bf16.msra.mxu0 %v1305
  %1669 = vmatpush.bf16.msra.mxu0 %v1297
  %1670 = vmatpush.bf16.msra.mxu0 %v1289
  %1671 = vmatpush.bf16.msra.mxu0 %v1281
  %1672 = vmatpush.bf16.msra.mxu0 %v1273
  %1673 = vmatpush.bf16.msra.mxu0 %v1265
  %1674 = vmatpush.bf16.msra.mxu0 %v1257
  %1675 = vmatmul.bf16.gmra.mxu0 0
  %v1676 = vpop.f32.mrf.mxu0
  %v1677 = vadd.f32 %v1664, %v1676
  %v1678 = vpop.f32.mrf.mxu0
  %1679 = vdwg.mxu0
  %1680 = vmatpush.bf16.msra.mxu0 %v1122
  %1681 = vmatpush.bf16.msra.mxu0 %v1114
  %1682 = vmatpush.bf16.msra.mxu0 %v1106
  %1683 = vmatpush.bf16.msra.mxu0 %v1098
  %1684 = vmatpush.bf16.msra.mxu0 %v1090
  %1685 = vmatpush.bf16.msra.mxu0 %v1082
  %1686 = vmatpush.bf16.msra.mxu0 %v1074
  %1687 = vmatpush.bf16.msra.mxu0 %v1066
  %1688 = vmatmul.bf16.gmra.mxu0 0
  %v1689 = vpop.f32.mrf.mxu0
  %v1690 = vadd.f32 0.0, %v1689
  %v1691 = vpop.f32.mrf.mxu0
  %1692 = vdwg.mxu0
  %1693 = vmatpush.bf16.msra.mxu0 %v1186
  %1694 = vmatpush.bf16.msra.mxu0 %v1178
  %1695 = vmatpush.bf16.msra.mxu0 %v1170
  %1696 = vmatpush.bf16.msra.mxu0 %v1162
  %1697 = vmatpush.bf16.msra.mxu0 %v1154
  %1698 = vmatpush.bf16.msra.mxu0 %v1146
  %1699 = vmatpush.bf16.msra.mxu0 %v1138
  %1700 = vmatpush.bf16.msra.mxu0 %v1130
  %1701 = vmatmul.bf16.gmra.mxu0 0
  %v1702 = vpop.f32.mrf.mxu0
  %v1703 = vadd.f32 %v1690, %v1702
  %v1704 = vpop.f32.mrf.mxu0
  %1705 = vdwg.mxu0
  %1706 = vmatpush.bf16.msra.mxu0 %v1250
  %1707 = vmatpush.bf16.msra.mxu0 %v1242
  %1708 = vmatpush.bf16.msra.mxu0 %v1234
  %1709 = vmatpush.bf16.msra.mxu0 %v1226
  %1710 = vmatpush.bf16.msra.mxu0 %v1218
  %1711 = vmatpush.bf16.msra.mxu0 %v1210
  %1712 = vmatpush.bf16.msra.mxu0 %v1202
  %1713 = vmatpush.bf16.msra.mxu0 %v1194
  %1714 = vmatmul.bf16.gmra.mxu0 0
  %v1715 = vpop.f32.mrf.mxu0
  %v1716 = vadd.f32 %v1703, %v1715
  %v1717 = vpop.f32.mrf.mxu0
  %1718 = vdwg.mxu0
  %1719 = vmatpush.bf16.msra.mxu0 %v1314
  %1720 = vmatpush.bf16.msra.mxu0 %v1306
  %1721 = vmatpush.bf16.msra.mxu0 %v1298
  %1722 = vmatpush.bf16.msra.mxu0 %v1290
  %1723 = vmatpush.bf16.msra.mxu0 %v1282
  %1724 = vmatpush.bf16.msra.mxu0 %v1274
  %1725 = vmatpush.bf16.msra.mxu0 %v1266
  %1726 = vmatpush.bf16.msra.mxu0 %v1258
  %1727 = vmatmul.bf16.gmra.mxu0 0
  %v1728 = vpop.f32.mrf.mxu0
  %v1729 = vadd.f32 %v1716, %v1728
  %v1730 = vpop.f32.mrf.mxu0
  %1731 = vdwg.mxu0
  %1732 = vmatpush.bf16.msra.mxu0 %v1123
  %1733 = vmatpush.bf16.msra.mxu0 %v1115
  %1734 = vmatpush.bf16.msra.mxu0 %v1107
  %1735 = vmatpush.bf16.msra.mxu0 %v1099
  %1736 = vmatpush.bf16.msra.mxu0 %v1091
  %1737 = vmatpush.bf16.msra.mxu0 %v1083
  %1738 = vmatpush.bf16.msra.mxu0 %v1075
  %1739 = vmatpush.bf16.msra.mxu0 %v1067
  %1740 = vmatmul.bf16.gmra.mxu0 0
  %v1741 = vpop.f32.mrf.mxu0
  %v1742 = vadd.f32 0.0, %v1741
  %v1743 = vpop.f32.mrf.mxu0
  %1744 = vdwg.mxu0
  %1745 = vmatpush.bf16.msra.mxu0 %v1187
  %1746 = vmatpush.bf16.msra.mxu0 %v1179
  %1747 = vmatpush.bf16.msra.mxu0 %v1171
  %1748 = vmatpush.bf16.msra.mxu0 %v1163
  %1749 = vmatpush.bf16.msra.mxu0 %v1155
  %1750 = vmatpush.bf16.msra.mxu0 %v1147
  %1751 = vmatpush.bf16.msra.mxu0 %v1139
  %1752 = vmatpush.bf16.msra.mxu0 %v1131
  %1753 = vmatmul.bf16.gmra.mxu0 0
  %v1754 = vpop.f32.mrf.mxu0
  %v1755 = vadd.f32 %v1742, %v1754
  %v1756 = vpop.f32.mrf.mxu0
  %1757 = vdwg.mxu0
  %1758 = vmatpush.bf16.msra.mxu0 %v1251
  %1759 = vmatpush.bf16.msra.mxu0 %v1243
  %1760 = vmatpush.bf16.msra.mxu0 %v1235
  %1761 = vmatpush.bf16.msra.mxu0 %v1227
  %1762 = vmatpush.bf16.msra.mxu0 %v1219
  %1763 = vmatpush.bf16.msra.mxu0 %v1211
  %1764 = vmatpush.bf16.msra.mxu0 %v1203
  %1765 = vmatpush.bf16.msra.mxu0 %v1195
  %1766 = vmatmul.bf16.gmra.mxu0 0
  %v1767 = vpop.f32.mrf.mxu0
  %v1768 = vadd.f32 %v1755, %v1767
  %v1769 = vpop.f32.mrf.mxu0
  %1770 = vdwg.mxu0
  %1771 = vmatpush.bf16.msra.mxu0 %v1315
  %1772 = vmatpush.bf16.msra.mxu0 %v1307
  %1773 = vmatpush.bf16.msra.mxu0 %v1299
  %1774 = vmatpush.bf16.msra.mxu0 %v1291
  %1775 = vmatpush.bf16.msra.mxu0 %v1283
  %1776 = vmatpush.bf16.msra.mxu0 %v1275
  %1777 = vmatpush.bf16.msra.mxu0 %v1267
  %1778 = vmatpush.bf16.msra.mxu0 %v1259
  %1779 = vmatmul.bf16.gmra.mxu0 0
  %v1780 = vpop.f32.mrf.mxu0
  %v1781 = vadd.f32 %v1768, %v1780
  %v1782 = vpop.f32.mrf.mxu0
  %1783 = vdwg.mxu0
  %1784 = vmatpush.bf16.msra.mxu0 %v1124
  %1785 = vmatpush.bf16.msra.mxu0 %v1116
  %1786 = vmatpush.bf16.msra.mxu0 %v1108
  %1787 = vmatpush.bf16.msra.mxu0 %v1100
  %1788 = vmatpush.bf16.msra.mxu0 %v1092
  %1789 = vmatpush.bf16.msra.mxu0 %v1084
  %1790 = vmatpush.bf16.msra.mxu0 %v1076
  %1791 = vmatpush.bf16.msra.mxu0 %v1068
  %1792 = vmatmul.bf16.gmra.mxu0 0
  %v1793 = vpop.f32.mrf.mxu0
  %v1794 = vadd.f32 0.0, %v1793
  %v1795 = vpop.f32.mrf.mxu0
  %1796 = vdwg.mxu0
  %1797 = vmatpush.bf16.msra.mxu0 %v1188
  %1798 = vmatpush.bf16.msra.mxu0 %v1180
  %1799 = vmatpush.bf16.msra.mxu0 %v1172
  %1800 = vmatpush.bf16.msra.mxu0 %v1164
  %1801 = vmatpush.bf16.msra.mxu0 %v1156
  %1802 = vmatpush.bf16.msra.mxu0 %v1148
  %1803 = vmatpush.bf16.msra.mxu0 %v1140
  %1804 = vmatpush.bf16.msra.mxu0 %v1132
  %1805 = vmatmul.bf16.gmra.mxu0 0
  %v1806 = vpop.f32.mrf.mxu0
  %v1807 = vadd.f32 %v1794, %v1806
  %v1808 = vpop.f32.mrf.mxu0
  %1809 = vdwg.mxu0
  %1810 = vmatpush.bf16.msra.mxu0 %v1252
  %1811 = vmatpush.bf16.msra.mxu0 %v1244
  %1812 = vmatpush.bf16.msra.mxu0 %v1236
  %1813 = vmatpush.bf16.msra.mxu0 %v1228
  %1814 = vmatpush.bf16.msra.mxu0 %v1220
  %1815 = vmatpush.bf16.msra.mxu0 %v1212
  %1816 = vmatpush.bf16.msra.mxu0 %v1204
  %1817 = vmatpush.bf16.msra.mxu0 %v1196
  %1818 = vmatmul.bf16.gmra.mxu0 0
  %v1819 = vpop.f32.mrf.mxu0
  %v1820 = vadd.f32 %v1807, %v1819
  %v1821 = vpop.f32.mrf.mxu0
  %1822 = vdwg.mxu0
  %1823 = vmatpush.bf16.msra.mxu0 %v1316
  %1824 = vmatpush.bf16.msra.mxu0 %v1308
  %1825 = vmatpush.bf16.msra.mxu0 %v1300
  %1826 = vmatpush.bf16.msra.mxu0 %v1292
  %1827 = vmatpush.bf16.msra.mxu0 %v1284
  %1828 = vmatpush.bf16.msra.mxu0 %v1276
  %1829 = vmatpush.bf16.msra.mxu0 %v1268
  %1830 = vmatpush.bf16.msra.mxu0 %v1260
  %1831 = vmatmul.bf16.gmra.mxu0 0
  %v1832 = vpop.f32.mrf.mxu0
  %v1833 = vadd.f32 %v1820, %v1832
  %v1834 = vpop.f32.mrf.mxu0
  %1835 = vdwg.mxu0
  %1836 = vmatpush.bf16.msra.mxu0 %v1125
  %1837 = vmatpush.bf16.msra.mxu0 %v1117
  %1838 = vmatpush.bf16.msra.mxu0 %v1109
  %1839 = vmatpush.bf16.msra.mxu0 %v1101
  %1840 = vmatpush.bf16.msra.mxu0 %v1093
  %1841 = vmatpush.bf16.msra.mxu0 %v1085
  %1842 = vmatpush.bf16.msra.mxu0 %v1077
  %1843 = vmatpush.bf16.msra.mxu0 %v1069
  %1844 = vmatmul.bf16.gmra.mxu0 0
  %v1845 = vpop.f32.mrf.mxu0
  %v1846 = vadd.f32 0.0, %v1845
  %v1847 = vpop.f32.mrf.mxu0
  %1848 = vdwg.mxu0
  %1849 = vmatpush.bf16.msra.mxu0 %v1189
  %1850 = vmatpush.bf16.msra.mxu0 %v1181
  %1851 = vmatpush.bf16.msra.mxu0 %v1173
  %1852 = vmatpush.bf16.msra.mxu0 %v1165
  %1853 = vmatpush.bf16.msra.mxu0 %v1157
  %1854 = vmatpush.bf16.msra.mxu0 %v1149
  %1855 = vmatpush.bf16.msra.mxu0 %v1141
  %1856 = vmatpush.bf16.msra.mxu0 %v1133
  %1857 = vmatmul.bf16.gmra.mxu0 0
  %v1858 = vpop.f32.mrf.mxu0
  %v1859 = vadd.f32 %v1846, %v1858
  %v1860 = vpop.f32.mrf.mxu0
  %1861 = vdwg.mxu0
  %1862 = vmatpush.bf16.msra.mxu0 %v1253
  %1863 = vmatpush.bf16.msra.mxu0 %v1245
  %1864 = vmatpush.bf16.msra.mxu0 %v1237
  %1865 = vmatpush.bf16.msra.mxu0 %v1229
  %1866 = vmatpush.bf16.msra.mxu0 %v1221
  %1867 = vmatpush.bf16.msra.mxu0 %v1213
  %1868 = vmatpush.bf16.msra.mxu0 %v1205
  %1869 = vmatpush.bf16.msra.mxu0 %v1197
  %1870 = vmatmul.bf16.gmra.mxu0 0
  %v1871 = vpop.f32.mrf.mxu0
  %v1872 = vadd.f32 %v1859, %v1871
  %v1873 = vpop.f32.mrf.mxu0
  %1874 = vdwg.mxu0
  %1875 = vmatpush.bf16.msra.mxu0 %v1317
  %1876 = vmatpush.bf16.msra.mxu0 %v1309
  %1877 = vmatpush.bf16.msra.mxu0 %v1301
  %1878 = vmatpush.bf16.msra.mxu0 %v1293
  %1879 = vmatpush.bf16.msra.mxu0 %v1285
  %1880 = vmatpush.bf16.msra.mxu0 %v1277
  %1881 = vmatpush.bf16.msra.mxu0 %v1269
  %1882 = vmatpush.bf16.msra.mxu0 %v1261
  %1883 = vmatmul.bf16.gmra.mxu0 0
  %v1884 = vpop.f32.mrf.mxu0
  %v1885 = vadd.f32 %v1872, %v1884
  %v1886 = vpop.f32.mrf.mxu0
  %1887 = vdwg.mxu0
  %1888 = vmatpush.bf16.msra.mxu0 %v1126
  %1889 = vmatpush.bf16.msra.mxu0 %v1118
  %1890 = vmatpush.bf16.msra.mxu0 %v1110
  %1891 = vmatpush.bf16.msra.mxu0 %v1102
  %1892 = vmatpush.bf16.msra.mxu0 %v1094
  %1893 = vmatpush.bf16.msra.mxu0 %v1086
  %1894 = vmatpush.bf16.msra.mxu0 %v1078
  %1895 = vmatpush.bf16.msra.mxu0 %v1070
  %1896 = vmatmul.bf16.gmra.mxu0 0
  %v1897 = vpop.f32.mrf.mxu0
  %v1898 = vadd.f32 0.0, %v1897
  %v1899 = vpop.f32.mrf.mxu0
  %1900 = vdwg.mxu0
  %1901 = vmatpush.bf16.msra.mxu0 %v1190
  %1902 = vmatpush.bf16.msra.mxu0 %v1182
  %1903 = vmatpush.bf16.msra.mxu0 %v1174
  %1904 = vmatpush.bf16.msra.mxu0 %v1166
  %1905 = vmatpush.bf16.msra.mxu0 %v1158
  %1906 = vmatpush.bf16.msra.mxu0 %v1150
  %1907 = vmatpush.bf16.msra.mxu0 %v1142
  %1908 = vmatpush.bf16.msra.mxu0 %v1134
  %1909 = vmatmul.bf16.gmra.mxu0 0
  %v1910 = vpop.f32.mrf.mxu0
  %v1911 = vadd.f32 %v1898, %v1910
  %v1912 = vpop.f32.mrf.mxu0
  %1913 = vdwg.mxu0
  %1914 = vmatpush.bf16.msra.mxu0 %v1254
  %1915 = vmatpush.bf16.msra.mxu0 %v1246
  %1916 = vmatpush.bf16.msra.mxu0 %v1238
  %1917 = vmatpush.bf16.msra.mxu0 %v1230
  %1918 = vmatpush.bf16.msra.mxu0 %v1222
  %1919 = vmatpush.bf16.msra.mxu0 %v1214
  %1920 = vmatpush.bf16.msra.mxu0 %v1206
  %1921 = vmatpush.bf16.msra.mxu0 %v1198
  %1922 = vmatmul.bf16.gmra.mxu0 0
  %v1923 = vpop.f32.mrf.mxu0
  %v1924 = vadd.f32 %v1911, %v1923
  %v1925 = vpop.f32.mrf.mxu0
  %1926 = vdwg.mxu0
  %1927 = vmatpush.bf16.msra.mxu0 %v1318
  %1928 = vmatpush.bf16.msra.mxu0 %v1310
  %1929 = vmatpush.bf16.msra.mxu0 %v1302
  %1930 = vmatpush.bf16.msra.mxu0 %v1294
  %1931 = vmatpush.bf16.msra.mxu0 %v1286
  %1932 = vmatpush.bf16.msra.mxu0 %v1278
  %1933 = vmatpush.bf16.msra.mxu0 %v1270
  %1934 = vmatpush.bf16.msra.mxu0 %v1262
  %1935 = vmatmul.bf16.gmra.mxu0 0
  %v1936 = vpop.f32.mrf.mxu0
  %v1937 = vadd.f32 %v1924, %v1936
  %v1938 = vpop.f32.mrf.mxu0
  %1939 = vdwg.mxu0
  %1940 = vmatpush.bf16.msra.mxu0 %v1127
  %1941 = vmatpush.bf16.msra.mxu0 %v1119
  %1942 = vmatpush.bf16.msra.mxu0 %v1111
  %1943 = vmatpush.bf16.msra.mxu0 %v1103
  %1944 = vmatpush.bf16.msra.mxu0 %v1095
  %1945 = vmatpush.bf16.msra.mxu0 %v1087
  %1946 = vmatpush.bf16.msra.mxu0 %v1079
  %1947 = vmatpush.bf16.msra.mxu0 %v1071
  %1948 = vmatmul.bf16.gmra.mxu0 0
  %v1949 = vpop.f32.mrf.mxu0
  %v1950 = vadd.f32 0.0, %v1949
  %v1951 = vpop.f32.mrf.mxu0
  %1952 = vdwg.mxu0
  %1953 = vmatpush.bf16.msra.mxu0 %v1191
  %1954 = vmatpush.bf16.msra.mxu0 %v1183
  %1955 = vmatpush.bf16.msra.mxu0 %v1175
  %1956 = vmatpush.bf16.msra.mxu0 %v1167
  %1957 = vmatpush.bf16.msra.mxu0 %v1159
  %1958 = vmatpush.bf16.msra.mxu0 %v1151
  %1959 = vmatpush.bf16.msra.mxu0 %v1143
  %1960 = vmatpush.bf16.msra.mxu0 %v1135
  %1961 = vmatmul.bf16.gmra.mxu0 0
  %v1962 = vpop.f32.mrf.mxu0
  %v1963 = vadd.f32 %v1950, %v1962
  %v1964 = vpop.f32.mrf.mxu0
  %1965 = vdwg.mxu0
  %1966 = vmatpush.bf16.msra.mxu0 %v1255
  %1967 = vmatpush.bf16.msra.mxu0 %v1247
  %1968 = vmatpush.bf16.msra.mxu0 %v1239
  %1969 = vmatpush.bf16.msra.mxu0 %v1231
  %1970 = vmatpush.bf16.msra.mxu0 %v1223
  %1971 = vmatpush.bf16.msra.mxu0 %v1215
  %1972 = vmatpush.bf16.msra.mxu0 %v1207
  %1973 = vmatpush.bf16.msra.mxu0 %v1199
  %1974 = vmatmul.bf16.gmra.mxu0 0
  %v1975 = vpop.f32.mrf.mxu0
  %v1976 = vadd.f32 %v1963, %v1975
  %v1977 = vpop.f32.mrf.mxu0
  %1978 = vdwg.mxu0
  %1979 = vmatpush.bf16.msra.mxu0 %v1319
  %1980 = vmatpush.bf16.msra.mxu0 %v1311
  %1981 = vmatpush.bf16.msra.mxu0 %v1303
  %1982 = vmatpush.bf16.msra.mxu0 %v1295
  %1983 = vmatpush.bf16.msra.mxu0 %v1287
  %1984 = vmatpush.bf16.msra.mxu0 %v1279
  %1985 = vmatpush.bf16.msra.mxu0 %v1271
  %1986 = vmatpush.bf16.msra.mxu0 %v1263
  %1987 = vmatmul.bf16.gmra.mxu0 0
  %v1988 = vpop.f32.mrf.mxu0
  %v1989 = vadd.f32 %v1976, %v1988
  %v1990 = vpop.f32.mrf.mxu0
  %1991 = vdwg.mxu0
  %v1992 = vld [vmem:[%s0] sm:$0xff]
  %v1993 = vld [vmem:[%s0 + $0x8] sm:$0xff]
  %v1994 = vld [vmem:[%s0 + $0x10] sm:$0xff]
  %v1995 = vld [vmem:[%s0 + $0x18] sm:$0xff]
  %v2004 = vrot.slane %v1677, 4
  %v2005 = vrot.slane %v1781, 4
  %v2006 = vrot.slane %v1885, 4
  %v2007 = vrot.slane %v1989, 4
  %vm2008 = vcmask 1043456
  %v2009 = vsel %vm2008, %v1625, %v2004
  %v2010 = vsel %vm2008, %v1729, %v2005
  %v2011 = vsel %vm2008, %v1833, %v2006
  %v2012 = vsel %vm2008, %v1937, %v2007
  %v2017 = vadd.f32 %v1992, %v2009
  %v2018 = vadd.f32 %v1993, %v2010
  %v2019 = vadd.f32 %v1994, %v2011
  %v2020 = vadd.f32 %v1995, %v2012
  %v2021 = vxor.u32 %v2017, 2147483648
  %v2022 = vmul.f32 %v2021, 1.442695
  %v2023 = vpow.pop %v2022
  %v2024 = vadd.f32 %v2023, 1.0
  %v2025 = vrcp.pop %v2024
  %v2026 = vmul.f32 %v2024, %v2025
  %v2027 = vsub.f32 1.0, %v2026
  %v2028 = vmul.f32 %v2025, %v2027
  %v2029 = vadd.f32 %v2025, %v2028
  %vm2030 = vweird.f32 %v2024
  %vm2031 = vweird.f32 %v2025
  %vm2032 = vmor %vm2030, %vm2031
  %v2033 = vsel %vm2032, %v2025, %v2029
  %v2034 = vand.u32 2147483647, %v2024
  %vm2035 = vcmp.eq.f32.partialorder %v2034, 8.507059e+37
  %v2036 = vand.u32 %v2024, 2147483648
  %v2037 = vor.u32 1.1754944e-38, %v2036
  %v2038 = vsel %vm2035, %v2037, %v2033
  %v2039 = vmul.f32 1.0, %v2038
  %v2040 = vxor.u32 %v2018, 2147483648
  %v2041 = vmul.f32 %v2040, 1.442695
  %v2042 = vpow.pop %v2041
  %v2043 = vadd.f32 %v2042, 1.0
  %v2044 = vrcp.pop %v2043
  %v2045 = vmul.f32 %v2043, %v2044
  %v2046 = vsub.f32 1.0, %v2045
  %v2047 = vmul.f32 %v2044, %v2046
  %v2048 = vadd.f32 %v2044, %v2047
  %vm2049 = vweird.f32 %v2043
  %vm2050 = vweird.f32 %v2044
  %vm2051 = vmor %vm2049, %vm2050
  %v2052 = vsel %vm2051, %v2044, %v2048
  %v2053 = vand.u32 2147483647, %v2043
  %vm2054 = vcmp.eq.f32.partialorder %v2053, 8.507059e+37
  %v2055 = vand.u32 %v2043, 2147483648
  %v2056 = vor.u32 1.1754944e-38, %v2055
  %v2057 = vsel %vm2054, %v2056, %v2052
  %v2058 = vmul.f32 1.0, %v2057
  %v2059 = vtanh.pop %v2019
  %v2060 = vxor.u32 %v2020, 2147483648
  %v2061 = vmul.f32 %v2060, 1.442695
  %v2062 = vpow.pop %v2061
  %v2063 = vadd.f32 %v2062, 1.0
  %v2064 = vrcp.pop %v2063
  %v2065 = vmul.f32 %v2063, %v2064
  %v2066 = vsub.f32 1.0, %v2065
  %v2067 = vmul.f32 %v2064, %v2066
  %v2068 = vadd.f32 %v2064, %v2067
  %vm2069 = vweird.f32 %v2063
  %vm2070 = vweird.f32 %v2064
  %vm2071 = vmor %vm2069, %vm2070
  %v2072 = vsel %vm2071, %v2064, %v2068
  %v2073 = vand.u32 2147483647, %v2063
  %vm2074 = vcmp.eq.f32.partialorder %v2073, 8.507059e+37
  %v2075 = vand.u32 %v2063, 2147483648
  %v2076 = vor.u32 1.1754944e-38, %v2075
  %v2077 = vsel %vm2074, %v2076, %v2072
  %v2078 = vmul.f32 1.0, %v2077
  %v2079 = vmul.f32 %v2058, 0.0
  %v2080 = vmul.f32 %v2039, %v2059
  %v2081 = vadd.f32 %v2079, %v2080
  %v2082 = vtanh.pop %v2081
  %v2083 = vmul.f32 %v2078, %v2082
  %v2085 = vrot.slane %v2083, 2
  %vm2086 = vcmask 1041408
  %v2087 = vsel %vm2086, %v2083, %v2085
  %2089 = vst [vmem:[%s2] sm:$0xf] %v2087
  %2090 = vst.sshfl [vmem:[#allocation1] sm:$0xff pattern:$0x75643120] %v2083
  %s2091 = scalar_lea.vmem [#allocation1], 1
  %v2092 = vld [vmem:[%s2091] ss:$2 sm:$0xff]
  %s2094 = scalar_lea.vmem %s2, 56
  %2095 = vst [vmem:[%s2094 + $0x4] sm:$0xf] %v2092
  %2096 = vst [vmem:[#allocation1] ss:$2 sm:$0xff] %v2083
  %v2097 = vld.sshfl [vmem:[#allocation1] sm:$0xff pattern:$0x75316420]
  %v2098 = vld.sshfl [vmem:[#allocation1 + $0x8] sm:$0xff pattern:$0x75316420]
  %2101 = vst [vmem:[#allocation1] ss:$2 sm:$0xff] %v2083
  %v2102 = vld.sshfl [vmem:[#allocation1] sm:$0xff pattern:$0x75316420]
  %v2103 = vld.sshfl [vmem:[#allocation1 + $0x8] sm:$0xff pattern:$0x75316420]
  %v2106 = vmul.f32 %v2097, %v292
  %v2107 = vmul.f32 %v2098, %v293
  %v2108 = vmul.f32 %v2102, %v294
  %v2109 = vmul.f32 %v2103, %v295
  %v2110 = vpack.c.bf16 %v2106, %v2106
  %v2111 = vpack.c.bf16 %v2107, %v2107
  %v2112 = vpack.c.bf16 %v2108, %v2108
  %v2113 = vpack.c.bf16 %v2109, %v2109
  %2114 = vmatpush.bf16.msra.mxu0 %v1120
  %2115 = vmatpush.bf16.msra.mxu0 %v1112
  %2116 = vmatpush.bf16.msra.mxu0 %v1104
  %2117 = vmatpush.bf16.msra.mxu0 %v1096
  %2118 = vmatpush.bf16.msra.mxu0 %v1088
  %2119 = vmatpush.bf16.msra.mxu0 %v1080
  %2120 = vmatpush.bf16.msra.mxu0 %v1072
  %2121 = vmatpush.bf16.msra.mxu0 %v1064
  %2122 = vmatmul.bf16.gmra.mxu0 %v2110
  %v2123 = vpop.f32.mrf.mxu0
  %v2124 = vadd.f32 0.0, %v2123
  %v2125 = vpop.f32.mrf.mxu0
  %2126 = vdwg.mxu0
  %2127 = vmatpush.bf16.msra.mxu0 %v1184
  %2128 = vmatpush.bf16.msra.mxu0 %v1176
  %2129 = vmatpush.bf16.msra.mxu0 %v1168
  %2130 = vmatpush.bf16.msra.mxu0 %v1160
  %2131 = vmatpush.bf16.msra.mxu0 %v1152
  %2132 = vmatpush.bf16.msra.mxu0 %v1144
  %2133 = vmatpush.bf16.msra.mxu0 %v1136
  %2134 = vmatpush.bf16.msra.mxu0 %v1128
  %2135 = vmatmul.bf16.gmra.mxu0 %v2111
  %v2136 = vpop.f32.mrf.mxu0
  %v2137 = vadd.f32 %v2124, %v2136
  %v2138 = vpop.f32.mrf.mxu0
  %2139 = vdwg.mxu0
  %2140 = vmatpush.bf16.msra.mxu0 %v1248
  %2141 = vmatpush.bf16.msra.mxu0 %v1240
  %2142 = vmatpush.bf16.msra.mxu0 %v1232
  %2143 = vmatpush.bf16.msra.mxu0 %v1224
  %2144 = vmatpush.bf16.msra.mxu0 %v1216
  %2145 = vmatpush.bf16.msra.mxu0 %v1208
  %2146 = vmatpush.bf16.msra.mxu0 %v1200
  %2147 = vmatpush.bf16.msra.mxu0 %v1192
  %2148 = vmatmul.bf16.gmra.mxu0 %v2112
  %v2149 = vpop.f32.mrf.mxu0
  %v2150 = vadd.f32 %v2137, %v2149
  %v2151 = vpop.f32.mrf.mxu0
  %2152 = vdwg.mxu0
  %2153 = vmatpush.bf16.msra.mxu0 %v1312
  %2154 = vmatpush.bf16.msra.mxu0 %v1304
  %2155 = vmatpush.bf16.msra.mxu0 %v1296
  %2156 = vmatpush.bf16.msra.mxu0 %v1288
  %2157 = vmatpush.bf16.msra.mxu0 %v1280
  %2158 = vmatpush.bf16.msra.mxu0 %v1272
  %2159 = vmatpush.bf16.msra.mxu0 %v1264
  %2160 = vmatpush.bf16.msra.mxu0 %v1256
  %2161 = vmatmul.bf16.gmra.mxu0 %v2113
  %v2162 = vpop.f32.mrf.mxu0
  %v2163 = vadd.f32 %v2150, %v2162
  %v2164 = vpop.f32.mrf.mxu0
  %2165 = vdwg.mxu0
  %2166 = vmatpush.bf16.msra.mxu0 %v1121
  %2167 = vmatpush.bf16.msra.mxu0 %v1113
  %2168 = vmatpush.bf16.msra.mxu0 %v1105
  %2169 = vmatpush.bf16.msra.mxu0 %v1097
  %2170 = vmatpush.bf16.msra.mxu0 %v1089
  %2171 = vmatpush.bf16.msra.mxu0 %v1081
  %2172 = vmatpush.bf16.msra.mxu0 %v1073
  %2173 = vmatpush.bf16.msra.mxu0 %v1065
  %2174 = vmatmul.bf16.gmra.mxu0 %v2110
  %v2175 = vpop.f32.mrf.mxu0
  %v2176 = vadd.f32 0.0, %v2175
  %v2177 = vpop.f32.mrf.mxu0
  %2178 = vdwg.mxu0
  %2179 = vmatpush.bf16.msra.mxu0 %v1185
  %2180 = vmatpush.bf16.msra.mxu0 %v1177
  %2181 = vmatpush.bf16.msra.mxu0 %v1169
  %2182 = vmatpush.bf16.msra.mxu0 %v1161
  %2183 = vmatpush.bf16.msra.mxu0 %v1153
  %2184 = vmatpush.bf16.msra.mxu0 %v1145
  %2185 = vmatpush.bf16.msra.mxu0 %v1137
  %2186 = vmatpush.bf16.msra.mxu0 %v1129
  %2187 = vmatmul.bf16.gmra.mxu0 %v2111
  %v2188 = vpop.f32.mrf.mxu0
  %v2189 = vadd.f32 %v2176, %v2188
  %v2190 = vpop.f32.mrf.mxu0
  %2191 = vdwg.mxu0
  %2192 = vmatpush.bf16.msra.mxu0 %v1249
  %2193 = vmatpush.bf16.msra.mxu0 %v1241
  %2194 = vmatpush.bf16.msra.mxu0 %v1233
  %2195 = vmatpush.bf16.msra.mxu0 %v1225
  %2196 = vmatpush.bf16.msra.mxu0 %v1217
  %2197 = vmatpush.bf16.msra.mxu0 %v1209
  %2198 = vmatpush.bf16.msra.mxu0 %v1201
  %2199 = vmatpush.bf16.msra.mxu0 %v1193
  %2200 = vmatmul.bf16.gmra.mxu0 %v2112
  %v2201 = vpop.f32.mrf.mxu0
  %v2202 = vadd.f32 %v2189, %v2201
  %v2203 = vpop.f32.mrf.mxu0
  %2204 = vdwg.mxu0
  %2205 = vmatpush.bf16.msra.mxu0 %v1313
  %2206 = vmatpush.bf16.msra.mxu0 %v1305
  %2207 = vmatpush.bf16.msra.mxu0 %v1297
  %2208 = vmatpush.bf16.msra.mxu0 %v1289
  %2209 = vmatpush.bf16.msra.mxu0 %v1281
  %2210 = vmatpush.bf16.msra.mxu0 %v1273
  %2211 = vmatpush.bf16.msra.mxu0 %v1265
  %2212 = vmatpush.bf16.msra.mxu0 %v1257
  %2213 = vmatmul.bf16.gmra.mxu0 %v2113
  %v2214 = vpop.f32.mrf.mxu0
  %v2215 = vadd.f32 %v2202, %v2214
  %v2216 = vpop.f32.mrf.mxu0
  %2217 = vdwg.mxu0
  %2218 = vmatpush.bf16.msra.mxu0 %v1122
  %2219 = vmatpush.bf16.msra.mxu0 %v1114
  %2220 = vmatpush.bf16.msra.mxu0 %v1106
  %2221 = vmatpush.bf16.msra.mxu0 %v1098
  %2222 = vmatpush.bf16.msra.mxu0 %v1090
  %2223 = vmatpush.bf16.msra.mxu0 %v1082
  %2224 = vmatpush.bf16.msra.mxu0 %v1074
  %2225 = vmatpush.bf16.msra.mxu0 %v1066
  %2226 = vmatmul.bf16.gmra.mxu0 %v2110
  %v2227 = vpop.f32.mrf.mxu0
  %v2228 = vadd.f32 0.0, %v2227
  %v2229 = vpop.f32.mrf.mxu0
  %2230 = vdwg.mxu0
  %2231 = vmatpush.bf16.msra.mxu0 %v1186
  %2232 = vmatpush.bf16.msra.mxu0 %v1178
  %2233 = vmatpush.bf16.msra.mxu0 %v1170
  %2234 = vmatpush.bf16.msra.mxu0 %v1162
  %2235 = vmatpush.bf16.msra.mxu0 %v1154
  %2236 = vmatpush.bf16.msra.mxu0 %v1146
  %2237 = vmatpush.bf16.msra.mxu0 %v1138
  %2238 = vmatpush.bf16.msra.mxu0 %v1130
  %2239 = vmatmul.bf16.gmra.mxu0 %v2111
  %v2240 = vpop.f32.mrf.mxu0
  %v2241 = vadd.f32 %v2228, %v2240
  %v2242 = vpop.f32.mrf.mxu0
  %2243 = vdwg.mxu0
  %2244 = vmatpush.bf16.msra.mxu0 %v1250
  %2245 = vmatpush.bf16.msra.mxu0 %v1242
  %2246 = vmatpush.bf16.msra.mxu0 %v1234
  %2247 = vmatpush.bf16.msra.mxu0 %v1226
  %2248 = vmatpush.bf16.msra.mxu0 %v1218
  %2249 = vmatpush.bf16.msra.mxu0 %v1210
  %2250 = vmatpush.bf16.msra.mxu0 %v1202
  %2251 = vmatpush.bf16.msra.mxu0 %v1194
  %2252 = vmatmul.bf16.gmra.mxu0 %v2112
  %v2253 = vpop.f32.mrf.mxu0
  %v2254 = vadd.f32 %v2241, %v2253
  %v2255 = vpop.f32.mrf.mxu0
  %2256 = vdwg.mxu0
  %2257 = vmatpush.bf16.msra.mxu0 %v1314
  %2258 = vmatpush.bf16.msra.mxu0 %v1306
  %2259 = vmatpush.bf16.msra.mxu0 %v1298
  %2260 = vmatpush.bf16.msra.mxu0 %v1290
  %2261 = vmatpush.bf16.msra.mxu0 %v1282
  %2262 = vmatpush.bf16.msra.mxu0 %v1274
  %2263 = vmatpush.bf16.msra.mxu0 %v1266
  %2264 = vmatpush.bf16.msra.mxu0 %v1258
  %2265 = vmatmul.bf16.gmra.mxu0 %v2113
  %v2266 = vpop.f32.mrf.mxu0
  %v2267 = vadd.f32 %v2254, %v2266
  %v2268 = vpop.f32.mrf.mxu0
  %2269 = vdwg.mxu0
  %2270 = vmatpush.bf16.msra.mxu0 %v1123
  %2271 = vmatpush.bf16.msra.mxu0 %v1115
  %2272 = vmatpush.bf16.msra.mxu0 %v1107
  %2273 = vmatpush.bf16.msra.mxu0 %v1099
  %2274 = vmatpush.bf16.msra.mxu0 %v1091
  %2275 = vmatpush.bf16.msra.mxu0 %v1083
  %2276 = vmatpush.bf16.msra.mxu0 %v1075
  %2277 = vmatpush.bf16.msra.mxu0 %v1067
  %2278 = vmatmul.bf16.gmra.mxu0 %v2110
  %v2279 = vpop.f32.mrf.mxu0
  %v2280 = vadd.f32 0.0, %v2279
  %v2281 = vpop.f32.mrf.mxu0
  %2282 = vdwg.mxu0
  %2283 = vmatpush.bf16.msra.mxu0 %v1187
  %2284 = vmatpush.bf16.msra.mxu0 %v1179
  %2285 = vmatpush.bf16.msra.mxu0 %v1171
  %2286 = vmatpush.bf16.msra.mxu0 %v1163
  %2287 = vmatpush.bf16.msra.mxu0 %v1155
  %2288 = vmatpush.bf16.msra.mxu0 %v1147
  %2289 = vmatpush.bf16.msra.mxu0 %v1139
  %2290 = vmatpush.bf16.msra.mxu0 %v1131
  %2291 = vmatmul.bf16.gmra.mxu0 %v2111
  %v2292 = vpop.f32.mrf.mxu0
  %v2293 = vadd.f32 %v2280, %v2292
  %v2294 = vpop.f32.mrf.mxu0
  %2295 = vdwg.mxu0
  %2296 = vmatpush.bf16.msra.mxu0 %v1251
  %2297 = vmatpush.bf16.msra.mxu0 %v1243
  %2298 = vmatpush.bf16.msra.mxu0 %v1235
  %2299 = vmatpush.bf16.msra.mxu0 %v1227
  %2300 = vmatpush.bf16.msra.mxu0 %v1219
  %2301 = vmatpush.bf16.msra.mxu0 %v1211
  %2302 = vmatpush.bf16.msra.mxu0 %v1203
  %2303 = vmatpush.bf16.msra.mxu0 %v1195
  %2304 = vmatmul.bf16.gmra.mxu0 %v2112
  %v2305 = vpop.f32.mrf.mxu0
  %v2306 = vadd.f32 %v2293, %v2305
  %v2307 = vpop.f32.mrf.mxu0
  %2308 = vdwg.mxu0
  %2309 = vmatpush.bf16.msra.mxu0 %v1315
  %2310 = vmatpush.bf16.msra.mxu0 %v1307
  %2311 = vmatpush.bf16.msra.mxu0 %v1299
  %2312 = vmatpush.bf16.msra.mxu0 %v1291
  %2313 = vmatpush.bf16.msra.mxu0 %v1283
  %2314 = vmatpush.bf16.msra.mxu0 %v1275
  %2315 = vmatpush.bf16.msra.mxu0 %v1267
  %2316 = vmatpush.bf16.msra.mxu0 %v1259
  %2317 = vmatmul.bf16.gmra.mxu0 %v2113
  %v2318 = vpop.f32.mrf.mxu0
  %v2319 = vadd.f32 %v2306, %v2318
  %v2320 = vpop.f32.mrf.mxu0
  %2321 = vdwg.mxu0
  %2322 = vmatpush.bf16.msra.mxu0 %v1124
  %2323 = vmatpush.bf16.msra.mxu0 %v1116
  %2324 = vmatpush.bf16.msra.mxu0 %v1108
  %2325 = vmatpush.bf16.msra.mxu0 %v1100
  %2326 = vmatpush.bf16.msra.mxu0 %v1092
  %2327 = vmatpush.bf16.msra.mxu0 %v1084
  %2328 = vmatpush.bf16.msra.mxu0 %v1076
  %2329 = vmatpush.bf16.msra.mxu0 %v1068
  %2330 = vmatmul.bf16.gmra.mxu0 %v2110
  %v2331 = vpop.f32.mrf.mxu0
  %v2332 = vadd.f32 0.0, %v2331
  %v2333 = vpop.f32.mrf.mxu0
  %2334 = vdwg.mxu0
  %2335 = vmatpush.bf16.msra.mxu0 %v1188
  %2336 = vmatpush.bf16.msra.mxu0 %v1180
  %2337 = vmatpush.bf16.msra.mxu0 %v1172
  %2338 = vmatpush.bf16.msra.mxu0 %v1164
  %2339 = vmatpush.bf16.msra.mxu0 %v1156
  %2340 = vmatpush.bf16.msra.mxu0 %v1148
  %2341 = vmatpush.bf16.msra.mxu0 %v1140
  %2342 = vmatpush.bf16.msra.mxu0 %v1132
  %2343 = vmatmul.bf16.gmra.mxu0 %v2111
  %v2344 = vpop.f32.mrf.mxu0
  %v2345 = vadd.f32 %v2332, %v2344
  %v2346 = vpop.f32.mrf.mxu0
  %2347 = vdwg.mxu0
  %2348 = vmatpush.bf16.msra.mxu0 %v1252
  %2349 = vmatpush.bf16.msra.mxu0 %v1244
  %2350 = vmatpush.bf16.msra.mxu0 %v1236
  %2351 = vmatpush.bf16.msra.mxu0 %v1228
  %2352 = vmatpush.bf16.msra.mxu0 %v1220
  %2353 = vmatpush.bf16.msra.mxu0 %v1212
  %2354 = vmatpush.bf16.msra.mxu0 %v1204
  %2355 = vmatpush.bf16.msra.mxu0 %v1196
  %2356 = vmatmul.bf16.gmra.mxu0 %v2112
  %v2357 = vpop.f32.mrf.mxu0
  %v2358 = vadd.f32 %v2345, %v2357
  %v2359 = vpop.f32.mrf.mxu0
  %2360 = vdwg.mxu0
  %2361 = vmatpush.bf16.msra.mxu0 %v1316
  %2362 = vmatpush.bf16.msra.mxu0 %v1308
  %2363 = vmatpush.bf16.msra.mxu0 %v1300
  %2364 = vmatpush.bf16.msra.mxu0 %v1292
  %2365 = vmatpush.bf16.msra.mxu0 %v1284
  %2366 = vmatpush.bf16.msra.mxu0 %v1276
  %2367 = vmatpush.bf16.msra.mxu0 %v1268
  %2368 = vmatpush.bf16.msra.mxu0 %v1260
  %2369 = vmatmul.bf16.gmra.mxu0 %v2113
  %v2370 = vpop.f32.mrf.mxu0
  %v2371 = vadd.f32 %v2358, %v2370
  %v2372 = vpop.f32.mrf.mxu0
  %2373 = vdwg.mxu0
  %2374 = vmatpush.bf16.msra.mxu0 %v1125
  %2375 = vmatpush.bf16.msra.mxu0 %v1117
  %2376 = vmatpush.bf16.msra.mxu0 %v1109
  %2377 = vmatpush.bf16.msra.mxu0 %v1101
  %2378 = vmatpush.bf16.msra.mxu0 %v1093
  %2379 = vmatpush.bf16.msra.mxu0 %v1085
  %2380 = vmatpush.bf16.msra.mxu0 %v1077
  %2381 = vmatpush.bf16.msra.mxu0 %v1069
  %2382 = vmatmul.bf16.gmra.mxu0 %v2110
  %v2383 = vpop.f32.mrf.mxu0
  %v2384 = vadd.f32 0.0, %v2383
  %v2385 = vpop.f32.mrf.mxu0
  %2386 = vdwg.mxu0
  %2387 = vmatpush.bf16.msra.mxu0 %v1189
  %2388 = vmatpush.bf16.msra.mxu0 %v1181
  %2389 = vmatpush.bf16.msra.mxu0 %v1173
  %2390 = vmatpush.bf16.msra.mxu0 %v1165
  %2391 = vmatpush.bf16.msra.mxu0 %v1157
  %2392 = vmatpush.bf16.msra.mxu0 %v1149
  %2393 = vmatpush.bf16.msra.mxu0 %v1141
  %2394 = vmatpush.bf16.msra.mxu0 %v1133
  %2395 = vmatmul.bf16.gmra.mxu0 %v2111
  %v2396 = vpop.f32.mrf.mxu0
  %v2397 = vadd.f32 %v2384, %v2396
  %v2398 = vpop.f32.mrf.mxu0
  %2399 = vdwg.mxu0
  %2400 = vmatpush.bf16.msra.mxu0 %v1253
  %2401 = vmatpush.bf16.msra.mxu0 %v1245
  %2402 = vmatpush.bf16.msra.mxu0 %v1237
  %2403 = vmatpush.bf16.msra.mxu0 %v1229
  %2404 = vmatpush.bf16.msra.mxu0 %v1221
  %2405 = vmatpush.bf16.msra.mxu0 %v1213
  %2406 = vmatpush.bf16.msra.mxu0 %v1205
  %2407 = vmatpush.bf16.msra.mxu0 %v1197
  %2408 = vmatmul.bf16.gmra.mxu0 %v2112
  %v2409 = vpop.f32.mrf.mxu0
  %v2410 = vadd.f32 %v2397, %v2409
  %v2411 = vpop.f32.mrf.mxu0
  %2412 = vdwg.mxu0
  %2413 = vmatpush.bf16.msra.mxu0 %v1317
  %2414 = vmatpush.bf16.msra.mxu0 %v1309
  %2415 = vmatpush.bf16.msra.mxu0 %v1301
  %2416 = vmatpush.bf16.msra.mxu0 %v1293
  %2417 = vmatpush.bf16.msra.mxu0 %v1285
  %2418 = vmatpush.bf16.msra.mxu0 %v1277
  %2419 = vmatpush.bf16.msra.mxu0 %v1269
  %2420 = vmatpush.bf16.msra.mxu0 %v1261
  %2421 = vmatmul.bf16.gmra.mxu0 %v2113
  %v2422 = vpop.f32.mrf.mxu0
  %v2423 = vadd.f32 %v2410, %v2422
  %v2424 = vpop.f32.mrf.mxu0
  %2425 = vdwg.mxu0
  %2426 = vmatpush.bf16.msra.mxu0 %v1126
  %2427 = vmatpush.bf16.msra.mxu0 %v1118
  %2428 = vmatpush.bf16.msra.mxu0 %v1110
  %2429 = vmatpush.bf16.msra.mxu0 %v1102
  %2430 = vmatpush.bf16.msra.mxu0 %v1094
  %2431 = vmatpush.bf16.msra.mxu0 %v1086
  %2432 = vmatpush.bf16.msra.mxu0 %v1078
  %2433 = vmatpush.bf16.msra.mxu0 %v1070
  %2434 = vmatmul.bf16.gmra.mxu0 %v2110
  %v2435 = vpop.f32.mrf.mxu0
  %v2436 = vadd.f32 0.0, %v2435
  %v2437 = vpop.f32.mrf.mxu0
  %2438 = vdwg.mxu0
  %2439 = vmatpush.bf16.msra.mxu0 %v1190
  %2440 = vmatpush.bf16.msra.mxu0 %v1182
  %2441 = vmatpush.bf16.msra.mxu0 %v1174
  %2442 = vmatpush.bf16.msra.mxu0 %v1166
  %2443 = vmatpush.bf16.msra.mxu0 %v1158
  %2444 = vmatpush.bf16.msra.mxu0 %v1150
  %2445 = vmatpush.bf16.msra.mxu0 %v1142
  %2446 = vmatpush.bf16.msra.mxu0 %v1134
  %2447 = vmatmul.bf16.gmra.mxu0 %v2111
  %v2448 = vpop.f32.mrf.mxu0
  %v2449 = vadd.f32 %v2436, %v2448
  %v2450 = vpop.f32.mrf.mxu0
  %2451 = vdwg.mxu0
  %2452 = vmatpush.bf16.msra.mxu0 %v1254
  %2453 = vmatpush.bf16.msra.mxu0 %v1246
  %2454 = vmatpush.bf16.msra.mxu0 %v1238
  %2455 = vmatpush.bf16.msra.mxu0 %v1230
  %2456 = vmatpush.bf16.msra.mxu0 %v1222
  %2457 = vmatpush.bf16.msra.mxu0 %v1214
  %2458 = vmatpush.bf16.msra.mxu0 %v1206
  %2459 = vmatpush.bf16.msra.mxu0 %v1198
  %2460 = vmatmul.bf16.gmra.mxu0 %v2112
  %v2461 = vpop.f32.mrf.mxu0
  %v2462 = vadd.f32 %v2449, %v2461
  %v2463 = vpop.f32.mrf.mxu0
  %2464 = vdwg.mxu0
  %2465 = vmatpush.bf16.msra.mxu0 %v1318
  %2466 = vmatpush.bf16.msra.mxu0 %v1310
  %2467 = vmatpush.bf16.msra.mxu0 %v1302
  %2468 = vmatpush.bf16.msra.mxu0 %v1294
  %2469 = vmatpush.bf16.msra.mxu0 %v1286
  %2470 = vmatpush.bf16.msra.mxu0 %v1278
  %2471 = vmatpush.bf16.msra.mxu0 %v1270
  %2472 = vmatpush.bf16.msra.mxu0 %v1262
  %2473 = vmatmul.bf16.gmra.mxu0 %v2113
  %v2474 = vpop.f32.mrf.mxu0
  %v2475 = vadd.f32 %v2462, %v2474
  %v2476 = vpop.f32.mrf.mxu0
  %2477 = vdwg.mxu0
  %2478 = vmatpush.bf16.msra.mxu0 %v1127
  %2479 = vmatpush.bf16.msra.mxu0 %v1119
  %2480 = vmatpush.bf16.msra.mxu0 %v1111
  %2481 = vmatpush.bf16.msra.mxu0 %v1103
  %2482 = vmatpush.bf16.msra.mxu0 %v1095
  %2483 = vmatpush.bf16.msra.mxu0 %v1087
  %2484 = vmatpush.bf16.msra.mxu0 %v1079
  %2485 = vmatpush.bf16.msra.mxu0 %v1071
  %2486 = vmatmul.bf16.gmra.mxu0 %v2110
  %v2487 = vpop.f32.mrf.mxu0
  %v2488 = vadd.f32 0.0, %v2487
  %v2489 = vpop.f32.mrf.mxu0
  %2490 = vdwg.mxu0
  %2491 = vmatpush.bf16.msra.mxu0 %v1191
  %2492 = vmatpush.bf16.msra.mxu0 %v1183
  %2493 = vmatpush.bf16.msra.mxu0 %v1175
  %2494 = vmatpush.bf16.msra.mxu0 %v1167
  %2495 = vmatpush.bf16.msra.mxu0 %v1159
  %2496 = vmatpush.bf16.msra.mxu0 %v1151
  %2497 = vmatpush.bf16.msra.mxu0 %v1143
  %2498 = vmatpush.bf16.msra.mxu0 %v1135
  %2499 = vmatmul.bf16.gmra.mxu0 %v2111
  %v2500 = vpop.f32.mrf.mxu0
  %v2501 = vadd.f32 %v2488, %v2500
  %v2502 = vpop.f32.mrf.mxu0
  %2503 = vdwg.mxu0
  %2504 = vmatpush.bf16.msra.mxu0 %v1255
  %2505 = vmatpush.bf16.msra.mxu0 %v1247
  %2506 = vmatpush.bf16.msra.mxu0 %v1239
  %2507 = vmatpush.bf16.msra.mxu0 %v1231
  %2508 = vmatpush.bf16.msra.mxu0 %v1223
  %2509 = vmatpush.bf16.msra.mxu0 %v1215
  %2510 = vmatpush.bf16.msra.mxu0 %v1207
  %2511 = vmatpush.bf16.msra.mxu0 %v1199
  %2512 = vmatmul.bf16.gmra.mxu0 %v2112
  %v2513 = vpop.f32.mrf.mxu0
  %v2514 = vadd.f32 %v2501, %v2513
  %v2515 = vpop.f32.mrf.mxu0
  %2516 = vdwg.mxu0
  %2517 = vmatpush.bf16.msra.mxu0 %v1319
  %2518 = vmatpush.bf16.msra.mxu0 %v1311
  %2519 = vmatpush.bf16.msra.mxu0 %v1303
  %2520 = vmatpush.bf16.msra.mxu0 %v1295
  %2521 = vmatpush.bf16.msra.mxu0 %v1287
  %2522 = vmatpush.bf16.msra.mxu0 %v1279
  %2523 = vmatpush.bf16.msra.mxu0 %v1271
  %2524 = vmatpush.bf16.msra.mxu0 %v1263
  %2525 = vmatmul.bf16.gmra.mxu0 %v2113
  %v2526 = vpop.f32.mrf.mxu0
  %v2527 = vadd.f32 %v2514, %v2526
  %v2528 = vpop.f32.mrf.mxu0
  %2529 = vdwg.mxu0
  %s2530 = scalar_lea.vmem %s0, 32
  %v2531 = vld [vmem:[%s2530] sm:$0xff]
  %v2532 = vld [vmem:[%s2530 + $0x8] sm:$0xff]
  %v2533 = vld [vmem:[%s2530 + $0x10] sm:$0xff]
  %v2534 = vld [vmem:[%s2530 + $0x18] sm:$0xff]
  %v2543 = vrot.slane %v2215, 4
  %v2544 = vrot.slane %v2319, 4
  %v2545 = vrot.slane %v2423, 4
  %v2546 = vrot.slane %v2527, 4
  %v2547 = vsel %vm2008, %v2163, %v2543
  %v2548 = vsel %vm2008, %v2267, %v2544
  %v2549 = vsel %vm2008, %v2371, %v2545
  %v2550 = vsel %vm2008, %v2475, %v2546
  %v2555 = vadd.f32 %v2531, %v2547
  %v2556 = vadd.f32 %v2532, %v2548
  %v2557 = vadd.f32 %v2533, %v2549
  %v2558 = vadd.f32 %v2534, %v2550
  %v2559 = vxor.u32 %v2555, 2147483648
  %v2560 = vmul.f32 %v2559, 1.442695
  %v2561 = vpow.pop %v2560
  %v2562 = vadd.f32 %v2561, 1.0
  %v2563 = vrcp.pop %v2562
  %v2564 = vmul.f32 %v2562, %v2563
  %v2565 = vsub.f32 1.0, %v2564
  %v2566 = vmul.f32 %v2563, %v2565
  %v2567 = vadd.f32 %v2563, %v2566
  %vm2568 = vweird.f32 %v2562
  %vm2569 = vweird.f32 %v2563
  %vm2570 = vmor %vm2568, %vm2569
  %v2571 = vsel %vm2570, %v2563, %v2567
  %v2572 = vand.u32 2147483647, %v2562
  %vm2573 = vcmp.eq.f32.partialorder %v2572, 8.507059e+37
  %v2574 = vand.u32 %v2562, 2147483648
  %v2575 = vor.u32 1.1754944e-38, %v2574
  %v2576 = vsel %vm2573, %v2575, %v2571
  %v2577 = vmul.f32 1.0, %v2576
  %v2578 = vxor.u32 %v2556, 2147483648
  %v2579 = vmul.f32 %v2578, 1.442695
  %v2580 = vpow.pop %v2579
  %v2581 = vadd.f32 %v2580, 1.0
  %v2582 = vrcp.pop %v2581
  %v2583 = vmul.f32 %v2581, %v2582
  %v2584 = vsub.f32 1.0, %v2583
  %v2585 = vmul.f32 %v2582, %v2584
  %v2586 = vadd.f32 %v2582, %v2585
  %vm2587 = vweird.f32 %v2581
  %vm2588 = vweird.f32 %v2582
  %vm2589 = vmor %vm2587, %vm2588
  %v2590 = vsel %vm2589, %v2582, %v2586
  %v2591 = vand.u32 2147483647, %v2581
  %vm2592 = vcmp.eq.f32.partialorder %v2591, 8.507059e+37
  %v2593 = vand.u32 %v2581, 2147483648
  %v2594 = vor.u32 1.1754944e-38, %v2593
  %v2595 = vsel %vm2592, %v2594, %v2590
  %v2596 = vmul.f32 1.0, %v2595
  %v2597 = vtanh.pop %v2557
  %v2598 = vxor.u32 %v2558, 2147483648
  %v2599 = vmul.f32 %v2598, 1.442695
  %v2600 = vpow.pop %v2599
  %v2601 = vadd.f32 %v2600, 1.0
  %v2602 = vrcp.pop %v2601
  %v2603 = vmul.f32 %v2601, %v2602
  %v2604 = vsub.f32 1.0, %v2603
  %v2605 = vmul.f32 %v2602, %v2604
  %v2606 = vadd.f32 %v2602, %v2605
  %vm2607 = vweird.f32 %v2601
  %vm2608 = vweird.f32 %v2602
  %vm2609 = vmor %vm2607, %vm2608
  %v2610 = vsel %vm2609, %v2602, %v2606
  %v2611 = vand.u32 2147483647, %v2601
  %vm2612 = vcmp.eq.f32.partialorder %v2611, 8.507059e+37
  %v2613 = vand.u32 %v2601, 2147483648
  %v2614 = vor.u32 1.1754944e-38, %v2613
  %v2615 = vsel %vm2612, %v2614, %v2610
  %v2616 = vmul.f32 1.0, %v2615
  %v2617 = vmul.f32 %v2596, %v2081
  %v2618 = vmul.f32 %v2577, %v2597
  %v2619 = vadd.f32 %v2617, %v2618
  %v2620 = vtanh.pop %v2619
  %v2621 = vmul.f32 %v2616, %v2620
  %v2623 = vrot.slane %v2621, 2
  %v2624 = vsel %vm2086, %v2621, %v2623
  %s2626 = scalar_lea.vmem %s2, 8
  %2627 = vst [vmem:[%s2626] sm:$0xf] %v2624
  %2628 = vst.sshfl [vmem:[#allocation1] sm:$0xff pattern:$0x75643120] %v2621
  %s2629 = scalar_lea.vmem [#allocation1], 1
  %v2630 = vld [vmem:[%s2629] ss:$2 sm:$0xff]
  %s2632 = scalar_lea.vmem %s2, 48
  %2633 = vst [vmem:[%s2632 + $0x4] sm:$0xf] %v2630
  %2634 = vst [vmem:[#allocation1] ss:$2 sm:$0xff] %v2621
  %v2635 = vld.sshfl [vmem:[#allocation1] sm:$0xff pattern:$0x75316420]
  %v2636 = vld.sshfl [vmem:[#allocation1 + $0x8] sm:$0xff pattern:$0x75316420]
  %2639 = vst [vmem:[#allocation1] ss:$2 sm:$0xff] %v2621
  %v2640 = vld.sshfl [vmem:[#allocation1] sm:$0xff pattern:$0x75316420]
  %v2641 = vld.sshfl [vmem:[#allocation1 + $0x8] sm:$0xff pattern:$0x75316420]
  %v2644 = vmul.f32 %v2635, %v292
  %v2645 = vmul.f32 %v2636, %v293
  %v2646 = vmul.f32 %v2640, %v294
  %v2647 = vmul.f32 %v2641, %v295
  %v2648 = vpack.c.bf16 %v2644, %v2644
  %v2649 = vpack.c.bf16 %v2645, %v2645
  %v2650 = vpack.c.bf16 %v2646, %v2646
  %v2651 = vpack.c.bf16 %v2647, %v2647
  %2652 = vmatpush.bf16.msra.mxu0 %v1120
  %2653 = vmatpush.bf16.msra.mxu0 %v1112
  %2654 = vmatpush.bf16.msra.mxu0 %v1104
  %2655 = vmatpush.bf16.msra.mxu0 %v1096
  %2656 = vmatpush.bf16.msra.mxu0 %v1088
  %2657 = vmatpush.bf16.msra.mxu0 %v1080
  %2658 = vmatpush.bf16.msra.mxu0 %v1072
  %2659 = vmatpush.bf16.msra.mxu0 %v1064
  %2660 = vmatmul.bf16.gmra.mxu0 %v2648
  %v2661 = vpop.f32.mrf.mxu0
  %v2662 = vadd.f32 0.0, %v2661
  %v2663 = vpop.f32.mrf.mxu0
  %2664 = vdwg.mxu0
  %2665 = vmatpush.bf16.msra.mxu0 %v1184
  %2666 = vmatpush.bf16.msra.mxu0 %v1176
  %2667 = vmatpush.bf16.msra.mxu0 %v1168
  %2668 = vmatpush.bf16.msra.mxu0 %v1160
  %2669 = vmatpush.bf16.msra.mxu0 %v1152
  %2670 = vmatpush.bf16.msra.mxu0 %v1144
  %2671 = vmatpush.bf16.msra.mxu0 %v1136
  %2672 = vmatpush.bf16.msra.mxu0 %v1128
  %2673 = vmatmul.bf16.gmra.mxu0 %v2649
  %v2674 = vpop.f32.mrf.mxu0
  %v2675 = vadd.f32 %v2662, %v2674
  %v2676 = vpop.f32.mrf.mxu0
  %2677 = vdwg.mxu0
  %2678 = vmatpush.bf16.msra.mxu0 %v1248
  %2679 = vmatpush.bf16.msra.mxu0 %v1240
  %2680 = vmatpush.bf16.msra.mxu0 %v1232
  %2681 = vmatpush.bf16.msra.mxu0 %v1224
  %2682 = vmatpush.bf16.msra.mxu0 %v1216
  %2683 = vmatpush.bf16.msra.mxu0 %v1208
  %2684 = vmatpush.bf16.msra.mxu0 %v1200
  %2685 = vmatpush.bf16.msra.mxu0 %v1192
  %2686 = vmatmul.bf16.gmra.mxu0 %v2650
  %v2687 = vpop.f32.mrf.mxu0
  %v2688 = vadd.f32 %v2675, %v2687
  %v2689 = vpop.f32.mrf.mxu0
  %2690 = vdwg.mxu0
  %2691 = vmatpush.bf16.msra.mxu0 %v1312
  %2692 = vmatpush.bf16.msra.mxu0 %v1304
  %2693 = vmatpush.bf16.msra.mxu0 %v1296
  %2694 = vmatpush.bf16.msra.mxu0 %v1288
  %2695 = vmatpush.bf16.msra.mxu0 %v1280
  %2696 = vmatpush.bf16.msra.mxu0 %v1272
  %2697 = vmatpush.bf16.msra.mxu0 %v1264
  %2698 = vmatpush.bf16.msra.mxu0 %v1256
  %2699 = vmatmul.bf16.gmra.mxu0 %v2651
  %v2700 = vpop.f32.mrf.mxu0
  %v2701 = vadd.f32 %v2688, %v2700
  %v2702 = vpop.f32.mrf.mxu0
  %2703 = vdwg.mxu0
  %2704 = vmatpush.bf16.msra.mxu0 %v1121
  %2705 = vmatpush.bf16.msra.mxu0 %v1113
  %2706 = vmatpush.bf16.msra.mxu0 %v1105
  %2707 = vmatpush.bf16.msra.mxu0 %v1097
  %2708 = vmatpush.bf16.msra.mxu0 %v1089
  %2709 = vmatpush.bf16.msra.mxu0 %v1081
  %2710 = vmatpush.bf16.msra.mxu0 %v1073
  %2711 = vmatpush.bf16.msra.mxu0 %v1065
  %2712 = vmatmul.bf16.gmra.mxu0 %v2648
  %v2713 = vpop.f32.mrf.mxu0
  %v2714 = vadd.f32 0.0, %v2713
  %v2715 = vpop.f32.mrf.mxu0
  %2716 = vdwg.mxu0
  %2717 = vmatpush.bf16.msra.mxu0 %v1185
  %2718 = vmatpush.bf16.msra.mxu0 %v1177
  %2719 = vmatpush.bf16.msra.mxu0 %v1169
  %2720 = vmatpush.bf16.msra.mxu0 %v1161
  %2721 = vmatpush.bf16.msra.mxu0 %v1153
  %2722 = vmatpush.bf16.msra.mxu0 %v1145
  %2723 = vmatpush.bf16.msra.mxu0 %v1137
  %2724 = vmatpush.bf16.msra.mxu0 %v1129
  %2725 = vmatmul.bf16.gmra.mxu0 %v2649
  %v2726 = vpop.f32.mrf.mxu0
  %v2727 = vadd.f32 %v2714, %v2726
  %v2728 = vpop.f32.mrf.mxu0
  %2729 = vdwg.mxu0
  %2730 = vmatpush.bf16.msra.mxu0 %v1249
  %2731 = vmatpush.bf16.msra.mxu0 %v1241
  %2732 = vmatpush.bf16.msra.mxu0 %v1233
  %2733 = vmatpush.bf16.msra.mxu0 %v1225
  %2734 = vmatpush.bf16.msra.mxu0 %v1217
  %2735 = vmatpush.bf16.msra.mxu0 %v1209
  %2736 = vmatpush.bf16.msra.mxu0 %v1201
  %2737 = vmatpush.bf16.msra.mxu0 %v1193
  %2738 = vmatmul.bf16.gmra.mxu0 %v2650
  %v2739 = vpop.f32.mrf.mxu0
  %v2740 = vadd.f32 %v2727, %v2739
  %v2741 = vpop.f32.mrf.mxu0
  %2742 = vdwg.mxu0
  %2743 = vmatpush.bf16.msra.mxu0 %v1313
  %2744 = vmatpush.bf16.msra.mxu0 %v1305
  %2745 = vmatpush.bf16.msra.mxu0 %v1297
  %2746 = vmatpush.bf16.msra.mxu0 %v1289
  %2747 = vmatpush.bf16.msra.mxu0 %v1281
  %2748 = vmatpush.bf16.msra.mxu0 %v1273
  %2749 = vmatpush.bf16.msra.mxu0 %v1265
  %2750 = vmatpush.bf16.msra.mxu0 %v1257
  %2751 = vmatmul.bf16.gmra.mxu0 %v2651
  %v2752 = vpop.f32.mrf.mxu0
  %v2753 = vadd.f32 %v2740, %v2752
  %v2754 = vpop.f32.mrf.mxu0
  %2755 = vdwg.mxu0
  %2756 = vmatpush.bf16.msra.mxu0 %v1122
  %2757 = vmatpush.bf16.msra.mxu0 %v1114
  %2758 = vmatpush.bf16.msra.mxu0 %v1106
  %2759 = vmatpush.bf16.msra.mxu0 %v1098
  %2760 = vmatpush.bf16.msra.mxu0 %v1090
  %2761 = vmatpush.bf16.msra.mxu0 %v1082
  %2762 = vmatpush.bf16.msra.mxu0 %v1074
  %2763 = vmatpush.bf16.msra.mxu0 %v1066
  %2764 = vmatmul.bf16.gmra.mxu0 %v2648
  %v2765 = vpop.f32.mrf.mxu0
  %v2766 = vadd.f32 0.0, %v2765
  %v2767 = vpop.f32.mrf.mxu0
  %2768 = vdwg.mxu0
  %2769 = vmatpush.bf16.msra.mxu0 %v1186
  %2770 = vmatpush.bf16.msra.mxu0 %v1178
  %2771 = vmatpush.bf16.msra.mxu0 %v1170
  %2772 = vmatpush.bf16.msra.mxu0 %v1162
  %2773 = vmatpush.bf16.msra.mxu0 %v1154
  %2774 = vmatpush.bf16.msra.mxu0 %v1146
  %2775 = vmatpush.bf16.msra.mxu0 %v1138
  %2776 = vmatpush.bf16.msra.mxu0 %v1130
  %2777 = vmatmul.bf16.gmra.mxu0 %v2649
  %v2778 = vpop.f32.mrf.mxu0
  %v2779 = vadd.f32 %v2766, %v2778
  %v2780 = vpop.f32.mrf.mxu0
  %2781 = vdwg.mxu0
  %2782 = vmatpush.bf16.msra.mxu0 %v1250
  %2783 = vmatpush.bf16.msra.mxu0 %v1242
  %2784 = vmatpush.bf16.msra.mxu0 %v1234
  %2785 = vmatpush.bf16.msra.mxu0 %v1226
  %2786 = vmatpush.bf16.msra.mxu0 %v1218
  %2787 = vmatpush.bf16.msra.mxu0 %v1210
  %2788 = vmatpush.bf16.msra.mxu0 %v1202
  %2789 = vmatpush.bf16.msra.mxu0 %v1194
  %2790 = vmatmul.bf16.gmra.mxu0 %v2650
  %v2791 = vpop.f32.mrf.mxu0
  %v2792 = vadd.f32 %v2779, %v2791
  %v2793 = vpop.f32.mrf.mxu0
  %2794 = vdwg.mxu0
  %2795 = vmatpush.bf16.msra.mxu0 %v1314
  %2796 = vmatpush.bf16.msra.mxu0 %v1306
  %2797 = vmatpush.bf16.msra.mxu0 %v1298
  %2798 = vmatpush.bf16.msra.mxu0 %v1290
  %2799 = vmatpush.bf16.msra.mxu0 %v1282
  %2800 = vmatpush.bf16.msra.mxu0 %v1274
  %2801 = vmatpush.bf16.msra.mxu0 %v1266
  %2802 = vmatpush.bf16.msra.mxu0 %v1258
  %2803 = vmatmul.bf16.gmra.mxu0 %v2651
  %v2804 = vpop.f32.mrf.mxu0
  %v2805 = vadd.f32 %v2792, %v2804
  %v2806 = vpop.f32.mrf.mxu0
  %2807 = vdwg.mxu0
  %2808 = vmatpush.bf16.msra.mxu0 %v1123
  %2809 = vmatpush.bf16.msra.mxu0 %v1115
  %2810 = vmatpush.bf16.msra.mxu0 %v1107
  %2811 = vmatpush.bf16.msra.mxu0 %v1099
  %2812 = vmatpush.bf16.msra.mxu0 %v1091
  %2813 = vmatpush.bf16.msra.mxu0 %v1083
  %2814 = vmatpush.bf16.msra.mxu0 %v1075
  %2815 = vmatpush.bf16.msra.mxu0 %v1067
  %2816 = vmatmul.bf16.gmra.mxu0 %v2648
  %v2817 = vpop.f32.mrf.mxu0
  %v2818 = vadd.f32 0.0, %v2817
  %v2819 = vpop.f32.mrf.mxu0
  %2820 = vdwg.mxu0
  %2821 = vmatpush.bf16.msra.mxu0 %v1187
  %2822 = vmatpush.bf16.msra.mxu0 %v1179
  %2823 = vmatpush.bf16.msra.mxu0 %v1171
  %2824 = vmatpush.bf16.msra.mxu0 %v1163
  %2825 = vmatpush.bf16.msra.mxu0 %v1155
  %2826 = vmatpush.bf16.msra.mxu0 %v1147
  %2827 = vmatpush.bf16.msra.mxu0 %v1139
  %2828 = vmatpush.bf16.msra.mxu0 %v1131
  %2829 = vmatmul.bf16.gmra.mxu0 %v2649
  %v2830 = vpop.f32.mrf.mxu0
  %v2831 = vadd.f32 %v2818, %v2830
  %v2832 = vpop.f32.mrf.mxu0
  %2833 = vdwg.mxu0
  %2834 = vmatpush.bf16.msra.mxu0 %v1251
  %2835 = vmatpush.bf16.msra.mxu0 %v1243
  %2836 = vmatpush.bf16.msra.mxu0 %v1235
  %2837 = vmatpush.bf16.msra.mxu0 %v1227
  %2838 = vmatpush.bf16.msra.mxu0 %v1219
  %2839 = vmatpush.bf16.msra.mxu0 %v1211
  %2840 = vmatpush.bf16.msra.mxu0 %v1203
  %2841 = vmatpush.bf16.msra.mxu0 %v1195
  %2842 = vmatmul.bf16.gmra.mxu0 %v2650
  %v2843 = vpop.f32.mrf.mxu0
  %v2844 = vadd.f32 %v2831, %v2843
  %v2845 = vpop.f32.mrf.mxu0
  %2846 = vdwg.mxu0
  %2847 = vmatpush.bf16.msra.mxu0 %v1315
  %2848 = vmatpush.bf16.msra.mxu0 %v1307
  %2849 = vmatpush.bf16.msra.mxu0 %v1299
  %2850 = vmatpush.bf16.msra.mxu0 %v1291
  %2851 = vmatpush.bf16.msra.mxu0 %v1283
  %2852 = vmatpush.bf16.msra.mxu0 %v1275
  %2853 = vmatpush.bf16.msra.mxu0 %v1267
  %2854 = vmatpush.bf16.msra.mxu0 %v1259
  %2855 = vmatmul.bf16.gmra.mxu0 %v2651
  %v2856 = vpop.f32.mrf.mxu0
  %v2857 = vadd.f32 %v2844, %v2856
  %v2858 = vpop.f32.mrf.mxu0
  %2859 = vdwg.mxu0
  %2860 = vmatpush.bf16.msra.mxu0 %v1124
  %2861 = vmatpush.bf16.msra.mxu0 %v1116
  %2862 = vmatpush.bf16.msra.mxu0 %v1108
  %2863 = vmatpush.bf16.msra.mxu0 %v1100
  %2864 = vmatpush.bf16.msra.mxu0 %v1092
  %2865 = vmatpush.bf16.msra.mxu0 %v1084
  %2866 = vmatpush.bf16.msra.mxu0 %v1076
  %2867 = vmatpush.bf16.msra.mxu0 %v1068
  %2868 = vmatmul.bf16.gmra.mxu0 %v2648
  %v2869 = vpop.f32.mrf.mxu0
  %v2870 = vadd.f32 0.0, %v2869
  %v2871 = vpop.f32.mrf.mxu0
  %2872 = vdwg.mxu0
  %2873 = vmatpush.bf16.msra.mxu0 %v1188
  %2874 = vmatpush.bf16.msra.mxu0 %v1180
  %2875 = vmatpush.bf16.msra.mxu0 %v1172
  %2876 = vmatpush.bf16.msra.mxu0 %v1164
  %2877 = vmatpush.bf16.msra.mxu0 %v1156
  %2878 = vmatpush.bf16.msra.mxu0 %v1148
  %2879 = vmatpush.bf16.msra.mxu0 %v1140
  %2880 = vmatpush.bf16.msra.mxu0 %v1132
  %2881 = vmatmul.bf16.gmra.mxu0 %v2649
  %v2882 = vpop.f32.mrf.mxu0
  %v2883 = vadd.f32 %v2870, %v2882
  %v2884 = vpop.f32.mrf.mxu0
  %2885 = vdwg.mxu0
  %2886 = vmatpush.bf16.msra.mxu0 %v1252
  %2887 = vmatpush.bf16.msra.mxu0 %v1244
  %2888 = vmatpush.bf16.msra.mxu0 %v1236
  %2889 = vmatpush.bf16.msra.mxu0 %v1228
  %2890 = vmatpush.bf16.msra.mxu0 %v1220
  %2891 = vmatpush.bf16.msra.mxu0 %v1212
  %2892 = vmatpush.bf16.msra.mxu0 %v1204
  %2893 = vmatpush.bf16.msra.mxu0 %v1196
  %2894 = vmatmul.bf16.gmra.mxu0 %v2650
  %v2895 = vpop.f32.mrf.mxu0
  %v2896 = vadd.f32 %v2883, %v2895
  %v2897 = vpop.f32.mrf.mxu0
  %2898 = vdwg.mxu0
  %2899 = vmatpush.bf16.msra.mxu0 %v1316
  %2900 = vmatpush.bf16.msra.mxu0 %v1308
  %2901 = vmatpush.bf16.msra.mxu0 %v1300
  %2902 = vmatpush.bf16.msra.mxu0 %v1292
  %2903 = vmatpush.bf16.msra.mxu0 %v1284
  %2904 = vmatpush.bf16.msra.mxu0 %v1276
  %2905 = vmatpush.bf16.msra.mxu0 %v1268
  %2906 = vmatpush.bf16.msra.mxu0 %v1260
  %2907 = vmatmul.bf16.gmra.mxu0 %v2651
  %v2908 = vpop.f32.mrf.mxu0
  %v2909 = vadd.f32 %v2896, %v2908
  %v2910 = vpop.f32.mrf.mxu0
  %2911 = vdwg.mxu0
  %2912 = vmatpush.bf16.msra.mxu0 %v1125
  %2913 = vmatpush.bf16.msra.mxu0 %v1117
  %2914 = vmatpush.bf16.msra.mxu0 %v1109
  %2915 = vmatpush.bf16.msra.mxu0 %v1101
  %2916 = vmatpush.bf16.msra.mxu0 %v1093
  %2917 = vmatpush.bf16.msra.mxu0 %v1085
  %2918 = vmatpush.bf16.msra.mxu0 %v1077
  %2919 = vmatpush.bf16.msra.mxu0 %v1069
  %2920 = vmatmul.bf16.gmra.mxu0 %v2648
  %v2921 = vpop.f32.mrf.mxu0
  %v2922 = vadd.f32 0.0, %v2921
  %v2923 = vpop.f32.mrf.mxu0
  %2924 = vdwg.mxu0
  %2925 = vmatpush.bf16.msra.mxu0 %v1189
  %2926 = vmatpush.bf16.msra.mxu0 %v1181
  %2927 = vmatpush.bf16.msra.mxu0 %v1173
  %2928 = vmatpush.bf16.msra.mxu0 %v1165
  %2929 = vmatpush.bf16.msra.mxu0 %v1157
  %2930 = vmatpush.bf16.msra.mxu0 %v1149
  %2931 = vmatpush.bf16.msra.mxu0 %v1141
  %2932 = vmatpush.bf16.msra.mxu0 %v1133
  %2933 = vmatmul.bf16.gmra.mxu0 %v2649
  %v2934 = vpop.f32.mrf.mxu0
  %v2935 = vadd.f32 %v2922, %v2934
  %v2936 = vpop.f32.mrf.mxu0
  %2937 = vdwg.mxu0
  %2938 = vmatpush.bf16.msra.mxu0 %v1253
  %2939 = vmatpush.bf16.msra.mxu0 %v1245
  %2940 = vmatpush.bf16.msra.mxu0 %v1237
  %2941 = vmatpush.bf16.msra.mxu0 %v1229
  %2942 = vmatpush.bf16.msra.mxu0 %v1221
  %2943 = vmatpush.bf16.msra.mxu0 %v1213
  %2944 = vmatpush.bf16.msra.mxu0 %v1205
  %2945 = vmatpush.bf16.msra.mxu0 %v1197
  %2946 = vmatmul.bf16.gmra.mxu0 %v2650
  %v2947 = vpop.f32.mrf.mxu0
  %v2948 = vadd.f32 %v2935, %v2947
  %v2949 = vpop.f32.mrf.mxu0
  %2950 = vdwg.mxu0
  %2951 = vmatpush.bf16.msra.mxu0 %v1317
  %2952 = vmatpush.bf16.msra.mxu0 %v1309
  %2953 = vmatpush.bf16.msra.mxu0 %v1301
  %2954 = vmatpush.bf16.msra.mxu0 %v1293
  %2955 = vmatpush.bf16.msra.mxu0 %v1285
  %2956 = vmatpush.bf16.msra.mxu0 %v1277
  %2957 = vmatpush.bf16.msra.mxu0 %v1269
  %2958 = vmatpush.bf16.msra.mxu0 %v1261
  %2959 = vmatmul.bf16.gmra.mxu0 %v2651
  %v2960 = vpop.f32.mrf.mxu0
  %v2961 = vadd.f32 %v2948, %v2960
  %v2962 = vpop.f32.mrf.mxu0
  %2963 = vdwg.mxu0
  %2964 = vmatpush.bf16.msra.mxu0 %v1126
  %2965 = vmatpush.bf16.msra.mxu0 %v1118
  %2966 = vmatpush.bf16.msra.mxu0 %v1110
  %2967 = vmatpush.bf16.msra.mxu0 %v1102
  %2968 = vmatpush.bf16.msra.mxu0 %v1094
  %2969 = vmatpush.bf16.msra.mxu0 %v1086
  %2970 = vmatpush.bf16.msra.mxu0 %v1078
  %2971 = vmatpush.bf16.msra.mxu0 %v1070
  %2972 = vmatmul.bf16.gmra.mxu0 %v2648
  %v2973 = vpop.f32.mrf.mxu0
  %v2974 = vadd.f32 0.0, %v2973
  %v2975 = vpop.f32.mrf.mxu0
  %2976 = vdwg.mxu0
  %2977 = vmatpush.bf16.msra.mxu0 %v1190
  %2978 = vmatpush.bf16.msra.mxu0 %v1182
  %2979 = vmatpush.bf16.msra.mxu0 %v1174
  %2980 = vmatpush.bf16.msra.mxu0 %v1166
  %2981 = vmatpush.bf16.msra.mxu0 %v1158
  %2982 = vmatpush.bf16.msra.mxu0 %v1150
  %2983 = vmatpush.bf16.msra.mxu0 %v1142
  %2984 = vmatpush.bf16.msra.mxu0 %v1134
  %2985 = vmatmul.bf16.gmra.mxu0 %v2649
  %v2986 = vpop.f32.mrf.mxu0
  %v2987 = vadd.f32 %v2974, %v2986
  %v2988 = vpop.f32.mrf.mxu0
  %2989 = vdwg.mxu0
  %2990 = vmatpush.bf16.msra.mxu0 %v1254
  %2991 = vmatpush.bf16.msra.mxu0 %v1246
  %2992 = vmatpush.bf16.msra.mxu0 %v1238
  %2993 = vmatpush.bf16.msra.mxu0 %v1230
  %2994 = vmatpush.bf16.msra.mxu0 %v1222
  %2995 = vmatpush.bf16.msra.mxu0 %v1214
  %2996 = vmatpush.bf16.msra.mxu0 %v1206
  %2997 = vmatpush.bf16.msra.mxu0 %v1198
  %2998 = vmatmul.bf16.gmra.mxu0 %v2650
  %v2999 = vpop.f32.mrf.mxu0
  %v3000 = vadd.f32 %v2987, %v2999
  %v3001 = vpop.f32.mrf.mxu0
  %3002 = vdwg.mxu0
  %3003 = vmatpush.bf16.msra.mxu0 %v1318
  %3004 = vmatpush.bf16.msra.mxu0 %v1310
  %3005 = vmatpush.bf16.msra.mxu0 %v1302
  %3006 = vmatpush.bf16.msra.mxu0 %v1294
  %3007 = vmatpush.bf16.msra.mxu0 %v1286
  %3008 = vmatpush.bf16.msra.mxu0 %v1278
  %3009 = vmatpush.bf16.msra.mxu0 %v1270
  %3010 = vmatpush.bf16.msra.mxu0 %v1262
  %3011 = vmatmul.bf16.gmra.mxu0 %v2651
  %v3012 = vpop.f32.mrf.mxu0
  %v3013 = vadd.f32 %v3000, %v3012
  %v3014 = vpop.f32.mrf.mxu0
  %3015 = vdwg.mxu0
  %3016 = vmatpush.bf16.msra.mxu0 %v1127
  %3017 = vmatpush.bf16.msra.mxu0 %v1119
  %3018 = vmatpush.bf16.msra.mxu0 %v1111
  %3019 = vmatpush.bf16.msra.mxu0 %v1103
  %3020 = vmatpush.bf16.msra.mxu0 %v1095
  %3021 = vmatpush.bf16.msra.mxu0 %v1087
  %3022 = vmatpush.bf16.msra.mxu0 %v1079
  %3023 = vmatpush.bf16.msra.mxu0 %v1071
  %3024 = vmatmul.bf16.gmra.mxu0 %v2648
  %v3025 = vpop.f32.mrf.mxu0
  %v3026 = vadd.f32 0.0, %v3025
  %v3027 = vpop.f32.mrf.mxu0
  %3028 = vdwg.mxu0
  %3029 = vmatpush.bf16.msra.mxu0 %v1191
  %3030 = vmatpush.bf16.msra.mxu0 %v1183
  %3031 = vmatpush.bf16.msra.mxu0 %v1175
  %3032 = vmatpush.bf16.msra.mxu0 %v1167
  %3033 = vmatpush.bf16.msra.mxu0 %v1159
  %3034 = vmatpush.bf16.msra.mxu0 %v1151
  %3035 = vmatpush.bf16.msra.mxu0 %v1143
  %3036 = vmatpush.bf16.msra.mxu0 %v1135
  %3037 = vmatmul.bf16.gmra.mxu0 %v2649
  %v3038 = vpop.f32.mrf.mxu0
  %v3039 = vadd.f32 %v3026, %v3038
  %v3040 = vpop.f32.mrf.mxu0
  %3041 = vdwg.mxu0
  %3042 = vmatpush.bf16.msra.mxu0 %v1255
  %3043 = vmatpush.bf16.msra.mxu0 %v1247
  %3044 = vmatpush.bf16.msra.mxu0 %v1239
  %3045 = vmatpush.bf16.msra.mxu0 %v1231
  %3046 = vmatpush.bf16.msra.mxu0 %v1223
  %3047 = vmatpush.bf16.msra.mxu0 %v1215
  %3048 = vmatpush.bf16.msra.mxu0 %v1207
  %3049 = vmatpush.bf16.msra.mxu0 %v1199
  %3050 = vmatmul.bf16.gmra.mxu0 %v2650
  %v3051 = vpop.f32.mrf.mxu0
  %v3052 = vadd.f32 %v3039, %v3051
  %v3053 = vpop.f32.mrf.mxu0
  %3054 = vdwg.mxu0
  %3055 = vmatpush.bf16.msra.mxu0 %v1319
  %3056 = vmatpush.bf16.msra.mxu0 %v1311
  %3057 = vmatpush.bf16.msra.mxu0 %v1303
  %3058 = vmatpush.bf16.msra.mxu0 %v1295
  %3059 = vmatpush.bf16.msra.mxu0 %v1287
  %3060 = vmatpush.bf16.msra.mxu0 %v1279
  %3061 = vmatpush.bf16.msra.mxu0 %v1271
  %3062 = vmatpush.bf16.msra.mxu0 %v1263
  %3063 = vmatmul.bf16.gmra.mxu0 %v2651
  %v3064 = vpop.f32.mrf.mxu0
  %v3065 = vadd.f32 %v3052, %v3064
  %v3066 = vpop.f32.mrf.mxu0
  %3067 = vdwg.mxu0
  %s3068 = scalar_lea.vmem %s0, 64
  %v3069 = vld [vmem:[%s3068] sm:$0xff]
  %v3070 = vld [vmem:[%s3068 + $0x8] sm:$0xff]
  %v3071 = vld [vmem:[%s3068 + $0x10] sm:$0xff]
  %v3072 = vld [vmem:[%s3068 + $0x18] sm:$0xff]
  %v3081 = vrot.slane %v2753, 4
  %v3082 = vrot.slane %v2857, 4
  %v3083 = vrot.slane %v2961, 4
  %v3084 = vrot.slane %v3065, 4
  %v3085 = vsel %vm2008, %v2701, %v3081
  %v3086 = vsel %vm2008, %v2805, %v3082
  %v3087 = vsel %vm2008, %v2909, %v3083
  %v3088 = vsel %vm2008, %v3013, %v3084
  %v3093 = vadd.f32 %v3069, %v3085
  %v3094 = vadd.f32 %v3070, %v3086
  %v3095 = vadd.f32 %v3071, %v3087
  %v3096 = vadd.f32 %v3072, %v3088
  %v3097 = vxor.u32 %v3093, 2147483648
  %v3098 = vmul.f32 %v3097, 1.442695
  %v3099 = vpow.pop %v3098
  %v3100 = vadd.f32 %v3099, 1.0
  %v3101 = vrcp.pop %v3100
  %v3102 = vmul.f32 %v3100, %v3101
  %v3103 = vsub.f32 1.0, %v3102
  %v3104 = vmul.f32 %v3101, %v3103
  %v3105 = vadd.f32 %v3101, %v3104
  %vm3106 = vweird.f32 %v3100
  %vm3107 = vweird.f32 %v3101
  %vm3108 = vmor %vm3106, %vm3107
  %v3109 = vsel %vm3108, %v3101, %v3105
  %v3110 = vand.u32 2147483647, %v3100
  %vm3111 = vcmp.eq.f32.partialorder %v3110, 8.507059e+37
  %v3112 = vand.u32 %v3100, 2147483648
  %v3113 = vor.u32 1.1754944e-38, %v3112
  %v3114 = vsel %vm3111, %v3113, %v3109
  %v3115 = vmul.f32 1.0, %v3114
  %v3116 = vxor.u32 %v3094, 2147483648
  %v3117 = vmul.f32 %v3116, 1.442695
  %v3118 = vpow.pop %v3117
  %v3119 = vadd.f32 %v3118, 1.0
  %v3120 = vrcp.pop %v3119
  %v3121 = vmul.f32 %v3119, %v3120
  %v3122 = vsub.f32 1.0, %v3121
  %v3123 = vmul.f32 %v3120, %v3122
  %v3124 = vadd.f32 %v3120, %v3123
  %vm3125 = vweird.f32 %v3119
  %vm3126 = vweird.f32 %v3120
  %vm3127 = vmor %vm3125, %vm3126
  %v3128 = vsel %vm3127, %v3120, %v3124
  %v3129 = vand.u32 2147483647, %v3119
  %vm3130 = vcmp.eq.f32.partialorder %v3129, 8.507059e+37
  %v3131 = vand.u32 %v3119, 2147483648
  %v3132 = vor.u32 1.1754944e-38, %v3131
  %v3133 = vsel %vm3130, %v3132, %v3128
  %v3134 = vmul.f32 1.0, %v3133
  %v3135 = vtanh.pop %v3095
  %v3136 = vxor.u32 %v3096, 2147483648
  %v3137 = vmul.f32 %v3136, 1.442695
  %v3138 = vpow.pop %v3137
  %v3139 = vadd.f32 %v3138, 1.0
  %v3140 = vrcp.pop %v3139
  %v3141 = vmul.f32 %v3139, %v3140
  %v3142 = vsub.f32 1.0, %v3141
  %v3143 = vmul.f32 %v3140, %v3142
  %v3144 = vadd.f32 %v3140, %v3143
  %vm3145 = vweird.f32 %v3139
  %vm3146 = vweird.f32 %v3140
  %vm3147 = vmor %vm3145, %vm3146
  %v3148 = vsel %vm3147, %v3140, %v3144
  %v3149 = vand.u32 2147483647, %v3139
  %vm3150 = vcmp.eq.f32.partialorder %v3149, 8.507059e+37
  %v3151 = vand.u32 %v3139, 2147483648
  %v3152 = vor.u32 1.1754944e-38, %v3151
  %v3153 = vsel %vm3150, %v3152, %v3148
  %v3154 = vmul.f32 1.0, %v3153
  %v3155 = vmul.f32 %v3134, %v2619
  %v3156 = vmul.f32 %v3115, %v3135
  %v3157 = vadd.f32 %v3155, %v3156
  %v3158 = vtanh.pop %v3157
  %v3159 = vmul.f32 %v3154, %v3158
  %v3161 = vrot.slane %v3159, 2
  %v3162 = vsel %vm2086, %v3159, %v3161
  %s3164 = scalar_lea.vmem %s2, 16
  %3165 = vst [vmem:[%s3164] sm:$0xf] %v3162
  %3166 = vst.sshfl [vmem:[#allocation1] sm:$0xff pattern:$0x75643120] %v3159
  %s3167 = scalar_lea.vmem [#allocation1], 1
  %v3168 = vld [vmem:[%s3167] ss:$2 sm:$0xff]
  %s3170 = scalar_lea.vmem %s2, 40
  %3171 = vst [vmem:[%s3170 + $0x4] sm:$0xf] %v3168
  %3172 = vst [vmem:[#allocation1] ss:$2 sm:$0xff] %v3159
  %v3173 = vld.sshfl [vmem:[#allocation1] sm:$0xff pattern:$0x75316420]
  %v3174 = vld.sshfl [vmem:[#allocation1 + $0x8] sm:$0xff pattern:$0x75316420]
  %3177 = vst [vmem:[#allocation1] ss:$2 sm:$0xff] %v3159
  %v3178 = vld.sshfl [vmem:[#allocation1] sm:$0xff pattern:$0x75316420]
  %v3179 = vld.sshfl [vmem:[#allocation1 + $0x8] sm:$0xff pattern:$0x75316420]
  %v3182 = vmul.f32 %v3173, %v292
  %v3183 = vmul.f32 %v3174, %v293
  %v3184 = vmul.f32 %v3178, %v294
  %v3185 = vmul.f32 %v3179, %v295
  %v3186 = vpack.c.bf16 %v3182, %v3182
  %v3187 = vpack.c.bf16 %v3183, %v3183
  %v3188 = vpack.c.bf16 %v3184, %v3184
  %v3189 = vpack.c.bf16 %v3185, %v3185
  %3190 = vmatpush.bf16.msra.mxu0 %v1120
  %3191 = vmatpush.bf16.msra.mxu0 %v1112
  %3192 = vmatpush.bf16.msra.mxu0 %v1104
  %3193 = vmatpush.bf16.msra.mxu0 %v1096
  %3194 = vmatpush.bf16.msra.mxu0 %v1088
  %3195 = vmatpush.bf16.msra.mxu0 %v1080
  %3196 = vmatpush.bf16.msra.mxu0 %v1072
  %3197 = vmatpush.bf16.msra.mxu0 %v1064
  %3198 = vmatmul.bf16.gmra.mxu0 %v3186
  %v3199 = vpop.f32.mrf.mxu0
  %v3200 = vadd.f32 0.0, %v3199
  %v3201 = vpop.f32.mrf.mxu0
  %3202 = vdwg.mxu0
  %3203 = vmatpush.bf16.msra.mxu0 %v1184
  %3204 = vmatpush.bf16.msra.mxu0 %v1176
  %3205 = vmatpush.bf16.msra.mxu0 %v1168
  %3206 = vmatpush.bf16.msra.mxu0 %v1160
  %3207 = vmatpush.bf16.msra.mxu0 %v1152
  %3208 = vmatpush.bf16.msra.mxu0 %v1144
  %3209 = vmatpush.bf16.msra.mxu0 %v1136
  %3210 = vmatpush.bf16.msra.mxu0 %v1128
  %3211 = vmatmul.bf16.gmra.mxu0 %v3187
  %v3212 = vpop.f32.mrf.mxu0
  %v3213 = vadd.f32 %v3200, %v3212
  %v3214 = vpop.f32.mrf.mxu0
  %3215 = vdwg.mxu0
  %3216 = vmatpush.bf16.msra.mxu0 %v1248
  %3217 = vmatpush.bf16.msra.mxu0 %v1240
  %3218 = vmatpush.bf16.msra.mxu0 %v1232
  %3219 = vmatpush.bf16.msra.mxu0 %v1224
  %3220 = vmatpush.bf16.msra.mxu0 %v1216
  %3221 = vmatpush.bf16.msra.mxu0 %v1208
  %3222 = vmatpush.bf16.msra.mxu0 %v1200
  %3223 = vmatpush.bf16.msra.mxu0 %v1192
  %3224 = vmatmul.bf16.gmra.mxu0 %v3188
  %v3225 = vpop.f32.mrf.mxu0
  %v3226 = vadd.f32 %v3213, %v3225
  %v3227 = vpop.f32.mrf.mxu0
  %3228 = vdwg.mxu0
  %3229 = vmatpush.bf16.msra.mxu0 %v1312
  %3230 = vmatpush.bf16.msra.mxu0 %v1304
  %3231 = vmatpush.bf16.msra.mxu0 %v1296
  %3232 = vmatpush.bf16.msra.mxu0 %v1288
  %3233 = vmatpush.bf16.msra.mxu0 %v1280
  %3234 = vmatpush.bf16.msra.mxu0 %v1272
  %3235 = vmatpush.bf16.msra.mxu0 %v1264
  %3236 = vmatpush.bf16.msra.mxu0 %v1256
  %3237 = vmatmul.bf16.gmra.mxu0 %v3189
  %v3238 = vpop.f32.mrf.mxu0
  %v3239 = vadd.f32 %v3226, %v3238
  %v3240 = vpop.f32.mrf.mxu0
  %3241 = vdwg.mxu0
  %3242 = vmatpush.bf16.msra.mxu0 %v1121
  %3243 = vmatpush.bf16.msra.mxu0 %v1113
  %3244 = vmatpush.bf16.msra.mxu0 %v1105
  %3245 = vmatpush.bf16.msra.mxu0 %v1097
  %3246 = vmatpush.bf16.msra.mxu0 %v1089
  %3247 = vmatpush.bf16.msra.mxu0 %v1081
  %3248 = vmatpush.bf16.msra.mxu0 %v1073
  %3249 = vmatpush.bf16.msra.mxu0 %v1065
  %3250 = vmatmul.bf16.gmra.mxu0 %v3186
  %v3251 = vpop.f32.mrf.mxu0
  %v3252 = vadd.f32 0.0, %v3251
  %v3253 = vpop.f32.mrf.mxu0
  %3254 = vdwg.mxu0
  %3255 = vmatpush.bf16.msra.mxu0 %v1185
  %3256 = vmatpush.bf16.msra.mxu0 %v1177
  %3257 = vmatpush.bf16.msra.mxu0 %v1169
  %3258 = vmatpush.bf16.msra.mxu0 %v1161
  %3259 = vmatpush.bf16.msra.mxu0 %v1153
  %3260 = vmatpush.bf16.msra.mxu0 %v1145
  %3261 = vmatpush.bf16.msra.mxu0 %v1137
  %3262 = vmatpush.bf16.msra.mxu0 %v1129
  %3263 = vmatmul.bf16.gmra.mxu0 %v3187
  %v3264 = vpop.f32.mrf.mxu0
  %v3265 = vadd.f32 %v3252, %v3264
  %v3266 = vpop.f32.mrf.mxu0
  %3267 = vdwg.mxu0
  %3268 = vmatpush.bf16.msra.mxu0 %v1249
  %3269 = vmatpush.bf16.msra.mxu0 %v1241
  %3270 = vmatpush.bf16.msra.mxu0 %v1233
  %3271 = vmatpush.bf16.msra.mxu0 %v1225
  %3272 = vmatpush.bf16.msra.mxu0 %v1217
  %3273 = vmatpush.bf16.msra.mxu0 %v1209
  %3274 = vmatpush.bf16.msra.mxu0 %v1201
  %3275 = vmatpush.bf16.msra.mxu0 %v1193
  %3276 = vmatmul.bf16.gmra.mxu0 %v3188
  %v3277 = vpop.f32.mrf.mxu0
  %v3278 = vadd.f32 %v3265, %v3277
  %v3279 = vpop.f32.mrf.mxu0
  %3280 = vdwg.mxu0
  %3281 = vmatpush.bf16.msra.mxu0 %v1313
  %3282 = vmatpush.bf16.msra.mxu0 %v1305
  %3283 = vmatpush.bf16.msra.mxu0 %v1297
  %3284 = vmatpush.bf16.msra.mxu0 %v1289
  %3285 = vmatpush.bf16.msra.mxu0 %v1281
  %3286 = vmatpush.bf16.msra.mxu0 %v1273
  %3287 = vmatpush.bf16.msra.mxu0 %v1265
  %3288 = vmatpush.bf16.msra.mxu0 %v1257
  %3289 = vmatmul.bf16.gmra.mxu0 %v3189
  %v3290 = vpop.f32.mrf.mxu0
  %v3291 = vadd.f32 %v3278, %v3290
  %v3292 = vpop.f32.mrf.mxu0
  %3293 = vdwg.mxu0
  %3294 = vmatpush.bf16.msra.mxu0 %v1122
  %3295 = vmatpush.bf16.msra.mxu0 %v1114
  %3296 = vmatpush.bf16.msra.mxu0 %v1106
  %3297 = vmatpush.bf16.msra.mxu0 %v1098
  %3298 = vmatpush.bf16.msra.mxu0 %v1090
  %3299 = vmatpush.bf16.msra.mxu0 %v1082
  %3300 = vmatpush.bf16.msra.mxu0 %v1074
  %3301 = vmatpush.bf16.msra.mxu0 %v1066
  %3302 = vmatmul.bf16.gmra.mxu0 %v3186
  %v3303 = vpop.f32.mrf.mxu0
  %v3304 = vadd.f32 0.0, %v3303
  %v3305 = vpop.f32.mrf.mxu0
  %3306 = vdwg.mxu0
  %3307 = vmatpush.bf16.msra.mxu0 %v1186
  %3308 = vmatpush.bf16.msra.mxu0 %v1178
  %3309 = vmatpush.bf16.msra.mxu0 %v1170
  %3310 = vmatpush.bf16.msra.mxu0 %v1162
  %3311 = vmatpush.bf16.msra.mxu0 %v1154
  %3312 = vmatpush.bf16.msra.mxu0 %v1146
  %3313 = vmatpush.bf16.msra.mxu0 %v1138
  %3314 = vmatpush.bf16.msra.mxu0 %v1130
  %3315 = vmatmul.bf16.gmra.mxu0 %v3187
  %v3316 = vpop.f32.mrf.mxu0
  %v3317 = vadd.f32 %v3304, %v3316
  %v3318 = vpop.f32.mrf.mxu0
  %3319 = vdwg.mxu0
  %3320 = vmatpush.bf16.msra.mxu0 %v1250
  %3321 = vmatpush.bf16.msra.mxu0 %v1242
  %3322 = vmatpush.bf16.msra.mxu0 %v1234
  %3323 = vmatpush.bf16.msra.mxu0 %v1226
  %3324 = vmatpush.bf16.msra.mxu0 %v1218
  %3325 = vmatpush.bf16.msra.mxu0 %v1210
  %3326 = vmatpush.bf16.msra.mxu0 %v1202
  %3327 = vmatpush.bf16.msra.mxu0 %v1194
  %3328 = vmatmul.bf16.gmra.mxu0 %v3188
  %v3329 = vpop.f32.mrf.mxu0
  %v3330 = vadd.f32 %v3317, %v3329
  %v3331 = vpop.f32.mrf.mxu0
  %3332 = vdwg.mxu0
  %3333 = vmatpush.bf16.msra.mxu0 %v1314
  %3334 = vmatpush.bf16.msra.mxu0 %v1306
  %3335 = vmatpush.bf16.msra.mxu0 %v1298
  %3336 = vmatpush.bf16.msra.mxu0 %v1290
  %3337 = vmatpush.bf16.msra.mxu0 %v1282
  %3338 = vmatpush.bf16.msra.mxu0 %v1274
  %3339 = vmatpush.bf16.msra.mxu0 %v1266
  %3340 = vmatpush.bf16.msra.mxu0 %v1258
  %3341 = vmatmul.bf16.gmra.mxu0 %v3189
  %v3342 = vpop.f32.mrf.mxu0
  %v3343 = vadd.f32 %v3330, %v3342
  %v3344 = vpop.f32.mrf.mxu0
  %3345 = vdwg.mxu0
  %3346 = vmatpush.bf16.msra.mxu0 %v1123
  %3347 = vmatpush.bf16.msra.mxu0 %v1115
  %3348 = vmatpush.bf16.msra.mxu0 %v1107
  %3349 = vmatpush.bf16.msra.mxu0 %v1099
  %3350 = vmatpush.bf16.msra.mxu0 %v1091
  %3351 = vmatpush.bf16.msra.mxu0 %v1083
  %3352 = vmatpush.bf16.msra.mxu0 %v1075
  %3353 = vmatpush.bf16.msra.mxu0 %v1067
  %3354 = vmatmul.bf16.gmra.mxu0 %v3186
  %v3355 = vpop.f32.mrf.mxu0
  %v3356 = vadd.f32 0.0, %v3355
  %v3357 = vpop.f32.mrf.mxu0
  %3358 = vdwg.mxu0
  %3359 = vmatpush.bf16.msra.mxu0 %v1187
  %3360 = vmatpush.bf16.msra.mxu0 %v1179
  %3361 = vmatpush.bf16.msra.mxu0 %v1171
  %3362 = vmatpush.bf16.msra.mxu0 %v1163
  %3363 = vmatpush.bf16.msra.mxu0 %v1155
  %3364 = vmatpush.bf16.msra.mxu0 %v1147
  %3365 = vmatpush.bf16.msra.mxu0 %v1139
  %3366 = vmatpush.bf16.msra.mxu0 %v1131
  %3367 = vmatmul.bf16.gmra.mxu0 %v3187
  %v3368 = vpop.f32.mrf.mxu0
  %v3369 = vadd.f32 %v3356, %v3368
  %v3370 = vpop.f32.mrf.mxu0
  %3371 = vdwg.mxu0
  %3372 = vmatpush.bf16.msra.mxu0 %v1251
  %3373 = vmatpush.bf16.msra.mxu0 %v1243
  %3374 = vmatpush.bf16.msra.mxu0 %v1235
  %3375 = vmatpush.bf16.msra.mxu0 %v1227
  %3376 = vmatpush.bf16.msra.mxu0 %v1219
  %3377 = vmatpush.bf16.msra.mxu0 %v1211
  %3378 = vmatpush.bf16.msra.mxu0 %v1203
  %3379 = vmatpush.bf16.msra.mxu0 %v1195
  %3380 = vmatmul.bf16.gmra.mxu0 %v3188
  %v3381 = vpop.f32.mrf.mxu0
  %v3382 = vadd.f32 %v3369, %v3381
  %v3383 = vpop.f32.mrf.mxu0
  %3384 = vdwg.mxu0
  %3385 = vmatpush.bf16.msra.mxu0 %v1315
  %3386 = vmatpush.bf16.msra.mxu0 %v1307
  %3387 = vmatpush.bf16.msra.mxu0 %v1299
  %3388 = vmatpush.bf16.msra.mxu0 %v1291
  %3389 = vmatpush.bf16.msra.mxu0 %v1283
  %3390 = vmatpush.bf16.msra.mxu0 %v1275
  %3391 = vmatpush.bf16.msra.mxu0 %v1267
  %3392 = vmatpush.bf16.msra.mxu0 %v1259
  %3393 = vmatmul.bf16.gmra.mxu0 %v3189
  %v3394 = vpop.f32.mrf.mxu0
  %v3395 = vadd.f32 %v3382, %v3394
  %v3396 = vpop.f32.mrf.mxu0
  %3397 = vdwg.mxu0
  %3398 = vmatpush.bf16.msra.mxu0 %v1124
  %3399 = vmatpush.bf16.msra.mxu0 %v1116
  %3400 = vmatpush.bf16.msra.mxu0 %v1108
  %3401 = vmatpush.bf16.msra.mxu0 %v1100
  %3402 = vmatpush.bf16.msra.mxu0 %v1092
  %3403 = vmatpush.bf16.msra.mxu0 %v1084
  %3404 = vmatpush.bf16.msra.mxu0 %v1076
  %3405 = vmatpush.bf16.msra.mxu0 %v1068
  %3406 = vmatmul.bf16.gmra.mxu0 %v3186
  %v3407 = vpop.f32.mrf.mxu0
  %v3408 = vadd.f32 0.0, %v3407
  %v3409 = vpop.f32.mrf.mxu0
  %3410 = vdwg.mxu0
  %3411 = vmatpush.bf16.msra.mxu0 %v1188
  %3412 = vmatpush.bf16.msra.mxu0 %v1180
  %3413 = vmatpush.bf16.msra.mxu0 %v1172
  %3414 = vmatpush.bf16.msra.mxu0 %v1164
  %3415 = vmatpush.bf16.msra.mxu0 %v1156
  %3416 = vmatpush.bf16.msra.mxu0 %v1148
  %3417 = vmatpush.bf16.msra.mxu0 %v1140
  %3418 = vmatpush.bf16.msra.mxu0 %v1132
  %3419 = vmatmul.bf16.gmra.mxu0 %v3187
  %v3420 = vpop.f32.mrf.mxu0
  %v3421 = vadd.f32 %v3408, %v3420
  %v3422 = vpop.f32.mrf.mxu0
  %3423 = vdwg.mxu0
  %3424 = vmatpush.bf16.msra.mxu0 %v1252
  %3425 = vmatpush.bf16.msra.mxu0 %v1244
  %3426 = vmatpush.bf16.msra.mxu0 %v1236
  %3427 = vmatpush.bf16.msra.mxu0 %v1228
  %3428 = vmatpush.bf16.msra.mxu0 %v1220
  %3429 = vmatpush.bf16.msra.mxu0 %v1212
  %3430 = vmatpush.bf16.msra.mxu0 %v1204
  %3431 = vmatpush.bf16.msra.mxu0 %v1196
  %3432 = vmatmul.bf16.gmra.mxu0 %v3188
  %v3433 = vpop.f32.mrf.mxu0
  %v3434 = vadd.f32 %v3421, %v3433
  %v3435 = vpop.f32.mrf.mxu0
  %3436 = vdwg.mxu0
  %3437 = vmatpush.bf16.msra.mxu0 %v1316
  %3438 = vmatpush.bf16.msra.mxu0 %v1308
  %3439 = vmatpush.bf16.msra.mxu0 %v1300
  %3440 = vmatpush.bf16.msra.mxu0 %v1292
  %3441 = vmatpush.bf16.msra.mxu0 %v1284
  %3442 = vmatpush.bf16.msra.mxu0 %v1276
  %3443 = vmatpush.bf16.msra.mxu0 %v1268
  %3444 = vmatpush.bf16.msra.mxu0 %v1260
  %3445 = vmatmul.bf16.gmra.mxu0 %v3189
  %v3446 = vpop.f32.mrf.mxu0
  %v3447 = vadd.f32 %v3434, %v3446
  %v3448 = vpop.f32.mrf.mxu0
  %3449 = vdwg.mxu0
  %3450 = vmatpush.bf16.msra.mxu0 %v1125
  %3451 = vmatpush.bf16.msra.mxu0 %v1117
  %3452 = vmatpush.bf16.msra.mxu0 %v1109
  %3453 = vmatpush.bf16.msra.mxu0 %v1101
  %3454 = vmatpush.bf16.msra.mxu0 %v1093
  %3455 = vmatpush.bf16.msra.mxu0 %v1085
  %3456 = vmatpush.bf16.msra.mxu0 %v1077
  %3457 = vmatpush.bf16.msra.mxu0 %v1069
  %3458 = vmatmul.bf16.gmra.mxu0 %v3186
  %v3459 = vpop.f32.mrf.mxu0
  %v3460 = vadd.f32 0.0, %v3459
  %v3461 = vpop.f32.mrf.mxu0
  %3462 = vdwg.mxu0
  %3463 = vmatpush.bf16.msra.mxu0 %v1189
  %3464 = vmatpush.bf16.msra.mxu0 %v1181
  %3465 = vmatpush.bf16.msra.mxu0 %v1173
  %3466 = vmatpush.bf16.msra.mxu0 %v1165
  %3467 = vmatpush.bf16.msra.mxu0 %v1157
  %3468 = vmatpush.bf16.msra.mxu0 %v1149
  %3469 = vmatpush.bf16.msra.mxu0 %v1141
  %3470 = vmatpush.bf16.msra.mxu0 %v1133
  %3471 = vmatmul.bf16.gmra.mxu0 %v3187
  %v3472 = vpop.f32.mrf.mxu0
  %v3473 = vadd.f32 %v3460, %v3472
  %v3474 = vpop.f32.mrf.mxu0
  %3475 = vdwg.mxu0
  %3476 = vmatpush.bf16.msra.mxu0 %v1253
  %3477 = vmatpush.bf16.msra.mxu0 %v1245
  %3478 = vmatpush.bf16.msra.mxu0 %v1237
  %3479 = vmatpush.bf16.msra.mxu0 %v1229
  %3480 = vmatpush.bf16.msra.mxu0 %v1221
  %3481 = vmatpush.bf16.msra.mxu0 %v1213
  %3482 = vmatpush.bf16.msra.mxu0 %v1205
  %3483 = vmatpush.bf16.msra.mxu0 %v1197
  %3484 = vmatmul.bf16.gmra.mxu0 %v3188
  %v3485 = vpop.f32.mrf.mxu0
  %v3486 = vadd.f32 %v3473, %v3485
  %v3487 = vpop.f32.mrf.mxu0
  %3488 = vdwg.mxu0
  %3489 = vmatpush.bf16.msra.mxu0 %v1317
  %3490 = vmatpush.bf16.msra.mxu0 %v1309
  %3491 = vmatpush.bf16.msra.mxu0 %v1301
  %3492 = vmatpush.bf16.msra.mxu0 %v1293
  %3493 = vmatpush.bf16.msra.mxu0 %v1285
  %3494 = vmatpush.bf16.msra.mxu0 %v1277
  %3495 = vmatpush.bf16.msra.mxu0 %v1269
  %3496 = vmatpush.bf16.msra.mxu0 %v1261
  %3497 = vmatmul.bf16.gmra.mxu0 %v3189
  %v3498 = vpop.f32.mrf.mxu0
  %v3499 = vadd.f32 %v3486, %v3498
  %v3500 = vpop.f32.mrf.mxu0
  %3501 = vdwg.mxu0
  %3502 = vmatpush.bf16.msra.mxu0 %v1126
  %3503 = vmatpush.bf16.msra.mxu0 %v1118
  %3504 = vmatpush.bf16.msra.mxu0 %v1110
  %3505 = vmatpush.bf16.msra.mxu0 %v1102
  %3506 = vmatpush.bf16.msra.mxu0 %v1094
  %3507 = vmatpush.bf16.msra.mxu0 %v1086
  %3508 = vmatpush.bf16.msra.mxu0 %v1078
  %3509 = vmatpush.bf16.msra.mxu0 %v1070
  %3510 = vmatmul.bf16.gmra.mxu0 %v3186
  %v3511 = vpop.f32.mrf.mxu0
  %v3512 = vadd.f32 0.0, %v3511
  %v3513 = vpop.f32.mrf.mxu0
  %3514 = vdwg.mxu0
  %3515 = vmatpush.bf16.msra.mxu0 %v1190
  %3516 = vmatpush.bf16.msra.mxu0 %v1182
  %3517 = vmatpush.bf16.msra.mxu0 %v1174
  %3518 = vmatpush.bf16.msra.mxu0 %v1166
  %3519 = vmatpush.bf16.msra.mxu0 %v1158
  %3520 = vmatpush.bf16.msra.mxu0 %v1150
  %3521 = vmatpush.bf16.msra.mxu0 %v1142
  %3522 = vmatpush.bf16.msra.mxu0 %v1134
  %3523 = vmatmul.bf16.gmra.mxu0 %v3187
  %v3524 = vpop.f32.mrf.mxu0
  %v3525 = vadd.f32 %v3512, %v3524
  %v3526 = vpop.f32.mrf.mxu0
  %3527 = vdwg.mxu0
  %3528 = vmatpush.bf16.msra.mxu0 %v1254
  %3529 = vmatpush.bf16.msra.mxu0 %v1246
  %3530 = vmatpush.bf16.msra.mxu0 %v1238
  %3531 = vmatpush.bf16.msra.mxu0 %v1230
  %3532 = vmatpush.bf16.msra.mxu0 %v1222
  %3533 = vmatpush.bf16.msra.mxu0 %v1214
  %3534 = vmatpush.bf16.msra.mxu0 %v1206
  %3535 = vmatpush.bf16.msra.mxu0 %v1198
  %3536 = vmatmul.bf16.gmra.mxu0 %v3188
  %v3537 = vpop.f32.mrf.mxu0
  %v3538 = vadd.f32 %v3525, %v3537
  %v3539 = vpop.f32.mrf.mxu0
  %3540 = vdwg.mxu0
  %3541 = vmatpush.bf16.msra.mxu0 %v1318
  %3542 = vmatpush.bf16.msra.mxu0 %v1310
  %3543 = vmatpush.bf16.msra.mxu0 %v1302
  %3544 = vmatpush.bf16.msra.mxu0 %v1294
  %3545 = vmatpush.bf16.msra.mxu0 %v1286
  %3546 = vmatpush.bf16.msra.mxu0 %v1278
  %3547 = vmatpush.bf16.msra.mxu0 %v1270
  %3548 = vmatpush.bf16.msra.mxu0 %v1262
  %3549 = vmatmul.bf16.gmra.mxu0 %v3189
  %v3550 = vpop.f32.mrf.mxu0
  %v3551 = vadd.f32 %v3538, %v3550
  %v3552 = vpop.f32.mrf.mxu0
  %3553 = vdwg.mxu0
  %3554 = vmatpush.bf16.msra.mxu0 %v1127
  %3555 = vmatpush.bf16.msra.mxu0 %v1119
  %3556 = vmatpush.bf16.msra.mxu0 %v1111
  %3557 = vmatpush.bf16.msra.mxu0 %v1103
  %3558 = vmatpush.bf16.msra.mxu0 %v1095
  %3559 = vmatpush.bf16.msra.mxu0 %v1087
  %3560 = vmatpush.bf16.msra.mxu0 %v1079
  %3561 = vmatpush.bf16.msra.mxu0 %v1071
  %3562 = vmatmul.bf16.gmra.mxu0 %v3186
  %v3563 = vpop.f32.mrf.mxu0
  %v3564 = vadd.f32 0.0, %v3563
  %v3565 = vpop.f32.mrf.mxu0
  %3566 = vdwg.mxu0
  %3567 = vmatpush.bf16.msra.mxu0 %v1191
  %3568 = vmatpush.bf16.msra.mxu0 %v1183
  %3569 = vmatpush.bf16.msra.mxu0 %v1175
  %3570 = vmatpush.bf16.msra.mxu0 %v1167
  %3571 = vmatpush.bf16.msra.mxu0 %v1159
  %3572 = vmatpush.bf16.msra.mxu0 %v1151
  %3573 = vmatpush.bf16.msra.mxu0 %v1143
  %3574 = vmatpush.bf16.msra.mxu0 %v1135
  %3575 = vmatmul.bf16.gmra.mxu0 %v3187
  %v3576 = vpop.f32.mrf.mxu0
  %v3577 = vadd.f32 %v3564, %v3576
  %v3578 = vpop.f32.mrf.mxu0
  %3579 = vdwg.mxu0
  %3580 = vmatpush.bf16.msra.mxu0 %v1255
  %3581 = vmatpush.bf16.msra.mxu0 %v1247
  %3582 = vmatpush.bf16.msra.mxu0 %v1239
  %3583 = vmatpush.bf16.msra.mxu0 %v1231
  %3584 = vmatpush.bf16.msra.mxu0 %v1223
  %3585 = vmatpush.bf16.msra.mxu0 %v1215
  %3586 = vmatpush.bf16.msra.mxu0 %v1207
  %3587 = vmatpush.bf16.msra.mxu0 %v1199
  %3588 = vmatmul.bf16.gmra.mxu0 %v3188
  %v3589 = vpop.f32.mrf.mxu0
  %v3590 = vadd.f32 %v3577, %v3589
  %v3591 = vpop.f32.mrf.mxu0
  %3592 = vdwg.mxu0
  %3593 = vmatpush.bf16.msra.mxu0 %v1319
  %3594 = vmatpush.bf16.msra.mxu0 %v1311
  %3595 = vmatpush.bf16.msra.mxu0 %v1303
  %3596 = vmatpush.bf16.msra.mxu0 %v1295
  %3597 = vmatpush.bf16.msra.mxu0 %v1287
  %3598 = vmatpush.bf16.msra.mxu0 %v1279
  %3599 = vmatpush.bf16.msra.mxu0 %v1271
  %3600 = vmatpush.bf16.msra.mxu0 %v1263
  %3601 = vmatmul.bf16.gmra.mxu0 %v3189
  %v3602 = vpop.f32.mrf.mxu0
  %v3603 = vadd.f32 %v3590, %v3602
  %v3604 = vpop.f32.mrf.mxu0
  %3605 = vdwg.mxu0
  %s3606 = scalar_lea.vmem %s0, 96
  %v3607 = vld [vmem:[%s3606] sm:$0xff]
  %v3608 = vld [vmem:[%s3606 + $0x8] sm:$0xff]
  %v3609 = vld [vmem:[%s3606 + $0x10] sm:$0xff]
  %v3610 = vld [vmem:[%s3606 + $0x18] sm:$0xff]
  %v3619 = vrot.slane %v3291, 4
  %v3620 = vrot.slane %v3395, 4
  %v3621 = vrot.slane %v3499, 4
  %v3622 = vrot.slane %v3603, 4
  %v3623 = vsel %vm2008, %v3239, %v3619
  %v3624 = vsel %vm2008, %v3343, %v3620
  %v3625 = vsel %vm2008, %v3447, %v3621
  %v3626 = vsel %vm2008, %v3551, %v3622
  %v3631 = vadd.f32 %v3607, %v3623
  %v3632 = vadd.f32 %v3608, %v3624
  %v3633 = vadd.f32 %v3609, %v3625
  %v3634 = vadd.f32 %v3610, %v3626
  %v3635 = vxor.u32 %v3631, 2147483648
  %v3636 = vmul.f32 %v3635, 1.442695
  %v3637 = vpow.pop %v3636
  %v3638 = vadd.f32 %v3637, 1.0
  %v3639 = vrcp.pop %v3638
  %v3640 = vmul.f32 %v3638, %v3639
  %v3641 = vsub.f32 1.0, %v3640
  %v3642 = vmul.f32 %v3639, %v3641
  %v3643 = vadd.f32 %v3639, %v3642
  %vm3644 = vweird.f32 %v3638
  %vm3645 = vweird.f32 %v3639
  %vm3646 = vmor %vm3644, %vm3645
  %v3647 = vsel %vm3646, %v3639, %v3643
  %v3648 = vand.u32 2147483647, %v3638
  %vm3649 = vcmp.eq.f32.partialorder %v3648, 8.507059e+37
  %v3650 = vand.u32 %v3638, 2147483648
  %v3651 = vor.u32 1.1754944e-38, %v3650
  %v3652 = vsel %vm3649, %v3651, %v3647
  %v3653 = vmul.f32 1.0, %v3652
  %v3654 = vxor.u32 %v3632, 2147483648
  %v3655 = vmul.f32 %v3654, 1.442695
  %v3656 = vpow.pop %v3655
  %v3657 = vadd.f32 %v3656, 1.0
  %v3658 = vrcp.pop %v3657
  %v3659 = vmul.f32 %v3657, %v3658
  %v3660 = vsub.f32 1.0, %v3659
  %v3661 = vmul.f32 %v3658, %v3660
  %v3662 = vadd.f32 %v3658, %v3661
  %vm3663 = vweird.f32 %v3657
  %vm3664 = vweird.f32 %v3658
  %vm3665 = vmor %vm3663, %vm3664
  %v3666 = vsel %vm3665, %v3658, %v3662
  %v3667 = vand.u32 2147483647, %v3657
  %vm3668 = vcmp.eq.f32.partialorder %v3667, 8.507059e+37
  %v3669 = vand.u32 %v3657, 2147483648
  %v3670 = vor.u32 1.1754944e-38, %v3669
  %v3671 = vsel %vm3668, %v3670, %v3666
  %v3672 = vmul.f32 1.0, %v3671
  %v3673 = vtanh.pop %v3633
  %v3674 = vxor.u32 %v3634, 2147483648
  %v3675 = vmul.f32 %v3674, 1.442695
  %v3676 = vpow.pop %v3675
  %v3677 = vadd.f32 %v3676, 1.0
  %v3678 = vrcp.pop %v3677
  %v3679 = vmul.f32 %v3677, %v3678
  %v3680 = vsub.f32 1.0, %v3679
  %v3681 = vmul.f32 %v3678, %v3680
  %v3682 = vadd.f32 %v3678, %v3681
  %vm3683 = vweird.f32 %v3677
  %vm3684 = vweird.f32 %v3678
  %vm3685 = vmor %vm3683, %vm3684
  %v3686 = vsel %vm3685, %v3678, %v3682
  %v3687 = vand.u32 2147483647, %v3677
  %vm3688 = vcmp.eq.f32.partialorder %v3687, 8.507059e+37
  %v3689 = vand.u32 %v3677, 2147483648
  %v3690 = vor.u32 1.1754944e-38, %v3689
  %v3691 = vsel %vm3688, %v3690, %v3686
  %v3692 = vmul.f32 1.0, %v3691
  %v3693 = vmul.f32 %v3672, %v3157
  %v3694 = vmul.f32 %v3653, %v3673
  %v3695 = vadd.f32 %v3693, %v3694
  %v3696 = vtanh.pop %v3695
  %v3697 = vmul.f32 %v3692, %v3696
  %v3699 = vrot.slane %v3697, 2
  %v3700 = vsel %vm2086, %v3697, %v3699
  %s3702 = scalar_lea.vmem %s2, 24
  %3703 = vst [vmem:[%s3702] sm:$0xf] %v3700
  %3704 = vst.sshfl [vmem:[#allocation1] sm:$0xff pattern:$0x75643120] %v3697
  %s3705 = scalar_lea.vmem [#allocation1], 1
  %v3706 = vld [vmem:[%s3705] ss:$2 sm:$0xff]
  %s3708 = scalar_lea.vmem %s2, 32
  %3709 = vst [vmem:[%s3708 + $0x4] sm:$0xf] %v3706
  %3710 = vst [vmem:[#allocation1] ss:$2 sm:$0xff] %v3697
  %v3711 = vld.sshfl [vmem:[#allocation1] sm:$0xff pattern:$0x75316420]
  %v3712 = vld.sshfl [vmem:[#allocation1 + $0x8] sm:$0xff pattern:$0x75316420]
  %3715 = vst [vmem:[#allocation1] ss:$2 sm:$0xff] %v3697
  %v3716 = vld.sshfl [vmem:[#allocation1] sm:$0xff pattern:$0x75316420]
  %v3717 = vld.sshfl [vmem:[#allocation1 + $0x8] sm:$0xff pattern:$0x75316420]
  %v3720 = vmul.f32 %v3711, %v292
  %v3721 = vmul.f32 %v3712, %v293
  %v3722 = vmul.f32 %v3716, %v294
  %v3723 = vmul.f32 %v3717, %v295
  %v3724 = vpack.c.bf16 %v3720, %v3720
  %v3725 = vpack.c.bf16 %v3721, %v3721
  %v3726 = vpack.c.bf16 %v3722, %v3722
  %v3727 = vpack.c.bf16 %v3723, %v3723
  %3728 = vmatpush.bf16.msra.mxu0 %v1120
  %3729 = vmatpush.bf16.msra.mxu0 %v1112
  %3730 = vmatpush.bf16.msra.mxu0 %v1104
  %3731 = vmatpush.bf16.msra.mxu0 %v1096
  %3732 = vmatpush.bf16.msra.mxu0 %v1088
  %3733 = vmatpush.bf16.msra.mxu0 %v1080
  %3734 = vmatpush.bf16.msra.mxu0 %v1072
  %3735 = vmatpush.bf16.msra.mxu0 %v1064
  %3736 = vmatmul.bf16.gmra.mxu0 %v3724
  %v3737 = vpop.f32.mrf.mxu0
  %v3738 = vadd.f32 0.0, %v3737
  %v3739 = vpop.f32.mrf.mxu0
  %3740 = vdwg.mxu0
  %3741 = vmatpush.bf16.msra.mxu0 %v1184
  %3742 = vmatpush.bf16.msra.mxu0 %v1176
  %3743 = vmatpush.bf16.msra.mxu0 %v1168
  %3744 = vmatpush.bf16.msra.mxu0 %v1160
  %3745 = vmatpush.bf16.msra.mxu0 %v1152
  %3746 = vmatpush.bf16.msra.mxu0 %v1144
  %3747 = vmatpush.bf16.msra.mxu0 %v1136
  %3748 = vmatpush.bf16.msra.mxu0 %v1128
  %3749 = vmatmul.bf16.gmra.mxu0 %v3725
  %v3750 = vpop.f32.mrf.mxu0
  %v3751 = vadd.f32 %v3738, %v3750
  %v3752 = vpop.f32.mrf.mxu0
  %3753 = vdwg.mxu0
  %3754 = vmatpush.bf16.msra.mxu0 %v1248
  %3755 = vmatpush.bf16.msra.mxu0 %v1240
  %3756 = vmatpush.bf16.msra.mxu0 %v1232
  %3757 = vmatpush.bf16.msra.mxu0 %v1224
  %3758 = vmatpush.bf16.msra.mxu0 %v1216
  %3759 = vmatpush.bf16.msra.mxu0 %v1208
  %3760 = vmatpush.bf16.msra.mxu0 %v1200
  %3761 = vmatpush.bf16.msra.mxu0 %v1192
  %3762 = vmatmul.bf16.gmra.mxu0 %v3726
  %v3763 = vpop.f32.mrf.mxu0
  %v3764 = vadd.f32 %v3751, %v3763
  %v3765 = vpop.f32.mrf.mxu0
  %3766 = vdwg.mxu0
  %3767 = vmatpush.bf16.msra.mxu0 %v1312
  %3768 = vmatpush.bf16.msra.mxu0 %v1304
  %3769 = vmatpush.bf16.msra.mxu0 %v1296
  %3770 = vmatpush.bf16.msra.mxu0 %v1288
  %3771 = vmatpush.bf16.msra.mxu0 %v1280
  %3772 = vmatpush.bf16.msra.mxu0 %v1272
  %3773 = vmatpush.bf16.msra.mxu0 %v1264
  %3774 = vmatpush.bf16.msra.mxu0 %v1256
  %3775 = vmatmul.bf16.gmra.mxu0 %v3727
  %v3776 = vpop.f32.mrf.mxu0
  %v3777 = vadd.f32 %v3764, %v3776
  %v3778 = vpop.f32.mrf.mxu0
  %3779 = vdwg.mxu0
  %3780 = vmatpush.bf16.msra.mxu0 %v1121
  %3781 = vmatpush.bf16.msra.mxu0 %v1113
  %3782 = vmatpush.bf16.msra.mxu0 %v1105
  %3783 = vmatpush.bf16.msra.mxu0 %v1097
  %3784 = vmatpush.bf16.msra.mxu0 %v1089
  %3785 = vmatpush.bf16.msra.mxu0 %v1081
  %3786 = vmatpush.bf16.msra.mxu0 %v1073
  %3787 = vmatpush.bf16.msra.mxu0 %v1065
  %3788 = vmatmul.bf16.gmra.mxu0 %v3724
  %v3789 = vpop.f32.mrf.mxu0
  %v3790 = vadd.f32 0.0, %v3789
  %v3791 = vpop.f32.mrf.mxu0
  %3792 = vdwg.mxu0
  %3793 = vmatpush.bf16.msra.mxu0 %v1185
  %3794 = vmatpush.bf16.msra.mxu0 %v1177
  %3795 = vmatpush.bf16.msra.mxu0 %v1169
  %3796 = vmatpush.bf16.msra.mxu0 %v1161
  %3797 = vmatpush.bf16.msra.mxu0 %v1153
  %3798 = vmatpush.bf16.msra.mxu0 %v1145
  %3799 = vmatpush.bf16.msra.mxu0 %v1137
  %3800 = vmatpush.bf16.msra.mxu0 %v1129
  %3801 = vmatmul.bf16.gmra.mxu0 %v3725
  %v3802 = vpop.f32.mrf.mxu0
  %v3803 = vadd.f32 %v3790, %v3802
  %v3804 = vpop.f32.mrf.mxu0
  %3805 = vdwg.mxu0
  %3806 = vmatpush.bf16.msra.mxu0 %v1249
  %3807 = vmatpush.bf16.msra.mxu0 %v1241
  %3808 = vmatpush.bf16.msra.mxu0 %v1233
  %3809 = vmatpush.bf16.msra.mxu0 %v1225
  %3810 = vmatpush.bf16.msra.mxu0 %v1217
  %3811 = vmatpush.bf16.msra.mxu0 %v1209
  %3812 = vmatpush.bf16.msra.mxu0 %v1201
  %3813 = vmatpush.bf16.msra.mxu0 %v1193
  %3814 = vmatmul.bf16.gmra.mxu0 %v3726
  %v3815 = vpop.f32.mrf.mxu0
  %v3816 = vadd.f32 %v3803, %v3815
  %v3817 = vpop.f32.mrf.mxu0
  %3818 = vdwg.mxu0
  %3819 = vmatpush.bf16.msra.mxu0 %v1313
  %3820 = vmatpush.bf16.msra.mxu0 %v1305
  %3821 = vmatpush.bf16.msra.mxu0 %v1297
  %3822 = vmatpush.bf16.msra.mxu0 %v1289
  %3823 = vmatpush.bf16.msra.mxu0 %v1281
  %3824 = vmatpush.bf16.msra.mxu0 %v1273
  %3825 = vmatpush.bf16.msra.mxu0 %v1265
  %3826 = vmatpush.bf16.msra.mxu0 %v1257
  %3827 = vmatmul.bf16.gmra.mxu0 %v3727
  %v3828 = vpop.f32.mrf.mxu0
  %v3829 = vadd.f32 %v3816, %v3828
  %v3830 = vpop.f32.mrf.mxu0
  %3831 = vdwg.mxu0
  %3832 = vmatpush.bf16.msra.mxu0 %v1122
  %3833 = vmatpush.bf16.msra.mxu0 %v1114
  %3834 = vmatpush.bf16.msra.mxu0 %v1106
  %3835 = vmatpush.bf16.msra.mxu0 %v1098
  %3836 = vmatpush.bf16.msra.mxu0 %v1090
  %3837 = vmatpush.bf16.msra.mxu0 %v1082
  %3838 = vmatpush.bf16.msra.mxu0 %v1074
  %3839 = vmatpush.bf16.msra.mxu0 %v1066
  %3840 = vmatmul.bf16.gmra.mxu0 %v3724
  %v3841 = vpop.f32.mrf.mxu0
  %v3842 = vadd.f32 0.0, %v3841
  %v3843 = vpop.f32.mrf.mxu0
  %3844 = vdwg.mxu0
  %3845 = vmatpush.bf16.msra.mxu0 %v1186
  %3846 = vmatpush.bf16.msra.mxu0 %v1178
  %3847 = vmatpush.bf16.msra.mxu0 %v1170
  %3848 = vmatpush.bf16.msra.mxu0 %v1162
  %3849 = vmatpush.bf16.msra.mxu0 %v1154
  %3850 = vmatpush.bf16.msra.mxu0 %v1146
  %3851 = vmatpush.bf16.msra.mxu0 %v1138
  %3852 = vmatpush.bf16.msra.mxu0 %v1130
  %3853 = vmatmul.bf16.gmra.mxu0 %v3725
  %v3854 = vpop.f32.mrf.mxu0
  %v3855 = vadd.f32 %v3842, %v3854
  %v3856 = vpop.f32.mrf.mxu0
  %3857 = vdwg.mxu0
  %3858 = vmatpush.bf16.msra.mxu0 %v1250
  %3859 = vmatpush.bf16.msra.mxu0 %v1242
  %3860 = vmatpush.bf16.msra.mxu0 %v1234
  %3861 = vmatpush.bf16.msra.mxu0 %v1226
  %3862 = vmatpush.bf16.msra.mxu0 %v1218
  %3863 = vmatpush.bf16.msra.mxu0 %v1210
  %3864 = vmatpush.bf16.msra.mxu0 %v1202
  %3865 = vmatpush.bf16.msra.mxu0 %v1194
  %3866 = vmatmul.bf16.gmra.mxu0 %v3726
  %v3867 = vpop.f32.mrf.mxu0
  %v3868 = vadd.f32 %v3855, %v3867
  %v3869 = vpop.f32.mrf.mxu0
  %3870 = vdwg.mxu0
  %3871 = vmatpush.bf16.msra.mxu0 %v1314
  %3872 = vmatpush.bf16.msra.mxu0 %v1306
  %3873 = vmatpush.bf16.msra.mxu0 %v1298
  %3874 = vmatpush.bf16.msra.mxu0 %v1290
  %3875 = vmatpush.bf16.msra.mxu0 %v1282
  %3876 = vmatpush.bf16.msra.mxu0 %v1274
  %3877 = vmatpush.bf16.msra.mxu0 %v1266
  %3878 = vmatpush.bf16.msra.mxu0 %v1258
  %3879 = vmatmul.bf16.gmra.mxu0 %v3727
  %v3880 = vpop.f32.mrf.mxu0
  %v3881 = vadd.f32 %v3868, %v3880
  %v3882 = vpop.f32.mrf.mxu0
  %3883 = vdwg.mxu0
  %3884 = vmatpush.bf16.msra.mxu0 %v1123
  %3885 = vmatpush.bf16.msra.mxu0 %v1115
  %3886 = vmatpush.bf16.msra.mxu0 %v1107
  %3887 = vmatpush.bf16.msra.mxu0 %v1099
  %3888 = vmatpush.bf16.msra.mxu0 %v1091
  %3889 = vmatpush.bf16.msra.mxu0 %v1083
  %3890 = vmatpush.bf16.msra.mxu0 %v1075
  %3891 = vmatpush.bf16.msra.mxu0 %v1067
  %3892 = vmatmul.bf16.gmra.mxu0 %v3724
  %v3893 = vpop.f32.mrf.mxu0
  %v3894 = vadd.f32 0.0, %v3893
  %v3895 = vpop.f32.mrf.mxu0
  %3896 = vdwg.mxu0
  %3897 = vmatpush.bf16.msra.mxu0 %v1187
  %3898 = vmatpush.bf16.msra.mxu0 %v1179
  %3899 = vmatpush.bf16.msra.mxu0 %v1171
  %3900 = vmatpush.bf16.msra.mxu0 %v1163
  %3901 = vmatpush.bf16.msra.mxu0 %v1155
  %3902 = vmatpush.bf16.msra.mxu0 %v1147
  %3903 = vmatpush.bf16.msra.mxu0 %v1139
  %3904 = vmatpush.bf16.msra.mxu0 %v1131
  %3905 = vmatmul.bf16.gmra.mxu0 %v3725
  %v3906 = vpop.f32.mrf.mxu0
  %v3907 = vadd.f32 %v3894, %v3906
  %v3908 = vpop.f32.mrf.mxu0
  %3909 = vdwg.mxu0
  %3910 = vmatpush.bf16.msra.mxu0 %v1251
  %3911 = vmatpush.bf16.msra.mxu0 %v1243
  %3912 = vmatpush.bf16.msra.mxu0 %v1235
  %3913 = vmatpush.bf16.msra.mxu0 %v1227
  %3914 = vmatpush.bf16.msra.mxu0 %v1219
  %3915 = vmatpush.bf16.msra.mxu0 %v1211
  %3916 = vmatpush.bf16.msra.mxu0 %v1203
  %3917 = vmatpush.bf16.msra.mxu0 %v1195
  %3918 = vmatmul.bf16.gmra.mxu0 %v3726
  %v3919 = vpop.f32.mrf.mxu0
  %v3920 = vadd.f32 %v3907, %v3919
  %v3921 = vpop.f32.mrf.mxu0
  %3922 = vdwg.mxu0
  %3923 = vmatpush.bf16.msra.mxu0 %v1315
  %3924 = vmatpush.bf16.msra.mxu0 %v1307
  %3925 = vmatpush.bf16.msra.mxu0 %v1299
  %3926 = vmatpush.bf16.msra.mxu0 %v1291
  %3927 = vmatpush.bf16.msra.mxu0 %v1283
  %3928 = vmatpush.bf16.msra.mxu0 %v1275
  %3929 = vmatpush.bf16.msra.mxu0 %v1267
  %3930 = vmatpush.bf16.msra.mxu0 %v1259
  %3931 = vmatmul.bf16.gmra.mxu0 %v3727
  %v3932 = vpop.f32.mrf.mxu0
  %v3933 = vadd.f32 %v3920, %v3932
  %v3934 = vpop.f32.mrf.mxu0
  %3935 = vdwg.mxu0
  %3936 = vmatpush.bf16.msra.mxu0 %v1124
  %3937 = vmatpush.bf16.msra.mxu0 %v1116
  %3938 = vmatpush.bf16.msra.mxu0 %v1108
  %3939 = vmatpush.bf16.msra.mxu0 %v1100
  %3940 = vmatpush.bf16.msra.mxu0 %v1092
  %3941 = vmatpush.bf16.msra.mxu0 %v1084
  %3942 = vmatpush.bf16.msra.mxu0 %v1076
  %3943 = vmatpush.bf16.msra.mxu0 %v1068
  %3944 = vmatmul.bf16.gmra.mxu0 %v3724
  %v3945 = vpop.f32.mrf.mxu0
  %v3946 = vadd.f32 0.0, %v3945
  %v3947 = vpop.f32.mrf.mxu0
  %3948 = vdwg.mxu0
  %3949 = vmatpush.bf16.msra.mxu0 %v1188
  %3950 = vmatpush.bf16.msra.mxu0 %v1180
  %3951 = vmatpush.bf16.msra.mxu0 %v1172
  %3952 = vmatpush.bf16.msra.mxu0 %v1164
  %3953 = vmatpush.bf16.msra.mxu0 %v1156
  %3954 = vmatpush.bf16.msra.mxu0 %v1148
  %3955 = vmatpush.bf16.msra.mxu0 %v1140
  %3956 = vmatpush.bf16.msra.mxu0 %v1132
  %3957 = vmatmul.bf16.gmra.mxu0 %v3725
  %v3958 = vpop.f32.mrf.mxu0
  %v3959 = vadd.f32 %v3946, %v3958
  %v3960 = vpop.f32.mrf.mxu0
  %3961 = vdwg.mxu0
  %3962 = vmatpush.bf16.msra.mxu0 %v1252
  %3963 = vmatpush.bf16.msra.mxu0 %v1244
  %3964 = vmatpush.bf16.msra.mxu0 %v1236
  %3965 = vmatpush.bf16.msra.mxu0 %v1228
  %3966 = vmatpush.bf16.msra.mxu0 %v1220
  %3967 = vmatpush.bf16.msra.mxu0 %v1212
  %3968 = vmatpush.bf16.msra.mxu0 %v1204
  %3969 = vmatpush.bf16.msra.mxu0 %v1196
  %3970 = vmatmul.bf16.gmra.mxu0 %v3726
  %v3971 = vpop.f32.mrf.mxu0
  %v3972 = vadd.f32 %v3959, %v3971
  %v3973 = vpop.f32.mrf.mxu0
  %3974 = vdwg.mxu0
  %3975 = vmatpush.bf16.msra.mxu0 %v1316
  %3976 = vmatpush.bf16.msra.mxu0 %v1308
  %3977 = vmatpush.bf16.msra.mxu0 %v1300
  %3978 = vmatpush.bf16.msra.mxu0 %v1292
  %3979 = vmatpush.bf16.msra.mxu0 %v1284
  %3980 = vmatpush.bf16.msra.mxu0 %v1276
  %3981 = vmatpush.bf16.msra.mxu0 %v1268
  %3982 = vmatpush.bf16.msra.mxu0 %v1260
  %3983 = vmatmul.bf16.gmra.mxu0 %v3727
  %v3984 = vpop.f32.mrf.mxu0
  %v3985 = vadd.f32 %v3972, %v3984
  %v3986 = vpop.f32.mrf.mxu0
  %3987 = vdwg.mxu0
  %3988 = vmatpush.bf16.msra.mxu0 %v1125
  %3989 = vmatpush.bf16.msra.mxu0 %v1117
  %3990 = vmatpush.bf16.msra.mxu0 %v1109
  %3991 = vmatpush.bf16.msra.mxu0 %v1101
  %3992 = vmatpush.bf16.msra.mxu0 %v1093
  %3993 = vmatpush.bf16.msra.mxu0 %v1085
  %3994 = vmatpush.bf16.msra.mxu0 %v1077
  %3995 = vmatpush.bf16.msra.mxu0 %v1069
  %3996 = vmatmul.bf16.gmra.mxu0 %v3724
  %v3997 = vpop.f32.mrf.mxu0
  %v3998 = vadd.f32 0.0, %v3997
  %v3999 = vpop.f32.mrf.mxu0
  %4000 = vdwg.mxu0
  %4001 = vmatpush.bf16.msra.mxu0 %v1189
  %4002 = vmatpush.bf16.msra.mxu0 %v1181
  %4003 = vmatpush.bf16.msra.mxu0 %v1173
  %4004 = vmatpush.bf16.msra.mxu0 %v1165
  %4005 = vmatpush.bf16.msra.mxu0 %v1157
  %4006 = vmatpush.bf16.msra.mxu0 %v1149
  %4007 = vmatpush.bf16.msra.mxu0 %v1141
  %4008 = vmatpush.bf16.msra.mxu0 %v1133
  %4009 = vmatmul.bf16.gmra.mxu0 %v3725
  %v4010 = vpop.f32.mrf.mxu0
  %v4011 = vadd.f32 %v3998, %v4010
  %v4012 = vpop.f32.mrf.mxu0
  %4013 = vdwg.mxu0
  %4014 = vmatpush.bf16.msra.mxu0 %v1253
  %4015 = vmatpush.bf16.msra.mxu0 %v1245
  %4016 = vmatpush.bf16.msra.mxu0 %v1237
  %4017 = vmatpush.bf16.msra.mxu0 %v1229
  %4018 = vmatpush.bf16.msra.mxu0 %v1221
  %4019 = vmatpush.bf16.msra.mxu0 %v1213
  %4020 = vmatpush.bf16.msra.mxu0 %v1205
  %4021 = vmatpush.bf16.msra.mxu0 %v1197
  %4022 = vmatmul.bf16.gmra.mxu0 %v3726
  %v4023 = vpop.f32.mrf.mxu0
  %v4024 = vadd.f32 %v4011, %v4023
  %v4025 = vpop.f32.mrf.mxu0
  %4026 = vdwg.mxu0
  %4027 = vmatpush.bf16.msra.mxu0 %v1317
  %4028 = vmatpush.bf16.msra.mxu0 %v1309
  %4029 = vmatpush.bf16.msra.mxu0 %v1301
  %4030 = vmatpush.bf16.msra.mxu0 %v1293
  %4031 = vmatpush.bf16.msra.mxu0 %v1285
  %4032 = vmatpush.bf16.msra.mxu0 %v1277
  %4033 = vmatpush.bf16.msra.mxu0 %v1269
  %4034 = vmatpush.bf16.msra.mxu0 %v1261
  %4035 = vmatmul.bf16.gmra.mxu0 %v3727
  %v4036 = vpop.f32.mrf.mxu0
  %v4037 = vadd.f32 %v4024, %v4036
  %v4038 = vpop.f32.mrf.mxu0
  %4039 = vdwg.mxu0
  %4040 = vmatpush.bf16.msra.mxu0 %v1126
  %4041 = vmatpush.bf16.msra.mxu0 %v1118
  %4042 = vmatpush.bf16.msra.mxu0 %v1110
  %4043 = vmatpush.bf16.msra.mxu0 %v1102
  %4044 = vmatpush.bf16.msra.mxu0 %v1094
  %4045 = vmatpush.bf16.msra.mxu0 %v1086
  %4046 = vmatpush.bf16.msra.mxu0 %v1078
  %4047 = vmatpush.bf16.msra.mxu0 %v1070
  %4048 = vmatmul.bf16.gmra.mxu0 %v3724
  %v4049 = vpop.f32.mrf.mxu0
  %v4050 = vadd.f32 0.0, %v4049
  %v4051 = vpop.f32.mrf.mxu0
  %4052 = vdwg.mxu0
  %4053 = vmatpush.bf16.msra.mxu0 %v1190
  %4054 = vmatpush.bf16.msra.mxu0 %v1182
  %4055 = vmatpush.bf16.msra.mxu0 %v1174
  %4056 = vmatpush.bf16.msra.mxu0 %v1166
  %4057 = vmatpush.bf16.msra.mxu0 %v1158
  %4058 = vmatpush.bf16.msra.mxu0 %v1150
  %4059 = vmatpush.bf16.msra.mxu0 %v1142
  %4060 = vmatpush.bf16.msra.mxu0 %v1134
  %4061 = vmatmul.bf16.gmra.mxu0 %v3725
  %v4062 = vpop.f32.mrf.mxu0
  %v4063 = vadd.f32 %v4050, %v4062
  %v4064 = vpop.f32.mrf.mxu0
  %4065 = vdwg.mxu0
  %4066 = vmatpush.bf16.msra.mxu0 %v1254
  %4067 = vmatpush.bf16.msra.mxu0 %v1246
  %4068 = vmatpush.bf16.msra.mxu0 %v1238
  %4069 = vmatpush.bf16.msra.mxu0 %v1230
  %4070 = vmatpush.bf16.msra.mxu0 %v1222
  %4071 = vmatpush.bf16.msra.mxu0 %v1214
  %4072 = vmatpush.bf16.msra.mxu0 %v1206
  %4073 = vmatpush.bf16.msra.mxu0 %v1198
  %4074 = vmatmul.bf16.gmra.mxu0 %v3726
  %v4075 = vpop.f32.mrf.mxu0
  %v4076 = vadd.f32 %v4063, %v4075
  %v4077 = vpop.f32.mrf.mxu0
  %4078 = vdwg.mxu0
  %4079 = vmatpush.bf16.msra.mxu0 %v1318
  %4080 = vmatpush.bf16.msra.mxu0 %v1310
  %4081 = vmatpush.bf16.msra.mxu0 %v1302
  %4082 = vmatpush.bf16.msra.mxu0 %v1294
  %4083 = vmatpush.bf16.msra.mxu0 %v1286
  %4084 = vmatpush.bf16.msra.mxu0 %v1278
  %4085 = vmatpush.bf16.msra.mxu0 %v1270
  %4086 = vmatpush.bf16.msra.mxu0 %v1262
  %4087 = vmatmul.bf16.gmra.mxu0 %v3727
  %v4088 = vpop.f32.mrf.mxu0
  %v4089 = vadd.f32 %v4076, %v4088
  %v4090 = vpop.f32.mrf.mxu0
  %4091 = vdwg.mxu0
  %4092 = vmatpush.bf16.msra.mxu0 %v1127
  %4093 = vmatpush.bf16.msra.mxu0 %v1119
  %4094 = vmatpush.bf16.msra.mxu0 %v1111
  %4095 = vmatpush.bf16.msra.mxu0 %v1103
  %4096 = vmatpush.bf16.msra.mxu0 %v1095
  %4097 = vmatpush.bf16.msra.mxu0 %v1087
  %4098 = vmatpush.bf16.msra.mxu0 %v1079
  %4099 = vmatpush.bf16.msra.mxu0 %v1071
  %4100 = vmatmul.bf16.gmra.mxu0 %v3724
  %v4101 = vpop.f32.mrf.mxu0
  %v4102 = vadd.f32 0.0, %v4101
  %v4103 = vpop.f32.mrf.mxu0
  %4104 = vdwg.mxu0
  %4105 = vmatpush.bf16.msra.mxu0 %v1191
  %4106 = vmatpush.bf16.msra.mxu0 %v1183
  %4107 = vmatpush.bf16.msra.mxu0 %v1175
  %4108 = vmatpush.bf16.msra.mxu0 %v1167
  %4109 = vmatpush.bf16.msra.mxu0 %v1159
  %4110 = vmatpush.bf16.msra.mxu0 %v1151
  %4111 = vmatpush.bf16.msra.mxu0 %v1143
  %4112 = vmatpush.bf16.msra.mxu0 %v1135
  %4113 = vmatmul.bf16.gmra.mxu0 %v3725
  %v4114 = vpop.f32.mrf.mxu0
  %v4115 = vadd.f32 %v4102, %v4114
  %v4116 = vpop.f32.mrf.mxu0
  %4117 = vdwg.mxu0
  %4118 = vmatpush.bf16.msra.mxu0 %v1255
  %4119 = vmatpush.bf16.msra.mxu0 %v1247
  %4120 = vmatpush.bf16.msra.mxu0 %v1239
  %4121 = vmatpush.bf16.msra.mxu0 %v1231
  %4122 = vmatpush.bf16.msra.mxu0 %v1223
  %4123 = vmatpush.bf16.msra.mxu0 %v1215
  %4124 = vmatpush.bf16.msra.mxu0 %v1207
  %4125 = vmatpush.bf16.msra.mxu0 %v1199
  %4126 = vmatmul.bf16.gmra.mxu0 %v3726
  %v4127 = vpop.f32.mrf.mxu0
  %v4128 = vadd.f32 %v4115, %v4127
  %v4129 = vpop.f32.mrf.mxu0
  %4130 = vdwg.mxu0
  %4131 = vmatpush.bf16.msra.mxu0 %v1319
  %4132 = vmatpush.bf16.msra.mxu0 %v1311
  %4133 = vmatpush.bf16.msra.mxu0 %v1303
  %4134 = vmatpush.bf16.msra.mxu0 %v1295
  %4135 = vmatpush.bf16.msra.mxu0 %v1287
  %4136 = vmatpush.bf16.msra.mxu0 %v1279
  %4137 = vmatpush.bf16.msra.mxu0 %v1271
  %4138 = vmatpush.bf16.msra.mxu0 %v1263
  %4139 = vmatmul.bf16.gmra.mxu0 %v3727
  %v4140 = vpop.f32.mrf.mxu0
  %v4141 = vadd.f32 %v4128, %v4140
  %v4142 = vpop.f32.mrf.mxu0
  %4143 = vdwg.mxu0
  %s4144 = scalar_lea.vmem %s0, 128
  %v4145 = vld [vmem:[%s4144] sm:$0xff]
  %v4146 = vld [vmem:[%s4144 + $0x8] sm:$0xff]
  %v4147 = vld [vmem:[%s4144 + $0x10] sm:$0xff]
  %v4148 = vld [vmem:[%s4144 + $0x18] sm:$0xff]
  %v4157 = vrot.slane %v3829, 4
  %v4158 = vrot.slane %v3933, 4
  %v4159 = vrot.slane %v4037, 4
  %v4160 = vrot.slane %v4141, 4
  %v4161 = vsel %vm2008, %v3777, %v4157
  %v4162 = vsel %vm2008, %v3881, %v4158
  %v4163 = vsel %vm2008, %v3985, %v4159
  %v4164 = vsel %vm2008, %v4089, %v4160
  %v4169 = vadd.f32 %v4145, %v4161
  %v4170 = vadd.f32 %v4146, %v4162
  %v4171 = vadd.f32 %v4147, %v4163
  %v4172 = vadd.f32 %v4148, %v4164
  %v4173 = vxor.u32 %v4169, 2147483648
  %v4174 = vmul.f32 %v4173, 1.442695
  %v4175 = vpow.pop %v4174
  %v4176 = vadd.f32 %v4175, 1.0
  %v4177 = vrcp.pop %v4176
  %v4178 = vmul.f32 %v4176, %v4177
  %v4179 = vsub.f32 1.0, %v4178
  %v4180 = vmul.f32 %v4177, %v4179
  %v4181 = vadd.f32 %v4177, %v4180
  %vm4182 = vweird.f32 %v4176
  %vm4183 = vweird.f32 %v4177
  %vm4184 = vmor %vm4182, %vm4183
  %v4185 = vsel %vm4184, %v4177, %v4181
  %v4186 = vand.u32 2147483647, %v4176
  %vm4187 = vcmp.eq.f32.partialorder %v4186, 8.507059e+37
  %v4188 = vand.u32 %v4176, 2147483648
  %v4189 = vor.u32 1.1754944e-38, %v4188
  %v4190 = vsel %vm4187, %v4189, %v4185
  %v4191 = vmul.f32 1.0, %v4190
  %v4192 = vxor.u32 %v4170, 2147483648
  %v4193 = vmul.f32 %v4192, 1.442695
  %v4194 = vpow.pop %v4193
  %v4195 = vadd.f32 %v4194, 1.0
  %v4196 = vrcp.pop %v4195
  %v4197 = vmul.f32 %v4195, %v4196
  %v4198 = vsub.f32 1.0, %v4197
  %v4199 = vmul.f32 %v4196, %v4198
  %v4200 = vadd.f32 %v4196, %v4199
  %vm4201 = vweird.f32 %v4195
  %vm4202 = vweird.f32 %v4196
  %vm4203 = vmor %vm4201, %vm4202
  %v4204 = vsel %vm4203, %v4196, %v4200
  %v4205 = vand.u32 2147483647, %v4195
  %vm4206 = vcmp.eq.f32.partialorder %v4205, 8.507059e+37
  %v4207 = vand.u32 %v4195, 2147483648
  %v4208 = vor.u32 1.1754944e-38, %v4207
  %v4209 = vsel %vm4206, %v4208, %v4204
  %v4210 = vmul.f32 1.0, %v4209
  %v4211 = vtanh.pop %v4171
  %v4212 = vxor.u32 %v4172, 2147483648
  %v4213 = vmul.f32 %v4212, 1.442695
  %v4214 = vpow.pop %v4213
  %v4215 = vadd.f32 %v4214, 1.0
  %v4216 = vrcp.pop %v4215
  %v4217 = vmul.f32 %v4215, %v4216
  %v4218 = vsub.f32 1.0, %v4217
  %v4219 = vmul.f32 %v4216, %v4218
  %v4220 = vadd.f32 %v4216, %v4219
  %vm4221 = vweird.f32 %v4215
  %vm4222 = vweird.f32 %v4216
  %vm4223 = vmor %vm4221, %vm4222
  %v4224 = vsel %vm4223, %v4216, %v4220
  %v4225 = vand.u32 2147483647, %v4215
  %vm4226 = vcmp.eq.f32.partialorder %v4225, 8.507059e+37
  %v4227 = vand.u32 %v4215, 2147483648
  %v4228 = vor.u32 1.1754944e-38, %v4227
  %v4229 = vsel %vm4226, %v4228, %v4224
  %v4230 = vmul.f32 1.0, %v4229
  %v4231 = vmul.f32 %v4210, %v3695
  %v4232 = vmul.f32 %v4191, %v4211
  %v4233 = vadd.f32 %v4231, %v4232
  %v4234 = vtanh.pop %v4233
  %v4235 = vmul.f32 %v4230, %v4234
  %v4237 = vrot.slane %v4235, 2
  %v4238 = vsel %vm2086, %v4235, %v4237
  %4240 = vst [vmem:[%s3708] sm:$0xf] %v4238
  %4241 = vst.sshfl [vmem:[#allocation1] sm:$0xff pattern:$0x75643120] %v4235
  %s4242 = scalar_lea.vmem [#allocation1], 1
  %v4243 = vld [vmem:[%s4242] ss:$2 sm:$0xff]
  %4245 = vst [vmem:[%s3702 + $0x4] sm:$0xf] %v4243
  %4246 = vst [vmem:[#allocation1] ss:$2 sm:$0xff] %v4235
  %v4247 = vld.sshfl [vmem:[#allocation1] sm:$0xff pattern:$0x75316420]
  %v4248 = vld.sshfl [vmem:[#allocation1 + $0x8] sm:$0xff pattern:$0x75316420]
  %4251 = vst [vmem:[#allocation1] ss:$2 sm:$0xff] %v4235
  %v4252 = vld.sshfl [vmem:[#allocation1] sm:$0xff pattern:$0x75316420]
  %v4253 = vld.sshfl [vmem:[#allocation1 + $0x8] sm:$0xff pattern:$0x75316420]
  %v4256 = vmul.f32 %v4247, %v292
  %v4257 = vmul.f32 %v4248, %v293
  %v4258 = vmul.f32 %v4252, %v294
  %v4259 = vmul.f32 %v4253, %v295
  %v4260 = vpack.c.bf16 %v4256, %v4256
  %v4261 = vpack.c.bf16 %v4257, %v4257
  %v4262 = vpack.c.bf16 %v4258, %v4258
  %v4263 = vpack.c.bf16 %v4259, %v4259
  %4264 = vmatpush.bf16.msra.mxu0 %v1120
  %4265 = vmatpush.bf16.msra.mxu0 %v1112
  %4266 = vmatpush.bf16.msra.mxu0 %v1104
  %4267 = vmatpush.bf16.msra.mxu0 %v1096
  %4268 = vmatpush.bf16.msra.mxu0 %v1088
  %4269 = vmatpush.bf16.msra.mxu0 %v1080
  %4270 = vmatpush.bf16.msra.mxu0 %v1072
  %4271 = vmatpush.bf16.msra.mxu0 %v1064
  %4272 = vmatmul.bf16.gmra.mxu0 %v4260
  %v4273 = vpop.f32.mrf.mxu0
  %v4274 = vadd.f32 0.0, %v4273
  %v4275 = vpop.f32.mrf.mxu0
  %4276 = vdwg.mxu0
  %4277 = vmatpush.bf16.msra.mxu0 %v1184
  %4278 = vmatpush.bf16.msra.mxu0 %v1176
  %4279 = vmatpush.bf16.msra.mxu0 %v1168
  %4280 = vmatpush.bf16.msra.mxu0 %v1160
  %4281 = vmatpush.bf16.msra.mxu0 %v1152
  %4282 = vmatpush.bf16.msra.mxu0 %v1144
  %4283 = vmatpush.bf16.msra.mxu0 %v1136
  %4284 = vmatpush.bf16.msra.mxu0 %v1128
  %4285 = vmatmul.bf16.gmra.mxu0 %v4261
  %v4286 = vpop.f32.mrf.mxu0
  %v4287 = vadd.f32 %v4274, %v4286
  %v4288 = vpop.f32.mrf.mxu0
  %4289 = vdwg.mxu0
  %4290 = vmatpush.bf16.msra.mxu0 %v1248
  %4291 = vmatpush.bf16.msra.mxu0 %v1240
  %4292 = vmatpush.bf16.msra.mxu0 %v1232
  %4293 = vmatpush.bf16.msra.mxu0 %v1224
  %4294 = vmatpush.bf16.msra.mxu0 %v1216
  %4295 = vmatpush.bf16.msra.mxu0 %v1208
  %4296 = vmatpush.bf16.msra.mxu0 %v1200
  %4297 = vmatpush.bf16.msra.mxu0 %v1192
  %4298 = vmatmul.bf16.gmra.mxu0 %v4262
  %v4299 = vpop.f32.mrf.mxu0
  %v4300 = vadd.f32 %v4287, %v4299
  %v4301 = vpop.f32.mrf.mxu0
  %4302 = vdwg.mxu0
  %4303 = vmatpush.bf16.msra.mxu0 %v1312
  %4304 = vmatpush.bf16.msra.mxu0 %v1304
  %4305 = vmatpush.bf16.msra.mxu0 %v1296
  %4306 = vmatpush.bf16.msra.mxu0 %v1288
  %4307 = vmatpush.bf16.msra.mxu0 %v1280
  %4308 = vmatpush.bf16.msra.mxu0 %v1272
  %4309 = vmatpush.bf16.msra.mxu0 %v1264
  %4310 = vmatpush.bf16.msra.mxu0 %v1256
  %4311 = vmatmul.bf16.gmra.mxu0 %v4263
  %v4312 = vpop.f32.mrf.mxu0
  %v4313 = vadd.f32 %v4300, %v4312
  %v4314 = vpop.f32.mrf.mxu0
  %4315 = vdwg.mxu0
  %4316 = vmatpush.bf16.msra.mxu0 %v1121
  %4317 = vmatpush.bf16.msra.mxu0 %v1113
  %4318 = vmatpush.bf16.msra.mxu0 %v1105
  %4319 = vmatpush.bf16.msra.mxu0 %v1097
  %4320 = vmatpush.bf16.msra.mxu0 %v1089
  %4321 = vmatpush.bf16.msra.mxu0 %v1081
  %4322 = vmatpush.bf16.msra.mxu0 %v1073
  %4323 = vmatpush.bf16.msra.mxu0 %v1065
  %4324 = vmatmul.bf16.gmra.mxu0 %v4260
  %v4325 = vpop.f32.mrf.mxu0
  %v4326 = vadd.f32 0.0, %v4325
  %v4327 = vpop.f32.mrf.mxu0
  %4328 = vdwg.mxu0
  %4329 = vmatpush.bf16.msra.mxu0 %v1185
  %4330 = vmatpush.bf16.msra.mxu0 %v1177
  %4331 = vmatpush.bf16.msra.mxu0 %v1169
  %4332 = vmatpush.bf16.msra.mxu0 %v1161
  %4333 = vmatpush.bf16.msra.mxu0 %v1153
  %4334 = vmatpush.bf16.msra.mxu0 %v1145
  %4335 = vmatpush.bf16.msra.mxu0 %v1137
  %4336 = vmatpush.bf16.msra.mxu0 %v1129
  %4337 = vmatmul.bf16.gmra.mxu0 %v4261
  %v4338 = vpop.f32.mrf.mxu0
  %v4339 = vadd.f32 %v4326, %v4338
  %v4340 = vpop.f32.mrf.mxu0
  %4341 = vdwg.mxu0
  %4342 = vmatpush.bf16.msra.mxu0 %v1249
  %4343 = vmatpush.bf16.msra.mxu0 %v1241
  %4344 = vmatpush.bf16.msra.mxu0 %v1233
  %4345 = vmatpush.bf16.msra.mxu0 %v1225
  %4346 = vmatpush.bf16.msra.mxu0 %v1217
  %4347 = vmatpush.bf16.msra.mxu0 %v1209
  %4348 = vmatpush.bf16.msra.mxu0 %v1201
  %4349 = vmatpush.bf16.msra.mxu0 %v1193
  %4350 = vmatmul.bf16.gmra.mxu0 %v4262
  %v4351 = vpop.f32.mrf.mxu0
  %v4352 = vadd.f32 %v4339, %v4351
  %v4353 = vpop.f32.mrf.mxu0
  %4354 = vdwg.mxu0
  %4355 = vmatpush.bf16.msra.mxu0 %v1313
  %4356 = vmatpush.bf16.msra.mxu0 %v1305
  %4357 = vmatpush.bf16.msra.mxu0 %v1297
  %4358 = vmatpush.bf16.msra.mxu0 %v1289
  %4359 = vmatpush.bf16.msra.mxu0 %v1281
  %4360 = vmatpush.bf16.msra.mxu0 %v1273
  %4361 = vmatpush.bf16.msra.mxu0 %v1265
  %4362 = vmatpush.bf16.msra.mxu0 %v1257
  %4363 = vmatmul.bf16.gmra.mxu0 %v4263
  %v4364 = vpop.f32.mrf.mxu0
  %v4365 = vadd.f32 %v4352, %v4364
  %v4366 = vpop.f32.mrf.mxu0
  %4367 = vdwg.mxu0
  %4368 = vmatpush.bf16.msra.mxu0 %v1122
  %4369 = vmatpush.bf16.msra.mxu0 %v1114
  %4370 = vmatpush.bf16.msra.mxu0 %v1106
  %4371 = vmatpush.bf16.msra.mxu0 %v1098
  %4372 = vmatpush.bf16.msra.mxu0 %v1090
  %4373 = vmatpush.bf16.msra.mxu0 %v1082
  %4374 = vmatpush.bf16.msra.mxu0 %v1074
  %4375 = vmatpush.bf16.msra.mxu0 %v1066
  %4376 = vmatmul.bf16.gmra.mxu0 %v4260
  %v4377 = vpop.f32.mrf.mxu0
  %v4378 = vadd.f32 0.0, %v4377
  %v4379 = vpop.f32.mrf.mxu0
  %4380 = vdwg.mxu0
  %4381 = vmatpush.bf16.msra.mxu0 %v1186
  %4382 = vmatpush.bf16.msra.mxu0 %v1178
  %4383 = vmatpush.bf16.msra.mxu0 %v1170
  %4384 = vmatpush.bf16.msra.mxu0 %v1162
  %4385 = vmatpush.bf16.msra.mxu0 %v1154
  %4386 = vmatpush.bf16.msra.mxu0 %v1146
  %4387 = vmatpush.bf16.msra.mxu0 %v1138
  %4388 = vmatpush.bf16.msra.mxu0 %v1130
  %4389 = vmatmul.bf16.gmra.mxu0 %v4261
  %v4390 = vpop.f32.mrf.mxu0
  %v4391 = vadd.f32 %v4378, %v4390
  %v4392 = vpop.f32.mrf.mxu0
  %4393 = vdwg.mxu0
  %4394 = vmatpush.bf16.msra.mxu0 %v1250
  %4395 = vmatpush.bf16.msra.mxu0 %v1242
  %4396 = vmatpush.bf16.msra.mxu0 %v1234
  %4397 = vmatpush.bf16.msra.mxu0 %v1226
  %4398 = vmatpush.bf16.msra.mxu0 %v1218
  %4399 = vmatpush.bf16.msra.mxu0 %v1210
  %4400 = vmatpush.bf16.msra.mxu0 %v1202
  %4401 = vmatpush.bf16.msra.mxu0 %v1194
  %4402 = vmatmul.bf16.gmra.mxu0 %v4262
  %v4403 = vpop.f32.mrf.mxu0
  %v4404 = vadd.f32 %v4391, %v4403
  %v4405 = vpop.f32.mrf.mxu0
  %4406 = vdwg.mxu0
  %4407 = vmatpush.bf16.msra.mxu0 %v1314
  %4408 = vmatpush.bf16.msra.mxu0 %v1306
  %4409 = vmatpush.bf16.msra.mxu0 %v1298
  %4410 = vmatpush.bf16.msra.mxu0 %v1290
  %4411 = vmatpush.bf16.msra.mxu0 %v1282
  %4412 = vmatpush.bf16.msra.mxu0 %v1274
  %4413 = vmatpush.bf16.msra.mxu0 %v1266
  %4414 = vmatpush.bf16.msra.mxu0 %v1258
  %4415 = vmatmul.bf16.gmra.mxu0 %v4263
  %v4416 = vpop.f32.mrf.mxu0
  %v4417 = vadd.f32 %v4404, %v4416
  %v4418 = vpop.f32.mrf.mxu0
  %4419 = vdwg.mxu0
  %4420 = vmatpush.bf16.msra.mxu0 %v1123
  %4421 = vmatpush.bf16.msra.mxu0 %v1115
  %4422 = vmatpush.bf16.msra.mxu0 %v1107
  %4423 = vmatpush.bf16.msra.mxu0 %v1099
  %4424 = vmatpush.bf16.msra.mxu0 %v1091
  %4425 = vmatpush.bf16.msra.mxu0 %v1083
  %4426 = vmatpush.bf16.msra.mxu0 %v1075
  %4427 = vmatpush.bf16.msra.mxu0 %v1067
  %4428 = vmatmul.bf16.gmra.mxu0 %v4260
  %v4429 = vpop.f32.mrf.mxu0
  %v4430 = vadd.f32 0.0, %v4429
  %v4431 = vpop.f32.mrf.mxu0
  %4432 = vdwg.mxu0
  %4433 = vmatpush.bf16.msra.mxu0 %v1187
  %4434 = vmatpush.bf16.msra.mxu0 %v1179
  %4435 = vmatpush.bf16.msra.mxu0 %v1171
  %4436 = vmatpush.bf16.msra.mxu0 %v1163
  %4437 = vmatpush.bf16.msra.mxu0 %v1155
  %4438 = vmatpush.bf16.msra.mxu0 %v1147
  %4439 = vmatpush.bf16.msra.mxu0 %v1139
  %4440 = vmatpush.bf16.msra.mxu0 %v1131
  %4441 = vmatmul.bf16.gmra.mxu0 %v4261
  %v4442 = vpop.f32.mrf.mxu0
  %v4443 = vadd.f32 %v4430, %v4442
  %v4444 = vpop.f32.mrf.mxu0
  %4445 = vdwg.mxu0
  %4446 = vmatpush.bf16.msra.mxu0 %v1251
  %4447 = vmatpush.bf16.msra.mxu0 %v1243
  %4448 = vmatpush.bf16.msra.mxu0 %v1235
  %4449 = vmatpush.bf16.msra.mxu0 %v1227
  %4450 = vmatpush.bf16.msra.mxu0 %v1219
  %4451 = vmatpush.bf16.msra.mxu0 %v1211
  %4452 = vmatpush.bf16.msra.mxu0 %v1203
  %4453 = vmatpush.bf16.msra.mxu0 %v1195
  %4454 = vmatmul.bf16.gmra.mxu0 %v4262
  %v4455 = vpop.f32.mrf.mxu0
  %v4456 = vadd.f32 %v4443, %v4455
  %v4457 = vpop.f32.mrf.mxu0
  %4458 = vdwg.mxu0
  %4459 = vmatpush.bf16.msra.mxu0 %v1315
  %4460 = vmatpush.bf16.msra.mxu0 %v1307
  %4461 = vmatpush.bf16.msra.mxu0 %v1299
  %4462 = vmatpush.bf16.msra.mxu0 %v1291
  %4463 = vmatpush.bf16.msra.mxu0 %v1283
  %4464 = vmatpush.bf16.msra.mxu0 %v1275
  %4465 = vmatpush.bf16.msra.mxu0 %v1267
  %4466 = vmatpush.bf16.msra.mxu0 %v1259
  %4467 = vmatmul.bf16.gmra.mxu0 %v4263
  %v4468 = vpop.f32.mrf.mxu0
  %v4469 = vadd.f32 %v4456, %v4468
  %v4470 = vpop.f32.mrf.mxu0
  %4471 = vdwg.mxu0
  %4472 = vmatpush.bf16.msra.mxu0 %v1124
  %4473 = vmatpush.bf16.msra.mxu0 %v1116
  %4474 = vmatpush.bf16.msra.mxu0 %v1108
  %4475 = vmatpush.bf16.msra.mxu0 %v1100
  %4476 = vmatpush.bf16.msra.mxu0 %v1092
  %4477 = vmatpush.bf16.msra.mxu0 %v1084
  %4478 = vmatpush.bf16.msra.mxu0 %v1076
  %4479 = vmatpush.bf16.msra.mxu0 %v1068
  %4480 = vmatmul.bf16.gmra.mxu0 %v4260
  %v4481 = vpop.f32.mrf.mxu0
  %v4482 = vadd.f32 0.0, %v4481
  %v4483 = vpop.f32.mrf.mxu0
  %4484 = vdwg.mxu0
  %4485 = vmatpush.bf16.msra.mxu0 %v1188
  %4486 = vmatpush.bf16.msra.mxu0 %v1180
  %4487 = vmatpush.bf16.msra.mxu0 %v1172
  %4488 = vmatpush.bf16.msra.mxu0 %v1164
  %4489 = vmatpush.bf16.msra.mxu0 %v1156
  %4490 = vmatpush.bf16.msra.mxu0 %v1148
  %4491 = vmatpush.bf16.msra.mxu0 %v1140
  %4492 = vmatpush.bf16.msra.mxu0 %v1132
  %4493 = vmatmul.bf16.gmra.mxu0 %v4261
  %v4494 = vpop.f32.mrf.mxu0
  %v4495 = vadd.f32 %v4482, %v4494
  %v4496 = vpop.f32.mrf.mxu0
  %4497 = vdwg.mxu0
  %4498 = vmatpush.bf16.msra.mxu0 %v1252
  %4499 = vmatpush.bf16.msra.mxu0 %v1244
  %4500 = vmatpush.bf16.msra.mxu0 %v1236
  %4501 = vmatpush.bf16.msra.mxu0 %v1228
  %4502 = vmatpush.bf16.msra.mxu0 %v1220
  %4503 = vmatpush.bf16.msra.mxu0 %v1212
  %4504 = vmatpush.bf16.msra.mxu0 %v1204
  %4505 = vmatpush.bf16.msra.mxu0 %v1196
  %4506 = vmatmul.bf16.gmra.mxu0 %v4262
  %v4507 = vpop.f32.mrf.mxu0
  %v4508 = vadd.f32 %v4495, %v4507
  %v4509 = vpop.f32.mrf.mxu0
  %4510 = vdwg.mxu0
  %4511 = vmatpush.bf16.msra.mxu0 %v1316
  %4512 = vmatpush.bf16.msra.mxu0 %v1308
  %4513 = vmatpush.bf16.msra.mxu0 %v1300
  %4514 = vmatpush.bf16.msra.mxu0 %v1292
  %4515 = vmatpush.bf16.msra.mxu0 %v1284
  %4516 = vmatpush.bf16.msra.mxu0 %v1276
  %4517 = vmatpush.bf16.msra.mxu0 %v1268
  %4518 = vmatpush.bf16.msra.mxu0 %v1260
  %4519 = vmatmul.bf16.gmra.mxu0 %v4263
  %v4520 = vpop.f32.mrf.mxu0
  %v4521 = vadd.f32 %v4508, %v4520
  %v4522 = vpop.f32.mrf.mxu0
  %4523 = vdwg.mxu0
  %4524 = vmatpush.bf16.msra.mxu0 %v1125
  %4525 = vmatpush.bf16.msra.mxu0 %v1117
  %4526 = vmatpush.bf16.msra.mxu0 %v1109
  %4527 = vmatpush.bf16.msra.mxu0 %v1101
  %4528 = vmatpush.bf16.msra.mxu0 %v1093
  %4529 = vmatpush.bf16.msra.mxu0 %v1085
  %4530 = vmatpush.bf16.msra.mxu0 %v1077
  %4531 = vmatpush.bf16.msra.mxu0 %v1069
  %4532 = vmatmul.bf16.gmra.mxu0 %v4260
  %v4533 = vpop.f32.mrf.mxu0
  %v4534 = vadd.f32 0.0, %v4533
  %v4535 = vpop.f32.mrf.mxu0
  %4536 = vdwg.mxu0
  %4537 = vmatpush.bf16.msra.mxu0 %v1189
  %4538 = vmatpush.bf16.msra.mxu0 %v1181
  %4539 = vmatpush.bf16.msra.mxu0 %v1173
  %4540 = vmatpush.bf16.msra.mxu0 %v1165
  %4541 = vmatpush.bf16.msra.mxu0 %v1157
  %4542 = vmatpush.bf16.msra.mxu0 %v1149
  %4543 = vmatpush.bf16.msra.mxu0 %v1141
  %4544 = vmatpush.bf16.msra.mxu0 %v1133
  %4545 = vmatmul.bf16.gmra.mxu0 %v4261
  %v4546 = vpop.f32.mrf.mxu0
  %v4547 = vadd.f32 %v4534, %v4546
  %v4548 = vpop.f32.mrf.mxu0
  %4549 = vdwg.mxu0
  %4550 = vmatpush.bf16.msra.mxu0 %v1253
  %4551 = vmatpush.bf16.msra.mxu0 %v1245
  %4552 = vmatpush.bf16.msra.mxu0 %v1237
  %4553 = vmatpush.bf16.msra.mxu0 %v1229
  %4554 = vmatpush.bf16.msra.mxu0 %v1221
  %4555 = vmatpush.bf16.msra.mxu0 %v1213
  %4556 = vmatpush.bf16.msra.mxu0 %v1205
  %4557 = vmatpush.bf16.msra.mxu0 %v1197
  %4558 = vmatmul.bf16.gmra.mxu0 %v4262
  %v4559 = vpop.f32.mrf.mxu0
  %v4560 = vadd.f32 %v4547, %v4559
  %v4561 = vpop.f32.mrf.mxu0
  %4562 = vdwg.mxu0
  %4563 = vmatpush.bf16.msra.mxu0 %v1317
  %4564 = vmatpush.bf16.msra.mxu0 %v1309
  %4565 = vmatpush.bf16.msra.mxu0 %v1301
  %4566 = vmatpush.bf16.msra.mxu0 %v1293
  %4567 = vmatpush.bf16.msra.mxu0 %v1285
  %4568 = vmatpush.bf16.msra.mxu0 %v1277
  %4569 = vmatpush.bf16.msra.mxu0 %v1269
  %4570 = vmatpush.bf16.msra.mxu0 %v1261
  %4571 = vmatmul.bf16.gmra.mxu0 %v4263
  %v4572 = vpop.f32.mrf.mxu0
  %v4573 = vadd.f32 %v4560, %v4572
  %v4574 = vpop.f32.mrf.mxu0
  %4575 = vdwg.mxu0
  %4576 = vmatpush.bf16.msra.mxu0 %v1126
  %4577 = vmatpush.bf16.msra.mxu0 %v1118
  %4578 = vmatpush.bf16.msra.mxu0 %v1110
  %4579 = vmatpush.bf16.msra.mxu0 %v1102
  %4580 = vmatpush.bf16.msra.mxu0 %v1094
  %4581 = vmatpush.bf16.msra.mxu0 %v1086
  %4582 = vmatpush.bf16.msra.mxu0 %v1078
  %4583 = vmatpush.bf16.msra.mxu0 %v1070
  %4584 = vmatmul.bf16.gmra.mxu0 %v4260
  %v4585 = vpop.f32.mrf.mxu0
  %v4586 = vadd.f32 0.0, %v4585
  %v4587 = vpop.f32.mrf.mxu0
  %4588 = vdwg.mxu0
  %4589 = vmatpush.bf16.msra.mxu0 %v1190
  %4590 = vmatpush.bf16.msra.mxu0 %v1182
  %4591 = vmatpush.bf16.msra.mxu0 %v1174
  %4592 = vmatpush.bf16.msra.mxu0 %v1166
  %4593 = vmatpush.bf16.msra.mxu0 %v1158
  %4594 = vmatpush.bf16.msra.mxu0 %v1150
  %4595 = vmatpush.bf16.msra.mxu0 %v1142
  %4596 = vmatpush.bf16.msra.mxu0 %v1134
  %4597 = vmatmul.bf16.gmra.mxu0 %v4261
  %v4598 = vpop.f32.mrf.mxu0
  %v4599 = vadd.f32 %v4586, %v4598
  %v4600 = vpop.f32.mrf.mxu0
  %4601 = vdwg.mxu0
  %4602 = vmatpush.bf16.msra.mxu0 %v1254
  %4603 = vmatpush.bf16.msra.mxu0 %v1246
  %4604 = vmatpush.bf16.msra.mxu0 %v1238
  %4605 = vmatpush.bf16.msra.mxu0 %v1230
  %4606 = vmatpush.bf16.msra.mxu0 %v1222
  %4607 = vmatpush.bf16.msra.mxu0 %v1214
  %4608 = vmatpush.bf16.msra.mxu0 %v1206
  %4609 = vmatpush.bf16.msra.mxu0 %v1198
  %4610 = vmatmul.bf16.gmra.mxu0 %v4262
  %v4611 = vpop.f32.mrf.mxu0
  %v4612 = vadd.f32 %v4599, %v4611
  %v4613 = vpop.f32.mrf.mxu0
  %4614 = vdwg.mxu0
  %4615 = vmatpush.bf16.msra.mxu0 %v1318
  %4616 = vmatpush.bf16.msra.mxu0 %v1310
  %4617 = vmatpush.bf16.msra.mxu0 %v1302
  %4618 = vmatpush.bf16.msra.mxu0 %v1294
  %4619 = vmatpush.bf16.msra.mxu0 %v1286
  %4620 = vmatpush.bf16.msra.mxu0 %v1278
  %4621 = vmatpush.bf16.msra.mxu0 %v1270
  %4622 = vmatpush.bf16.msra.mxu0 %v1262
  %4623 = vmatmul.bf16.gmra.mxu0 %v4263
  %v4624 = vpop.f32.mrf.mxu0
  %v4625 = vadd.f32 %v4612, %v4624
  %v4626 = vpop.f32.mrf.mxu0
  %4627 = vdwg.mxu0
  %4628 = vmatpush.bf16.msra.mxu0 %v1127
  %4629 = vmatpush.bf16.msra.mxu0 %v1119
  %4630 = vmatpush.bf16.msra.mxu0 %v1111
  %4631 = vmatpush.bf16.msra.mxu0 %v1103
  %4632 = vmatpush.bf16.msra.mxu0 %v1095
  %4633 = vmatpush.bf16.msra.mxu0 %v1087
  %4634 = vmatpush.bf16.msra.mxu0 %v1079
  %4635 = vmatpush.bf16.msra.mxu0 %v1071
  %4636 = vmatmul.bf16.gmra.mxu0 %v4260
  %v4637 = vpop.f32.mrf.mxu0
  %v4638 = vadd.f32 0.0, %v4637
  %v4639 = vpop.f32.mrf.mxu0
  %4640 = vdwg.mxu0
  %4641 = vmatpush.bf16.msra.mxu0 %v1191
  %4642 = vmatpush.bf16.msra.mxu0 %v1183
  %4643 = vmatpush.bf16.msra.mxu0 %v1175
  %4644 = vmatpush.bf16.msra.mxu0 %v1167
  %4645 = vmatpush.bf16.msra.mxu0 %v1159
  %4646 = vmatpush.bf16.msra.mxu0 %v1151
  %4647 = vmatpush.bf16.msra.mxu0 %v1143
  %4648 = vmatpush.bf16.msra.mxu0 %v1135
  %4649 = vmatmul.bf16.gmra.mxu0 %v4261
  %v4650 = vpop.f32.mrf.mxu0
  %v4651 = vadd.f32 %v4638, %v4650
  %v4652 = vpop.f32.mrf.mxu0
  %4653 = vdwg.mxu0
  %4654 = vmatpush.bf16.msra.mxu0 %v1255
  %4655 = vmatpush.bf16.msra.mxu0 %v1247
  %4656 = vmatpush.bf16.msra.mxu0 %v1239
  %4657 = vmatpush.bf16.msra.mxu0 %v1231
  %4658 = vmatpush.bf16.msra.mxu0 %v1223
  %4659 = vmatpush.bf16.msra.mxu0 %v1215
  %4660 = vmatpush.bf16.msra.mxu0 %v1207
  %4661 = vmatpush.bf16.msra.mxu0 %v1199
  %4662 = vmatmul.bf16.gmra.mxu0 %v4262
  %v4663 = vpop.f32.mrf.mxu0
  %v4664 = vadd.f32 %v4651, %v4663
  %v4665 = vpop.f32.mrf.mxu0
  %4666 = vdwg.mxu0
  %4667 = vmatpush.bf16.msra.mxu0 %v1319
  %4668 = vmatpush.bf16.msra.mxu0 %v1311
  %4669 = vmatpush.bf16.msra.mxu0 %v1303
  %4670 = vmatpush.bf16.msra.mxu0 %v1295
  %4671 = vmatpush.bf16.msra.mxu0 %v1287
  %4672 = vmatpush.bf16.msra.mxu0 %v1279
  %4673 = vmatpush.bf16.msra.mxu0 %v1271
  %4674 = vmatpush.bf16.msra.mxu0 %v1263
  %4675 = vmatmul.bf16.gmra.mxu0 %v4263
  %v4676 = vpop.f32.mrf.mxu0
  %v4677 = vadd.f32 %v4664, %v4676
  %v4678 = vpop.f32.mrf.mxu0
  %4679 = vdwg.mxu0
  %s4680 = scalar_lea.vmem %s0, 160
  %v4681 = vld [vmem:[%s4680] sm:$0xff]
  %v4682 = vld [vmem:[%s4680 + $0x8] sm:$0xff]
  %v4683 = vld [vmem:[%s4680 + $0x10] sm:$0xff]
  %v4684 = vld [vmem:[%s4680 + $0x18] sm:$0xff]
  %v4693 = vrot.slane %v4365, 4
  %v4694 = vrot.slane %v4469, 4
  %v4695 = vrot.slane %v4573, 4
  %v4696 = vrot.slane %v4677, 4
  %v4697 = vsel %vm2008, %v4313, %v4693
  %v4698 = vsel %vm2008, %v4417, %v4694
  %v4699 = vsel %vm2008, %v4521, %v4695
  %v4700 = vsel %vm2008, %v4625, %v4696
  %v4705 = vadd.f32 %v4681, %v4697
  %v4706 = vadd.f32 %v4682, %v4698
  %v4707 = vadd.f32 %v4683, %v4699
  %v4708 = vadd.f32 %v4684, %v4700
  %v4709 = vxor.u32 %v4705, 2147483648
  %v4710 = vmul.f32 %v4709, 1.442695
  %v4711 = vpow.pop %v4710
  %v4712 = vadd.f32 %v4711, 1.0
  %v4713 = vrcp.pop %v4712
  %v4714 = vmul.f32 %v4712, %v4713
  %v4715 = vsub.f32 1.0, %v4714
  %v4716 = vmul.f32 %v4713, %v4715
  %v4717 = vadd.f32 %v4713, %v4716
  %vm4718 = vweird.f32 %v4712
  %vm4719 = vweird.f32 %v4713
  %vm4720 = vmor %vm4718, %vm4719
  %v4721 = vsel %vm4720, %v4713, %v4717
  %v4722 = vand.u32 2147483647, %v4712
  %vm4723 = vcmp.eq.f32.partialorder %v4722, 8.507059e+37
  %v4724 = vand.u32 %v4712, 2147483648
  %v4725 = vor.u32 1.1754944e-38, %v4724
  %v4726 = vsel %vm4723, %v4725, %v4721
  %v4727 = vmul.f32 1.0, %v4726
  %v4728 = vxor.u32 %v4706, 2147483648
  %v4729 = vmul.f32 %v4728, 1.442695
  %v4730 = vpow.pop %v4729
  %v4731 = vadd.f32 %v4730, 1.0
  %v4732 = vrcp.pop %v4731
  %v4733 = vmul.f32 %v4731, %v4732
  %v4734 = vsub.f32 1.0, %v4733
  %v4735 = vmul.f32 %v4732, %v4734
  %v4736 = vadd.f32 %v4732, %v4735
  %vm4737 = vweird.f32 %v4731
  %vm4738 = vweird.f32 %v4732
  %vm4739 = vmor %vm4737, %vm4738
  %v4740 = vsel %vm4739, %v4732, %v4736
  %v4741 = vand.u32 2147483647, %v4731
  %vm4742 = vcmp.eq.f32.partialorder %v4741, 8.507059e+37
  %v4743 = vand.u32 %v4731, 2147483648
  %v4744 = vor.u32 1.1754944e-38, %v4743
  %v4745 = vsel %vm4742, %v4744, %v4740
  %v4746 = vmul.f32 1.0, %v4745
  %v4747 = vtanh.pop %v4707
  %v4748 = vxor.u32 %v4708, 2147483648
  %v4749 = vmul.f32 %v4748, 1.442695
  %v4750 = vpow.pop %v4749
  %v4751 = vadd.f32 %v4750, 1.0
  %v4752 = vrcp.pop %v4751
  %v4753 = vmul.f32 %v4751, %v4752
  %v4754 = vsub.f32 1.0, %v4753
  %v4755 = vmul.f32 %v4752, %v4754
  %v4756 = vadd.f32 %v4752, %v4755
  %vm4757 = vweird.f32 %v4751
  %vm4758 = vweird.f32 %v4752
  %vm4759 = vmor %vm4757, %vm4758
  %v4760 = vsel %vm4759, %v4752, %v4756
  %v4761 = vand.u32 2147483647, %v4751
  %vm4762 = vcmp.eq.f32.partialorder %v4761, 8.507059e+37
  %v4763 = vand.u32 %v4751, 2147483648
  %v4764 = vor.u32 1.1754944e-38, %v4763
  %v4765 = vsel %vm4762, %v4764, %v4760
  %v4766 = vmul.f32 1.0, %v4765
  %v4767 = vmul.f32 %v4746, %v4233
  %v4768 = vmul.f32 %v4727, %v4747
  %v4769 = vadd.f32 %v4767, %v4768
  %v4770 = vtanh.pop %v4769
  %v4771 = vmul.f32 %v4766, %v4770
  %v4773 = vrot.slane %v4771, 2
  %v4774 = vsel %vm2086, %v4771, %v4773
  %4776 = vst [vmem:[%s3170] sm:$0xf] %v4774
  %4777 = vst.sshfl [vmem:[#allocation1] sm:$0xff pattern:$0x75643120] %v4771
  %s4778 = scalar_lea.vmem [#allocation1], 1
  %v4779 = vld [vmem:[%s4778] ss:$2 sm:$0xff]
  %4781 = vst [vmem:[%s3164 + $0x4] sm:$0xf] %v4779
  %4782 = vst [vmem:[#allocation1] ss:$2 sm:$0xff] %v4771
  %v4783 = vld.sshfl [vmem:[#allocation1] sm:$0xff pattern:$0x75316420]
  %v4784 = vld.sshfl [vmem:[#allocation1 + $0x8] sm:$0xff pattern:$0x75316420]
  %4787 = vst [vmem:[#allocation1] ss:$2 sm:$0xff] %v4771
  %v4788 = vld.sshfl [vmem:[#allocation1] sm:$0xff pattern:$0x75316420]
  %v4789 = vld.sshfl [vmem:[#allocation1 + $0x8] sm:$0xff pattern:$0x75316420]
  %v4792 = vmul.f32 %v4783, %v292
  %v4793 = vmul.f32 %v4784, %v293
  %v4794 = vmul.f32 %v4788, %v294
  %v4795 = vmul.f32 %v4789, %v295
  %v4796 = vpack.c.bf16 %v4792, %v4792
  %v4797 = vpack.c.bf16 %v4793, %v4793
  %v4798 = vpack.c.bf16 %v4794, %v4794
  %v4799 = vpack.c.bf16 %v4795, %v4795
  %4800 = vmatpush.bf16.msra.mxu0 %v1120
  %4801 = vmatpush.bf16.msra.mxu0 %v1112
  %4802 = vmatpush.bf16.msra.mxu0 %v1104
  %4803 = vmatpush.bf16.msra.mxu0 %v1096
  %4804 = vmatpush.bf16.msra.mxu0 %v1088
  %4805 = vmatpush.bf16.msra.mxu0 %v1080
  %4806 = vmatpush.bf16.msra.mxu0 %v1072
  %4807 = vmatpush.bf16.msra.mxu0 %v1064
  %4808 = vmatmul.bf16.gmra.mxu0 %v4796
  %v4809 = vpop.f32.mrf.mxu0
  %v4810 = vadd.f32 0.0, %v4809
  %v4811 = vpop.f32.mrf.mxu0
  %4812 = vdwg.mxu0
  %4813 = vmatpush.bf16.msra.mxu0 %v1184
  %4814 = vmatpush.bf16.msra.mxu0 %v1176
  %4815 = vmatpush.bf16.msra.mxu0 %v1168
  %4816 = vmatpush.bf16.msra.mxu0 %v1160
  %4817 = vmatpush.bf16.msra.mxu0 %v1152
  %4818 = vmatpush.bf16.msra.mxu0 %v1144
  %4819 = vmatpush.bf16.msra.mxu0 %v1136
  %4820 = vmatpush.bf16.msra.mxu0 %v1128
  %4821 = vmatmul.bf16.gmra.mxu0 %v4797
  %v4822 = vpop.f32.mrf.mxu0
  %v4823 = vadd.f32 %v4810, %v4822
  %v4824 = vpop.f32.mrf.mxu0
  %4825 = vdwg.mxu0
  %4826 = vmatpush.bf16.msra.mxu0 %v1248
  %4827 = vmatpush.bf16.msra.mxu0 %v1240
  %4828 = vmatpush.bf16.msra.mxu0 %v1232
  %4829 = vmatpush.bf16.msra.mxu0 %v1224
  %4830 = vmatpush.bf16.msra.mxu0 %v1216
  %4831 = vmatpush.bf16.msra.mxu0 %v1208
  %4832 = vmatpush.bf16.msra.mxu0 %v1200
  %4833 = vmatpush.bf16.msra.mxu0 %v1192
  %4834 = vmatmul.bf16.gmra.mxu0 %v4798
  %v4835 = vpop.f32.mrf.mxu0
  %v4836 = vadd.f32 %v4823, %v4835
  %v4837 = vpop.f32.mrf.mxu0
  %4838 = vdwg.mxu0
  %4839 = vmatpush.bf16.msra.mxu0 %v1312
  %4840 = vmatpush.bf16.msra.mxu0 %v1304
  %4841 = vmatpush.bf16.msra.mxu0 %v1296
  %4842 = vmatpush.bf16.msra.mxu0 %v1288
  %4843 = vmatpush.bf16.msra.mxu0 %v1280
  %4844 = vmatpush.bf16.msra.mxu0 %v1272
  %4845 = vmatpush.bf16.msra.mxu0 %v1264
  %4846 = vmatpush.bf16.msra.mxu0 %v1256
  %4847 = vmatmul.bf16.gmra.mxu0 %v4799
  %v4848 = vpop.f32.mrf.mxu0
  %v4849 = vadd.f32 %v4836, %v4848
  %v4850 = vpop.f32.mrf.mxu0
  %4851 = vdwg.mxu0
  %4852 = vmatpush.bf16.msra.mxu0 %v1121
  %4853 = vmatpush.bf16.msra.mxu0 %v1113
  %4854 = vmatpush.bf16.msra.mxu0 %v1105
  %4855 = vmatpush.bf16.msra.mxu0 %v1097
  %4856 = vmatpush.bf16.msra.mxu0 %v1089
  %4857 = vmatpush.bf16.msra.mxu0 %v1081
  %4858 = vmatpush.bf16.msra.mxu0 %v1073
  %4859 = vmatpush.bf16.msra.mxu0 %v1065
  %4860 = vmatmul.bf16.gmra.mxu0 %v4796
  %v4861 = vpop.f32.mrf.mxu0
  %v4862 = vadd.f32 0.0, %v4861
  %v4863 = vpop.f32.mrf.mxu0
  %4864 = vdwg.mxu0
  %4865 = vmatpush.bf16.msra.mxu0 %v1185
  %4866 = vmatpush.bf16.msra.mxu0 %v1177
  %4867 = vmatpush.bf16.msra.mxu0 %v1169
  %4868 = vmatpush.bf16.msra.mxu0 %v1161
  %4869 = vmatpush.bf16.msra.mxu0 %v1153
  %4870 = vmatpush.bf16.msra.mxu0 %v1145
  %4871 = vmatpush.bf16.msra.mxu0 %v1137
  %4872 = vmatpush.bf16.msra.mxu0 %v1129
  %4873 = vmatmul.bf16.gmra.mxu0 %v4797
  %v4874 = vpop.f32.mrf.mxu0
  %v4875 = vadd.f32 %v4862, %v4874
  %v4876 = vpop.f32.mrf.mxu0
  %4877 = vdwg.mxu0
  %4878 = vmatpush.bf16.msra.mxu0 %v1249
  %4879 = vmatpush.bf16.msra.mxu0 %v1241
  %4880 = vmatpush.bf16.msra.mxu0 %v1233
  %4881 = vmatpush.bf16.msra.mxu0 %v1225
  %4882 = vmatpush.bf16.msra.mxu0 %v1217
  %4883 = vmatpush.bf16.msra.mxu0 %v1209
  %4884 = vmatpush.bf16.msra.mxu0 %v1201
  %4885 = vmatpush.bf16.msra.mxu0 %v1193
  %4886 = vmatmul.bf16.gmra.mxu0 %v4798
  %v4887 = vpop.f32.mrf.mxu0
  %v4888 = vadd.f32 %v4875, %v4887
  %v4889 = vpop.f32.mrf.mxu0
  %4890 = vdwg.mxu0
  %4891 = vmatpush.bf16.msra.mxu0 %v1313
  %4892 = vmatpush.bf16.msra.mxu0 %v1305
  %4893 = vmatpush.bf16.msra.mxu0 %v1297
  %4894 = vmatpush.bf16.msra.mxu0 %v1289
  %4895 = vmatpush.bf16.msra.mxu0 %v1281
  %4896 = vmatpush.bf16.msra.mxu0 %v1273
  %4897 = vmatpush.bf16.msra.mxu0 %v1265
  %4898 = vmatpush.bf16.msra.mxu0 %v1257
  %4899 = vmatmul.bf16.gmra.mxu0 %v4799
  %v4900 = vpop.f32.mrf.mxu0
  %v4901 = vadd.f32 %v4888, %v4900
  %v4902 = vpop.f32.mrf.mxu0
  %4903 = vdwg.mxu0
  %4904 = vmatpush.bf16.msra.mxu0 %v1122
  %4905 = vmatpush.bf16.msra.mxu0 %v1114
  %4906 = vmatpush.bf16.msra.mxu0 %v1106
  %4907 = vmatpush.bf16.msra.mxu0 %v1098
  %4908 = vmatpush.bf16.msra.mxu0 %v1090
  %4909 = vmatpush.bf16.msra.mxu0 %v1082
  %4910 = vmatpush.bf16.msra.mxu0 %v1074
  %4911 = vmatpush.bf16.msra.mxu0 %v1066
  %4912 = vmatmul.bf16.gmra.mxu0 %v4796
  %v4913 = vpop.f32.mrf.mxu0
  %v4914 = vadd.f32 0.0, %v4913
  %v4915 = vpop.f32.mrf.mxu0
  %4916 = vdwg.mxu0
  %4917 = vmatpush.bf16.msra.mxu0 %v1186
  %4918 = vmatpush.bf16.msra.mxu0 %v1178
  %4919 = vmatpush.bf16.msra.mxu0 %v1170
  %4920 = vmatpush.bf16.msra.mxu0 %v1162
  %4921 = vmatpush.bf16.msra.mxu0 %v1154
  %4922 = vmatpush.bf16.msra.mxu0 %v1146
  %4923 = vmatpush.bf16.msra.mxu0 %v1138
  %4924 = vmatpush.bf16.msra.mxu0 %v1130
  %4925 = vmatmul.bf16.gmra.mxu0 %v4797
  %v4926 = vpop.f32.mrf.mxu0
  %v4927 = vadd.f32 %v4914, %v4926
  %v4928 = vpop.f32.mrf.mxu0
  %4929 = vdwg.mxu0
  %4930 = vmatpush.bf16.msra.mxu0 %v1250
  %4931 = vmatpush.bf16.msra.mxu0 %v1242
  %4932 = vmatpush.bf16.msra.mxu0 %v1234
  %4933 = vmatpush.bf16.msra.mxu0 %v1226
  %4934 = vmatpush.bf16.msra.mxu0 %v1218
  %4935 = vmatpush.bf16.msra.mxu0 %v1210
  %4936 = vmatpush.bf16.msra.mxu0 %v1202
  %4937 = vmatpush.bf16.msra.mxu0 %v1194
  %4938 = vmatmul.bf16.gmra.mxu0 %v4798
  %v4939 = vpop.f32.mrf.mxu0
  %v4940 = vadd.f32 %v4927, %v4939
  %v4941 = vpop.f32.mrf.mxu0
  %4942 = vdwg.mxu0
  %4943 = vmatpush.bf16.msra.mxu0 %v1314
  %4944 = vmatpush.bf16.msra.mxu0 %v1306
  %4945 = vmatpush.bf16.msra.mxu0 %v1298
  %4946 = vmatpush.bf16.msra.mxu0 %v1290
  %4947 = vmatpush.bf16.msra.mxu0 %v1282
  %4948 = vmatpush.bf16.msra.mxu0 %v1274
  %4949 = vmatpush.bf16.msra.mxu0 %v1266
  %4950 = vmatpush.bf16.msra.mxu0 %v1258
  %4951 = vmatmul.bf16.gmra.mxu0 %v4799
  %v4952 = vpop.f32.mrf.mxu0
  %v4953 = vadd.f32 %v4940, %v4952
  %v4954 = vpop.f32.mrf.mxu0
  %4955 = vdwg.mxu0
  %4956 = vmatpush.bf16.msra.mxu0 %v1123
  %4957 = vmatpush.bf16.msra.mxu0 %v1115
  %4958 = vmatpush.bf16.msra.mxu0 %v1107
  %4959 = vmatpush.bf16.msra.mxu0 %v1099
  %4960 = vmatpush.bf16.msra.mxu0 %v1091
  %4961 = vmatpush.bf16.msra.mxu0 %v1083
  %4962 = vmatpush.bf16.msra.mxu0 %v1075
  %4963 = vmatpush.bf16.msra.mxu0 %v1067
  %4964 = vmatmul.bf16.gmra.mxu0 %v4796
  %v4965 = vpop.f32.mrf.mxu0
  %v4966 = vadd.f32 0.0, %v4965
  %v4967 = vpop.f32.mrf.mxu0
  %4968 = vdwg.mxu0
  %4969 = vmatpush.bf16.msra.mxu0 %v1187
  %4970 = vmatpush.bf16.msra.mxu0 %v1179
  %4971 = vmatpush.bf16.msra.mxu0 %v1171
  %4972 = vmatpush.bf16.msra.mxu0 %v1163
  %4973 = vmatpush.bf16.msra.mxu0 %v1155
  %4974 = vmatpush.bf16.msra.mxu0 %v1147
  %4975 = vmatpush.bf16.msra.mxu0 %v1139
  %4976 = vmatpush.bf16.msra.mxu0 %v1131
  %4977 = vmatmul.bf16.gmra.mxu0 %v4797
  %v4978 = vpop.f32.mrf.mxu0
  %v4979 = vadd.f32 %v4966, %v4978
  %v4980 = vpop.f32.mrf.mxu0
  %4981 = vdwg.mxu0
  %4982 = vmatpush.bf16.msra.mxu0 %v1251
  %4983 = vmatpush.bf16.msra.mxu0 %v1243
  %4984 = vmatpush.bf16.msra.mxu0 %v1235
  %4985 = vmatpush.bf16.msra.mxu0 %v1227
  %4986 = vmatpush.bf16.msra.mxu0 %v1219
  %4987 = vmatpush.bf16.msra.mxu0 %v1211
  %4988 = vmatpush.bf16.msra.mxu0 %v1203
  %4989 = vmatpush.bf16.msra.mxu0 %v1195
  %4990 = vmatmul.bf16.gmra.mxu0 %v4798
  %v4991 = vpop.f32.mrf.mxu0
  %v4992 = vadd.f32 %v4979, %v4991
  %v4993 = vpop.f32.mrf.mxu0
  %4994 = vdwg.mxu0
  %4995 = vmatpush.bf16.msra.mxu0 %v1315
  %4996 = vmatpush.bf16.msra.mxu0 %v1307
  %4997 = vmatpush.bf16.msra.mxu0 %v1299
  %4998 = vmatpush.bf16.msra.mxu0 %v1291
  %4999 = vmatpush.bf16.msra.mxu0 %v1283
  %5000 = vmatpush.bf16.msra.mxu0 %v1275
  %5001 = vmatpush.bf16.msra.mxu0 %v1267
  %5002 = vmatpush.bf16.msra.mxu0 %v1259
  %5003 = vmatmul.bf16.gmra.mxu0 %v4799
  %v5004 = vpop.f32.mrf.mxu0
  %v5005 = vadd.f32 %v4992, %v5004
  %v5006 = vpop.f32.mrf.mxu0
  %5007 = vdwg.mxu0
  %5008 = vmatpush.bf16.msra.mxu0 %v1124
  %5009 = vmatpush.bf16.msra.mxu0 %v1116
  %5010 = vmatpush.bf16.msra.mxu0 %v1108
  %5011 = vmatpush.bf16.msra.mxu0 %v1100
  %5012 = vmatpush.bf16.msra.mxu0 %v1092
  %5013 = vmatpush.bf16.msra.mxu0 %v1084
  %5014 = vmatpush.bf16.msra.mxu0 %v1076
  %5015 = vmatpush.bf16.msra.mxu0 %v1068
  %5016 = vmatmul.bf16.gmra.mxu0 %v4796
  %v5017 = vpop.f32.mrf.mxu0
  %v5018 = vadd.f32 0.0, %v5017
  %v5019 = vpop.f32.mrf.mxu0
  %5020 = vdwg.mxu0
  %5021 = vmatpush.bf16.msra.mxu0 %v1188
  %5022 = vmatpush.bf16.msra.mxu0 %v1180
  %5023 = vmatpush.bf16.msra.mxu0 %v1172
  %5024 = vmatpush.bf16.msra.mxu0 %v1164
  %5025 = vmatpush.bf16.msra.mxu0 %v1156
  %5026 = vmatpush.bf16.msra.mxu0 %v1148
  %5027 = vmatpush.bf16.msra.mxu0 %v1140
  %5028 = vmatpush.bf16.msra.mxu0 %v1132
  %5029 = vmatmul.bf16.gmra.mxu0 %v4797
  %v5030 = vpop.f32.mrf.mxu0
  %v5031 = vadd.f32 %v5018, %v5030
  %v5032 = vpop.f32.mrf.mxu0
  %5033 = vdwg.mxu0
  %5034 = vmatpush.bf16.msra.mxu0 %v1252
  %5035 = vmatpush.bf16.msra.mxu0 %v1244
  %5036 = vmatpush.bf16.msra.mxu0 %v1236
  %5037 = vmatpush.bf16.msra.mxu0 %v1228
  %5038 = vmatpush.bf16.msra.mxu0 %v1220
  %5039 = vmatpush.bf16.msra.mxu0 %v1212
  %5040 = vmatpush.bf16.msra.mxu0 %v1204
  %5041 = vmatpush.bf16.msra.mxu0 %v1196
  %5042 = vmatmul.bf16.gmra.mxu0 %v4798
  %v5043 = vpop.f32.mrf.mxu0
  %v5044 = vadd.f32 %v5031, %v5043
  %v5045 = vpop.f32.mrf.mxu0
  %5046 = vdwg.mxu0
  %5047 = vmatpush.bf16.msra.mxu0 %v1316
  %5048 = vmatpush.bf16.msra.mxu0 %v1308
  %5049 = vmatpush.bf16.msra.mxu0 %v1300
  %5050 = vmatpush.bf16.msra.mxu0 %v1292
  %5051 = vmatpush.bf16.msra.mxu0 %v1284
  %5052 = vmatpush.bf16.msra.mxu0 %v1276
  %5053 = vmatpush.bf16.msra.mxu0 %v1268
  %5054 = vmatpush.bf16.msra.mxu0 %v1260
  %5055 = vmatmul.bf16.gmra.mxu0 %v4799
  %v5056 = vpop.f32.mrf.mxu0
  %v5057 = vadd.f32 %v5044, %v5056
  %v5058 = vpop.f32.mrf.mxu0
  %5059 = vdwg.mxu0
  %5060 = vmatpush.bf16.msra.mxu0 %v1125
  %5061 = vmatpush.bf16.msra.mxu0 %v1117
  %5062 = vmatpush.bf16.msra.mxu0 %v1109
  %5063 = vmatpush.bf16.msra.mxu0 %v1101
  %5064 = vmatpush.bf16.msra.mxu0 %v1093
  %5065 = vmatpush.bf16.msra.mxu0 %v1085
  %5066 = vmatpush.bf16.msra.mxu0 %v1077
  %5067 = vmatpush.bf16.msra.mxu0 %v1069
  %5068 = vmatmul.bf16.gmra.mxu0 %v4796
  %v5069 = vpop.f32.mrf.mxu0
  %v5070 = vadd.f32 0.0, %v5069
  %v5071 = vpop.f32.mrf.mxu0
  %5072 = vdwg.mxu0
  %5073 = vmatpush.bf16.msra.mxu0 %v1189
  %5074 = vmatpush.bf16.msra.mxu0 %v1181
  %5075 = vmatpush.bf16.msra.mxu0 %v1173
  %5076 = vmatpush.bf16.msra.mxu0 %v1165
  %5077 = vmatpush.bf16.msra.mxu0 %v1157
  %5078 = vmatpush.bf16.msra.mxu0 %v1149
  %5079 = vmatpush.bf16.msra.mxu0 %v1141
  %5080 = vmatpush.bf16.msra.mxu0 %v1133
  %5081 = vmatmul.bf16.gmra.mxu0 %v4797
  %v5082 = vpop.f32.mrf.mxu0
  %v5083 = vadd.f32 %v5070, %v5082
  %v5084 = vpop.f32.mrf.mxu0
  %5085 = vdwg.mxu0
  %5086 = vmatpush.bf16.msra.mxu0 %v1253
  %5087 = vmatpush.bf16.msra.mxu0 %v1245
  %5088 = vmatpush.bf16.msra.mxu0 %v1237
  %5089 = vmatpush.bf16.msra.mxu0 %v1229
  %5090 = vmatpush.bf16.msra.mxu0 %v1221
  %5091 = vmatpush.bf16.msra.mxu0 %v1213
  %5092 = vmatpush.bf16.msra.mxu0 %v1205
  %5093 = vmatpush.bf16.msra.mxu0 %v1197
  %5094 = vmatmul.bf16.gmra.mxu0 %v4798
  %v5095 = vpop.f32.mrf.mxu0
  %v5096 = vadd.f32 %v5083, %v5095
  %v5097 = vpop.f32.mrf.mxu0
  %5098 = vdwg.mxu0
  %5099 = vmatpush.bf16.msra.mxu0 %v1317
  %5100 = vmatpush.bf16.msra.mxu0 %v1309
  %5101 = vmatpush.bf16.msra.mxu0 %v1301
  %5102 = vmatpush.bf16.msra.mxu0 %v1293
  %5103 = vmatpush.bf16.msra.mxu0 %v1285
  %5104 = vmatpush.bf16.msra.mxu0 %v1277
  %5105 = vmatpush.bf16.msra.mxu0 %v1269
  %5106 = vmatpush.bf16.msra.mxu0 %v1261
  %5107 = vmatmul.bf16.gmra.mxu0 %v4799
  %v5108 = vpop.f32.mrf.mxu0
  %v5109 = vadd.f32 %v5096, %v5108
  %v5110 = vpop.f32.mrf.mxu0
  %5111 = vdwg.mxu0
  %5112 = vmatpush.bf16.msra.mxu0 %v1126
  %5113 = vmatpush.bf16.msra.mxu0 %v1118
  %5114 = vmatpush.bf16.msra.mxu0 %v1110
  %5115 = vmatpush.bf16.msra.mxu0 %v1102
  %5116 = vmatpush.bf16.msra.mxu0 %v1094
  %5117 = vmatpush.bf16.msra.mxu0 %v1086
  %5118 = vmatpush.bf16.msra.mxu0 %v1078
  %5119 = vmatpush.bf16.msra.mxu0 %v1070
  %5120 = vmatmul.bf16.gmra.mxu0 %v4796
  %v5121 = vpop.f32.mrf.mxu0
  %v5122 = vadd.f32 0.0, %v5121
  %v5123 = vpop.f32.mrf.mxu0
  %5124 = vdwg.mxu0
  %5125 = vmatpush.bf16.msra.mxu0 %v1190
  %5126 = vmatpush.bf16.msra.mxu0 %v1182
  %5127 = vmatpush.bf16.msra.mxu0 %v1174
  %5128 = vmatpush.bf16.msra.mxu0 %v1166
  %5129 = vmatpush.bf16.msra.mxu0 %v1158
  %5130 = vmatpush.bf16.msra.mxu0 %v1150
  %5131 = vmatpush.bf16.msra.mxu0 %v1142
  %5132 = vmatpush.bf16.msra.mxu0 %v1134
  %5133 = vmatmul.bf16.gmra.mxu0 %v4797
  %v5134 = vpop.f32.mrf.mxu0
  %v5135 = vadd.f32 %v5122, %v5134
  %v5136 = vpop.f32.mrf.mxu0
  %5137 = vdwg.mxu0
  %5138 = vmatpush.bf16.msra.mxu0 %v1254
  %5139 = vmatpush.bf16.msra.mxu0 %v1246
  %5140 = vmatpush.bf16.msra.mxu0 %v1238
  %5141 = vmatpush.bf16.msra.mxu0 %v1230
  %5142 = vmatpush.bf16.msra.mxu0 %v1222
  %5143 = vmatpush.bf16.msra.mxu0 %v1214
  %5144 = vmatpush.bf16.msra.mxu0 %v1206
  %5145 = vmatpush.bf16.msra.mxu0 %v1198
  %5146 = vmatmul.bf16.gmra.mxu0 %v4798
  %v5147 = vpop.f32.mrf.mxu0
  %v5148 = vadd.f32 %v5135, %v5147
  %v5149 = vpop.f32.mrf.mxu0
  %5150 = vdwg.mxu0
  %5151 = vmatpush.bf16.msra.mxu0 %v1318
  %5152 = vmatpush.bf16.msra.mxu0 %v1310
  %5153 = vmatpush.bf16.msra.mxu0 %v1302
  %5154 = vmatpush.bf16.msra.mxu0 %v1294
  %5155 = vmatpush.bf16.msra.mxu0 %v1286
  %5156 = vmatpush.bf16.msra.mxu0 %v1278
  %5157 = vmatpush.bf16.msra.mxu0 %v1270
  %5158 = vmatpush.bf16.msra.mxu0 %v1262
  %5159 = vmatmul.bf16.gmra.mxu0 %v4799
  %v5160 = vpop.f32.mrf.mxu0
  %v5161 = vadd.f32 %v5148, %v5160
  %v5162 = vpop.f32.mrf.mxu0
  %5163 = vdwg.mxu0
  %5164 = vmatpush.bf16.msra.mxu0 %v1127
  %5165 = vmatpush.bf16.msra.mxu0 %v1119
  %5166 = vmatpush.bf16.msra.mxu0 %v1111
  %5167 = vmatpush.bf16.msra.mxu0 %v1103
  %5168 = vmatpush.bf16.msra.mxu0 %v1095
  %5169 = vmatpush.bf16.msra.mxu0 %v1087
  %5170 = vmatpush.bf16.msra.mxu0 %v1079
  %5171 = vmatpush.bf16.msra.mxu0 %v1071
  %5172 = vmatmul.bf16.gmra.mxu0 %v4796
  %v5173 = vpop.f32.mrf.mxu0
  %v5174 = vadd.f32 0.0, %v5173
  %v5175 = vpop.f32.mrf.mxu0
  %5176 = vdwg.mxu0
  %5177 = vmatpush.bf16.msra.mxu0 %v1191
  %5178 = vmatpush.bf16.msra.mxu0 %v1183
  %5179 = vmatpush.bf16.msra.mxu0 %v1175
  %5180 = vmatpush.bf16.msra.mxu0 %v1167
  %5181 = vmatpush.bf16.msra.mxu0 %v1159
  %5182 = vmatpush.bf16.msra.mxu0 %v1151
  %5183 = vmatpush.bf16.msra.mxu0 %v1143
  %5184 = vmatpush.bf16.msra.mxu0 %v1135
  %5185 = vmatmul.bf16.gmra.mxu0 %v4797
  %v5186 = vpop.f32.mrf.mxu0
  %v5187 = vadd.f32 %v5174, %v5186
  %v5188 = vpop.f32.mrf.mxu0
  %5189 = vdwg.mxu0
  %5190 = vmatpush.bf16.msra.mxu0 %v1255
  %5191 = vmatpush.bf16.msra.mxu0 %v1247
  %5192 = vmatpush.bf16.msra.mxu0 %v1239
  %5193 = vmatpush.bf16.msra.mxu0 %v1231
  %5194 = vmatpush.bf16.msra.mxu0 %v1223
  %5195 = vmatpush.bf16.msra.mxu0 %v1215
  %5196 = vmatpush.bf16.msra.mxu0 %v1207
  %5197 = vmatpush.bf16.msra.mxu0 %v1199
  %5198 = vmatmul.bf16.gmra.mxu0 %v4798
  %v5199 = vpop.f32.mrf.mxu0
  %v5200 = vadd.f32 %v5187, %v5199
  %v5201 = vpop.f32.mrf.mxu0
  %5202 = vdwg.mxu0
  %5203 = vmatpush.bf16.msra.mxu0 %v1319
  %5204 = vmatpush.bf16.msra.mxu0 %v1311
  %5205 = vmatpush.bf16.msra.mxu0 %v1303
  %5206 = vmatpush.bf16.msra.mxu0 %v1295
  %5207 = vmatpush.bf16.msra.mxu0 %v1287
  %5208 = vmatpush.bf16.msra.mxu0 %v1279
  %5209 = vmatpush.bf16.msra.mxu0 %v1271
  %5210 = vmatpush.bf16.msra.mxu0 %v1263
  %5211 = vmatmul.bf16.gmra.mxu0 %v4799
  %v5212 = vpop.f32.mrf.mxu0
  %v5213 = vadd.f32 %v5200, %v5212
  %v5214 = vpop.f32.mrf.mxu0
  %5215 = vdwg.mxu0
  %s5216 = scalar_lea.vmem %s0, 192
  %v5217 = vld [vmem:[%s5216] sm:$0xff]
  %v5218 = vld [vmem:[%s5216 + $0x8] sm:$0xff]
  %v5219 = vld [vmem:[%s5216 + $0x10] sm:$0xff]
  %v5220 = vld [vmem:[%s5216 + $0x18] sm:$0xff]
  %v5229 = vrot.slane %v4901, 4
  %v5230 = vrot.slane %v5005, 4
  %v5231 = vrot.slane %v5109, 4
  %v5232 = vrot.slane %v5213, 4
  %v5233 = vsel %vm2008, %v4849, %v5229
  %v5234 = vsel %vm2008, %v4953, %v5230
  %v5235 = vsel %vm2008, %v5057, %v5231
  %v5236 = vsel %vm2008, %v5161, %v5232
  %v5241 = vadd.f32 %v5217, %v5233
  %v5242 = vadd.f32 %v5218, %v5234
  %v5243 = vadd.f32 %v5219, %v5235
  %v5244 = vadd.f32 %v5220, %v5236
  %v5245 = vxor.u32 %v5241, 2147483648
  %v5246 = vmul.f32 %v5245, 1.442695
  %v5247 = vpow.pop %v5246
  %v5248 = vadd.f32 %v5247, 1.0
  %v5249 = vrcp.pop %v5248
  %v5250 = vmul.f32 %v5248, %v5249
  %v5251 = vsub.f32 1.0, %v5250
  %v5252 = vmul.f32 %v5249, %v5251
  %v5253 = vadd.f32 %v5249, %v5252
  %vm5254 = vweird.f32 %v5248
  %vm5255 = vweird.f32 %v5249
  %vm5256 = vmor %vm5254, %vm5255
  %v5257 = vsel %vm5256, %v5249, %v5253
  %v5258 = vand.u32 2147483647, %v5248
  %vm5259 = vcmp.eq.f32.partialorder %v5258, 8.507059e+37
  %v5260 = vand.u32 %v5248, 2147483648
  %v5261 = vor.u32 1.1754944e-38, %v5260
  %v5262 = vsel %vm5259, %v5261, %v5257
  %v5263 = vmul.f32 1.0, %v5262
  %v5264 = vxor.u32 %v5242, 2147483648
  %v5265 = vmul.f32 %v5264, 1.442695
  %v5266 = vpow.pop %v5265
  %v5267 = vadd.f32 %v5266, 1.0
  %v5268 = vrcp.pop %v5267
  %v5269 = vmul.f32 %v5267, %v5268
  %v5270 = vsub.f32 1.0, %v5269
  %v5271 = vmul.f32 %v5268, %v5270
  %v5272 = vadd.f32 %v5268, %v5271
  %vm5273 = vweird.f32 %v5267
  %vm5274 = vweird.f32 %v5268
  %vm5275 = vmor %vm5273, %vm5274
  %v5276 = vsel %vm5275, %v5268, %v5272
  %v5277 = vand.u32 2147483647, %v5267
  %vm5278 = vcmp.eq.f32.partialorder %v5277, 8.507059e+37
  %v5279 = vand.u32 %v5267, 2147483648
  %v5280 = vor.u32 1.1754944e-38, %v5279
  %v5281 = vsel %vm5278, %v5280, %v5276
  %v5282 = vmul.f32 1.0, %v5281
  %v5283 = vtanh.pop %v5243
  %v5284 = vxor.u32 %v5244, 2147483648
  %v5285 = vmul.f32 %v5284, 1.442695
  %v5286 = vpow.pop %v5285
  %v5287 = vadd.f32 %v5286, 1.0
  %v5288 = vrcp.pop %v5287
  %v5289 = vmul.f32 %v5287, %v5288
  %v5290 = vsub.f32 1.0, %v5289
  %v5291 = vmul.f32 %v5288, %v5290
  %v5292 = vadd.f32 %v5288, %v5291
  %vm5293 = vweird.f32 %v5287
  %vm5294 = vweird.f32 %v5288
  %vm5295 = vmor %vm5293, %vm5294
  %v5296 = vsel %vm5295, %v5288, %v5292
  %v5297 = vand.u32 2147483647, %v5287
  %vm5298 = vcmp.eq.f32.partialorder %v5297, 8.507059e+37
  %v5299 = vand.u32 %v5287, 2147483648
  %v5300 = vor.u32 1.1754944e-38, %v5299
  %v5301 = vsel %vm5298, %v5300, %v5296
  %v5302 = vmul.f32 1.0, %v5301
  %v5303 = vmul.f32 %v5282, %v4769
  %v5304 = vmul.f32 %v5263, %v5283
  %v5305 = vadd.f32 %v5303, %v5304
  %v5306 = vtanh.pop %v5305
  %v5307 = vmul.f32 %v5302, %v5306
  %v5309 = vrot.slane %v5307, 2
  %v5310 = vsel %vm2086, %v5307, %v5309
  %5312 = vst [vmem:[%s2632] sm:$0xf] %v5310
  %5313 = vst.sshfl [vmem:[#allocation1] sm:$0xff pattern:$0x75643120] %v5307
  %s5314 = scalar_lea.vmem [#allocation1], 1
  %v5315 = vld [vmem:[%s5314] ss:$2 sm:$0xff]
  %5317 = vst [vmem:[%s2626 + $0x4] sm:$0xf] %v5315
  %5318 = vst [vmem:[#allocation1] ss:$2 sm:$0xff] %v5307
  %v5319 = vld.sshfl [vmem:[#allocation1] sm:$0xff pattern:$0x75316420]
  %v5320 = vld.sshfl [vmem:[#allocation1 + $0x8] sm:$0xff pattern:$0x75316420]
  %5323 = vst [vmem:[#allocation1] ss:$2 sm:$0xff] %v5307
  %v5324 = vld.sshfl [vmem:[#allocation1] sm:$0xff pattern:$0x75316420]
  %v5325 = vld.sshfl [vmem:[#allocation1 + $0x8] sm:$0xff pattern:$0x75316420]
  %v5328 = vmul.f32 %v5319, %v292
  %v5329 = vmul.f32 %v5320, %v293
  %v5330 = vmul.f32 %v5324, %v294
  %v5331 = vmul.f32 %v5325, %v295
  %v5332 = vpack.c.bf16 %v5328, %v5328
  %v5333 = vpack.c.bf16 %v5329, %v5329
  %v5334 = vpack.c.bf16 %v5330, %v5330
  %v5335 = vpack.c.bf16 %v5331, %v5331
  %5336 = vmatpush.bf16.msra.mxu0 %v1120
  %5337 = vmatpush.bf16.msra.mxu0 %v1112
  %5338 = vmatpush.bf16.msra.mxu0 %v1104
  %5339 = vmatpush.bf16.msra.mxu0 %v1096
  %5340 = vmatpush.bf16.msra.mxu0 %v1088
  %5341 = vmatpush.bf16.msra.mxu0 %v1080
  %5342 = vmatpush.bf16.msra.mxu0 %v1072
  %5343 = vmatpush.bf16.msra.mxu0 %v1064
  %5344 = vmatmul.bf16.gmra.mxu0 %v5332
  %v5345 = vpop.f32.mrf.mxu0
  %v5346 = vadd.f32 0.0, %v5345
  %v5347 = vpop.f32.mrf.mxu0
  %5348 = vdwg.mxu0
  %5349 = vmatpush.bf16.msra.mxu0 %v1184
  %5350 = vmatpush.bf16.msra.mxu0 %v1176
  %5351 = vmatpush.bf16.msra.mxu0 %v1168
  %5352 = vmatpush.bf16.msra.mxu0 %v1160
  %5353 = vmatpush.bf16.msra.mxu0 %v1152
  %5354 = vmatpush.bf16.msra.mxu0 %v1144
  %5355 = vmatpush.bf16.msra.mxu0 %v1136
  %5356 = vmatpush.bf16.msra.mxu0 %v1128
  %5357 = vmatmul.bf16.gmra.mxu0 %v5333
  %v5358 = vpop.f32.mrf.mxu0
  %v5359 = vadd.f32 %v5346, %v5358
  %v5360 = vpop.f32.mrf.mxu0
  %5361 = vdwg.mxu0
  %5362 = vmatpush.bf16.msra.mxu0 %v1248
  %5363 = vmatpush.bf16.msra.mxu0 %v1240
  %5364 = vmatpush.bf16.msra.mxu0 %v1232
  %5365 = vmatpush.bf16.msra.mxu0 %v1224
  %5366 = vmatpush.bf16.msra.mxu0 %v1216
  %5367 = vmatpush.bf16.msra.mxu0 %v1208
  %5368 = vmatpush.bf16.msra.mxu0 %v1200
  %5369 = vmatpush.bf16.msra.mxu0 %v1192
  %5370 = vmatmul.bf16.gmra.mxu0 %v5334
  %v5371 = vpop.f32.mrf.mxu0
  %v5372 = vadd.f32 %v5359, %v5371
  %v5373 = vpop.f32.mrf.mxu0
  %5374 = vdwg.mxu0
  %5375 = vmatpush.bf16.msra.mxu0 %v1312
  %5376 = vmatpush.bf16.msra.mxu0 %v1304
  %5377 = vmatpush.bf16.msra.mxu0 %v1296
  %5378 = vmatpush.bf16.msra.mxu0 %v1288
  %5379 = vmatpush.bf16.msra.mxu0 %v1280
  %5380 = vmatpush.bf16.msra.mxu0 %v1272
  %5381 = vmatpush.bf16.msra.mxu0 %v1264
  %5382 = vmatpush.bf16.msra.mxu0 %v1256
  %5383 = vmatmul.bf16.gmra.mxu0 %v5335
  %v5384 = vpop.f32.mrf.mxu0
  %v5385 = vadd.f32 %v5372, %v5384
  %v5386 = vpop.f32.mrf.mxu0
  %5387 = vdwg.mxu0
  %5388 = vmatpush.bf16.msra.mxu0 %v1121
  %5389 = vmatpush.bf16.msra.mxu0 %v1113
  %5390 = vmatpush.bf16.msra.mxu0 %v1105
  %5391 = vmatpush.bf16.msra.mxu0 %v1097
  %5392 = vmatpush.bf16.msra.mxu0 %v1089
  %5393 = vmatpush.bf16.msra.mxu0 %v1081
  %5394 = vmatpush.bf16.msra.mxu0 %v1073
  %5395 = vmatpush.bf16.msra.mxu0 %v1065
  %5396 = vmatmul.bf16.gmra.mxu0 %v5332
  %v5397 = vpop.f32.mrf.mxu0
  %v5398 = vadd.f32 0.0, %v5397
  %v5399 = vpop.f32.mrf.mxu0
  %5400 = vdwg.mxu0
  %5401 = vmatpush.bf16.msra.mxu0 %v1185
  %5402 = vmatpush.bf16.msra.mxu0 %v1177
  %5403 = vmatpush.bf16.msra.mxu0 %v1169
  %5404 = vmatpush.bf16.msra.mxu0 %v1161
  %5405 = vmatpush.bf16.msra.mxu0 %v1153
  %5406 = vmatpush.bf16.msra.mxu0 %v1145
  %5407 = vmatpush.bf16.msra.mxu0 %v1137
  %5408 = vmatpush.bf16.msra.mxu0 %v1129
  %5409 = vmatmul.bf16.gmra.mxu0 %v5333
  %v5410 = vpop.f32.mrf.mxu0
  %v5411 = vadd.f32 %v5398, %v5410
  %v5412 = vpop.f32.mrf.mxu0
  %5413 = vdwg.mxu0
  %5414 = vmatpush.bf16.msra.mxu0 %v1249
  %5415 = vmatpush.bf16.msra.mxu0 %v1241
  %5416 = vmatpush.bf16.msra.mxu0 %v1233
  %5417 = vmatpush.bf16.msra.mxu0 %v1225
  %5418 = vmatpush.bf16.msra.mxu0 %v1217
  %5419 = vmatpush.bf16.msra.mxu0 %v1209
  %5420 = vmatpush.bf16.msra.mxu0 %v1201
  %5421 = vmatpush.bf16.msra.mxu0 %v1193
  %5422 = vmatmul.bf16.gmra.mxu0 %v5334
  %v5423 = vpop.f32.mrf.mxu0
  %v5424 = vadd.f32 %v5411, %v5423
  %v5425 = vpop.f32.mrf.mxu0
  %5426 = vdwg.mxu0
  %5427 = vmatpush.bf16.msra.mxu0 %v1313
  %5428 = vmatpush.bf16.msra.mxu0 %v1305
  %5429 = vmatpush.bf16.msra.mxu0 %v1297
  %5430 = vmatpush.bf16.msra.mxu0 %v1289
  %5431 = vmatpush.bf16.msra.mxu0 %v1281
  %5432 = vmatpush.bf16.msra.mxu0 %v1273
  %5433 = vmatpush.bf16.msra.mxu0 %v1265
  %5434 = vmatpush.bf16.msra.mxu0 %v1257
  %5435 = vmatmul.bf16.gmra.mxu0 %v5335
  %v5436 = vpop.f32.mrf.mxu0
  %v5437 = vadd.f32 %v5424, %v5436
  %v5438 = vpop.f32.mrf.mxu0
  %5439 = vdwg.mxu0
  %5440 = vmatpush.bf16.msra.mxu0 %v1122
  %5441 = vmatpush.bf16.msra.mxu0 %v1114
  %5442 = vmatpush.bf16.msra.mxu0 %v1106
  %5443 = vmatpush.bf16.msra.mxu0 %v1098
  %5444 = vmatpush.bf16.msra.mxu0 %v1090
  %5445 = vmatpush.bf16.msra.mxu0 %v1082
  %5446 = vmatpush.bf16.msra.mxu0 %v1074
  %5447 = vmatpush.bf16.msra.mxu0 %v1066
  %5448 = vmatmul.bf16.gmra.mxu0 %v5332
  %v5449 = vpop.f32.mrf.mxu0
  %v5450 = vadd.f32 0.0, %v5449
  %v5451 = vpop.f32.mrf.mxu0
  %5452 = vdwg.mxu0
  %5453 = vmatpush.bf16.msra.mxu0 %v1186
  %5454 = vmatpush.bf16.msra.mxu0 %v1178
  %5455 = vmatpush.bf16.msra.mxu0 %v1170
  %5456 = vmatpush.bf16.msra.mxu0 %v1162
  %5457 = vmatpush.bf16.msra.mxu0 %v1154
  %5458 = vmatpush.bf16.msra.mxu0 %v1146
  %5459 = vmatpush.bf16.msra.mxu0 %v1138
  %5460 = vmatpush.bf16.msra.mxu0 %v1130
  %5461 = vmatmul.bf16.gmra.mxu0 %v5333
  %v5462 = vpop.f32.mrf.mxu0
  %v5463 = vadd.f32 %v5450, %v5462
  %v5464 = vpop.f32.mrf.mxu0
  %5465 = vdwg.mxu0
  %5466 = vmatpush.bf16.msra.mxu0 %v1250
  %5467 = vmatpush.bf16.msra.mxu0 %v1242
  %5468 = vmatpush.bf16.msra.mxu0 %v1234
  %5469 = vmatpush.bf16.msra.mxu0 %v1226
  %5470 = vmatpush.bf16.msra.mxu0 %v1218
  %5471 = vmatpush.bf16.msra.mxu0 %v1210
  %5472 = vmatpush.bf16.msra.mxu0 %v1202
  %5473 = vmatpush.bf16.msra.mxu0 %v1194
  %5474 = vmatmul.bf16.gmra.mxu0 %v5334
  %v5475 = vpop.f32.mrf.mxu0
  %v5476 = vadd.f32 %v5463, %v5475
  %v5477 = vpop.f32.mrf.mxu0
  %5478 = vdwg.mxu0
  %5479 = vmatpush.bf16.msra.mxu0 %v1314
  %5480 = vmatpush.bf16.msra.mxu0 %v1306
  %5481 = vmatpush.bf16.msra.mxu0 %v1298
  %5482 = vmatpush.bf16.msra.mxu0 %v1290
  %5483 = vmatpush.bf16.msra.mxu0 %v1282
  %5484 = vmatpush.bf16.msra.mxu0 %v1274
  %5485 = vmatpush.bf16.msra.mxu0 %v1266
  %5486 = vmatpush.bf16.msra.mxu0 %v1258
  %5487 = vmatmul.bf16.gmra.mxu0 %v5335
  %v5488 = vpop.f32.mrf.mxu0
  %v5489 = vadd.f32 %v5476, %v5488
  %v5490 = vpop.f32.mrf.mxu0
  %5491 = vdwg.mxu0
  %5492 = vmatpush.bf16.msra.mxu0 %v1123
  %5493 = vmatpush.bf16.msra.mxu0 %v1115
  %5494 = vmatpush.bf16.msra.mxu0 %v1107
  %5495 = vmatpush.bf16.msra.mxu0 %v1099
  %5496 = vmatpush.bf16.msra.mxu0 %v1091
  %5497 = vmatpush.bf16.msra.mxu0 %v1083
  %5498 = vmatpush.bf16.msra.mxu0 %v1075
  %5499 = vmatpush.bf16.msra.mxu0 %v1067
  %5500 = vmatmul.bf16.gmra.mxu0 %v5332
  %v5501 = vpop.f32.mrf.mxu0
  %v5502 = vadd.f32 0.0, %v5501
  %v5503 = vpop.f32.mrf.mxu0
  %5504 = vdwg.mxu0
  %5505 = vmatpush.bf16.msra.mxu0 %v1187
  %5506 = vmatpush.bf16.msra.mxu0 %v1179
  %5507 = vmatpush.bf16.msra.mxu0 %v1171
  %5508 = vmatpush.bf16.msra.mxu0 %v1163
  %5509 = vmatpush.bf16.msra.mxu0 %v1155
  %5510 = vmatpush.bf16.msra.mxu0 %v1147
  %5511 = vmatpush.bf16.msra.mxu0 %v1139
  %5512 = vmatpush.bf16.msra.mxu0 %v1131
  %5513 = vmatmul.bf16.gmra.mxu0 %v5333
  %v5514 = vpop.f32.mrf.mxu0
  %v5515 = vadd.f32 %v5502, %v5514
  %v5516 = vpop.f32.mrf.mxu0
  %5517 = vdwg.mxu0
  %5518 = vmatpush.bf16.msra.mxu0 %v1251
  %5519 = vmatpush.bf16.msra.mxu0 %v1243
  %5520 = vmatpush.bf16.msra.mxu0 %v1235
  %5521 = vmatpush.bf16.msra.mxu0 %v1227
  %5522 = vmatpush.bf16.msra.mxu0 %v1219
  %5523 = vmatpush.bf16.msra.mxu0 %v1211
  %5524 = vmatpush.bf16.msra.mxu0 %v1203
  %5525 = vmatpush.bf16.msra.mxu0 %v1195
  %5526 = vmatmul.bf16.gmra.mxu0 %v5334
  %v5527 = vpop.f32.mrf.mxu0
  %v5528 = vadd.f32 %v5515, %v5527
  %v5529 = vpop.f32.mrf.mxu0
  %5530 = vdwg.mxu0
  %5531 = vmatpush.bf16.msra.mxu0 %v1315
  %5532 = vmatpush.bf16.msra.mxu0 %v1307
  %5533 = vmatpush.bf16.msra.mxu0 %v1299
  %5534 = vmatpush.bf16.msra.mxu0 %v1291
  %5535 = vmatpush.bf16.msra.mxu0 %v1283
  %5536 = vmatpush.bf16.msra.mxu0 %v1275
  %5537 = vmatpush.bf16.msra.mxu0 %v1267
  %5538 = vmatpush.bf16.msra.mxu0 %v1259
  %5539 = vmatmul.bf16.gmra.mxu0 %v5335
  %v5540 = vpop.f32.mrf.mxu0
  %v5541 = vadd.f32 %v5528, %v5540
  %v5542 = vpop.f32.mrf.mxu0
  %5543 = vdwg.mxu0
  %5544 = vmatpush.bf16.msra.mxu0 %v1124
  %5545 = vmatpush.bf16.msra.mxu0 %v1116
  %5546 = vmatpush.bf16.msra.mxu0 %v1108
  %5547 = vmatpush.bf16.msra.mxu0 %v1100
  %5548 = vmatpush.bf16.msra.mxu0 %v1092
  %5549 = vmatpush.bf16.msra.mxu0 %v1084
  %5550 = vmatpush.bf16.msra.mxu0 %v1076
  %5551 = vmatpush.bf16.msra.mxu0 %v1068
  %5552 = vmatmul.bf16.gmra.mxu0 %v5332
  %v5553 = vpop.f32.mrf.mxu0
  %v5554 = vadd.f32 0.0, %v5553
  %v5555 = vpop.f32.mrf.mxu0
  %5556 = vdwg.mxu0
  %5557 = vmatpush.bf16.msra.mxu0 %v1188
  %5558 = vmatpush.bf16.msra.mxu0 %v1180
  %5559 = vmatpush.bf16.msra.mxu0 %v1172
  %5560 = vmatpush.bf16.msra.mxu0 %v1164
  %5561 = vmatpush.bf16.msra.mxu0 %v1156
  %5562 = vmatpush.bf16.msra.mxu0 %v1148
  %5563 = vmatpush.bf16.msra.mxu0 %v1140
  %5564 = vmatpush.bf16.msra.mxu0 %v1132
  %5565 = vmatmul.bf16.gmra.mxu0 %v5333
  %v5566 = vpop.f32.mrf.mxu0
  %v5567 = vadd.f32 %v5554, %v5566
  %v5568 = vpop.f32.mrf.mxu0
  %5569 = vdwg.mxu0
  %5570 = vmatpush.bf16.msra.mxu0 %v1252
  %5571 = vmatpush.bf16.msra.mxu0 %v1244
  %5572 = vmatpush.bf16.msra.mxu0 %v1236
  %5573 = vmatpush.bf16.msra.mxu0 %v1228
  %5574 = vmatpush.bf16.msra.mxu0 %v1220
  %5575 = vmatpush.bf16.msra.mxu0 %v1212
  %5576 = vmatpush.bf16.msra.mxu0 %v1204
  %5577 = vmatpush.bf16.msra.mxu0 %v1196
  %5578 = vmatmul.bf16.gmra.mxu0 %v5334
  %v5579 = vpop.f32.mrf.mxu0
  %v5580 = vadd.f32 %v5567, %v5579
  %v5581 = vpop.f32.mrf.mxu0
  %5582 = vdwg.mxu0
  %5583 = vmatpush.bf16.msra.mxu0 %v1316
  %5584 = vmatpush.bf16.msra.mxu0 %v1308
  %5585 = vmatpush.bf16.msra.mxu0 %v1300
  %5586 = vmatpush.bf16.msra.mxu0 %v1292
  %5587 = vmatpush.bf16.msra.mxu0 %v1284
  %5588 = vmatpush.bf16.msra.mxu0 %v1276
  %5589 = vmatpush.bf16.msra.mxu0 %v1268
  %5590 = vmatpush.bf16.msra.mxu0 %v1260
  %5591 = vmatmul.bf16.gmra.mxu0 %v5335
  %v5592 = vpop.f32.mrf.mxu0
  %v5593 = vadd.f32 %v5580, %v5592
  %v5594 = vpop.f32.mrf.mxu0
  %5595 = vdwg.mxu0
  %5596 = vmatpush.bf16.msra.mxu0 %v1125
  %5597 = vmatpush.bf16.msra.mxu0 %v1117
  %5598 = vmatpush.bf16.msra.mxu0 %v1109
  %5599 = vmatpush.bf16.msra.mxu0 %v1101
  %5600 = vmatpush.bf16.msra.mxu0 %v1093
  %5601 = vmatpush.bf16.msra.mxu0 %v1085
  %5602 = vmatpush.bf16.msra.mxu0 %v1077
  %5603 = vmatpush.bf16.msra.mxu0 %v1069
  %5604 = vmatmul.bf16.gmra.mxu0 %v5332
  %v5605 = vpop.f32.mrf.mxu0
  %v5606 = vadd.f32 0.0, %v5605
  %v5607 = vpop.f32.mrf.mxu0
  %5608 = vdwg.mxu0
  %5609 = vmatpush.bf16.msra.mxu0 %v1189
  %5610 = vmatpush.bf16.msra.mxu0 %v1181
  %5611 = vmatpush.bf16.msra.mxu0 %v1173
  %5612 = vmatpush.bf16.msra.mxu0 %v1165
  %5613 = vmatpush.bf16.msra.mxu0 %v1157
  %5614 = vmatpush.bf16.msra.mxu0 %v1149
  %5615 = vmatpush.bf16.msra.mxu0 %v1141
  %5616 = vmatpush.bf16.msra.mxu0 %v1133
  %5617 = vmatmul.bf16.gmra.mxu0 %v5333
  %v5618 = vpop.f32.mrf.mxu0
  %v5619 = vadd.f32 %v5606, %v5618
  %v5620 = vpop.f32.mrf.mxu0
  %5621 = vdwg.mxu0
  %5622 = vmatpush.bf16.msra.mxu0 %v1253
  %5623 = vmatpush.bf16.msra.mxu0 %v1245
  %5624 = vmatpush.bf16.msra.mxu0 %v1237
  %5625 = vmatpush.bf16.msra.mxu0 %v1229
  %5626 = vmatpush.bf16.msra.mxu0 %v1221
  %5627 = vmatpush.bf16.msra.mxu0 %v1213
  %5628 = vmatpush.bf16.msra.mxu0 %v1205
  %5629 = vmatpush.bf16.msra.mxu0 %v1197
  %5630 = vmatmul.bf16.gmra.mxu0 %v5334
  %v5631 = vpop.f32.mrf.mxu0
  %v5632 = vadd.f32 %v5619, %v5631
  %v5633 = vpop.f32.mrf.mxu0
  %5634 = vdwg.mxu0
  %5635 = vmatpush.bf16.msra.mxu0 %v1317
  %5636 = vmatpush.bf16.msra.mxu0 %v1309
  %5637 = vmatpush.bf16.msra.mxu0 %v1301
  %5638 = vmatpush.bf16.msra.mxu0 %v1293
  %5639 = vmatpush.bf16.msra.mxu0 %v1285
  %5640 = vmatpush.bf16.msra.mxu0 %v1277
  %5641 = vmatpush.bf16.msra.mxu0 %v1269
  %5642 = vmatpush.bf16.msra.mxu0 %v1261
  %5643 = vmatmul.bf16.gmra.mxu0 %v5335
  %v5644 = vpop.f32.mrf.mxu0
  %v5645 = vadd.f32 %v5632, %v5644
  %v5646 = vpop.f32.mrf.mxu0
  %5647 = vdwg.mxu0
  %5648 = vmatpush.bf16.msra.mxu0 %v1126
  %5649 = vmatpush.bf16.msra.mxu0 %v1118
  %5650 = vmatpush.bf16.msra.mxu0 %v1110
  %5651 = vmatpush.bf16.msra.mxu0 %v1102
  %5652 = vmatpush.bf16.msra.mxu0 %v1094
  %5653 = vmatpush.bf16.msra.mxu0 %v1086
  %5654 = vmatpush.bf16.msra.mxu0 %v1078
  %5655 = vmatpush.bf16.msra.mxu0 %v1070
  %5656 = vmatmul.bf16.gmra.mxu0 %v5332
  %v5657 = vpop.f32.mrf.mxu0
  %v5658 = vadd.f32 0.0, %v5657
  %v5659 = vpop.f32.mrf.mxu0
  %5660 = vdwg.mxu0
  %5661 = vmatpush.bf16.msra.mxu0 %v1190
  %5662 = vmatpush.bf16.msra.mxu0 %v1182
  %5663 = vmatpush.bf16.msra.mxu0 %v1174
  %5664 = vmatpush.bf16.msra.mxu0 %v1166
  %5665 = vmatpush.bf16.msra.mxu0 %v1158
  %5666 = vmatpush.bf16.msra.mxu0 %v1150
  %5667 = vmatpush.bf16.msra.mxu0 %v1142
  %5668 = vmatpush.bf16.msra.mxu0 %v1134
  %5669 = vmatmul.bf16.gmra.mxu0 %v5333
  %v5670 = vpop.f32.mrf.mxu0
  %v5671 = vadd.f32 %v5658, %v5670
  %v5672 = vpop.f32.mrf.mxu0
  %5673 = vdwg.mxu0
  %5674 = vmatpush.bf16.msra.mxu0 %v1254
  %5675 = vmatpush.bf16.msra.mxu0 %v1246
  %5676 = vmatpush.bf16.msra.mxu0 %v1238
  %5677 = vmatpush.bf16.msra.mxu0 %v1230
  %5678 = vmatpush.bf16.msra.mxu0 %v1222
  %5679 = vmatpush.bf16.msra.mxu0 %v1214
  %5680 = vmatpush.bf16.msra.mxu0 %v1206
  %5681 = vmatpush.bf16.msra.mxu0 %v1198
  %5682 = vmatmul.bf16.gmra.mxu0 %v5334
  %v5683 = vpop.f32.mrf.mxu0
  %v5684 = vadd.f32 %v5671, %v5683
  %v5685 = vpop.f32.mrf.mxu0
  %5686 = vdwg.mxu0
  %5687 = vmatpush.bf16.msra.mxu0 %v1318
  %5688 = vmatpush.bf16.msra.mxu0 %v1310
  %5689 = vmatpush.bf16.msra.mxu0 %v1302
  %5690 = vmatpush.bf16.msra.mxu0 %v1294
  %5691 = vmatpush.bf16.msra.mxu0 %v1286
  %5692 = vmatpush.bf16.msra.mxu0 %v1278
  %5693 = vmatpush.bf16.msra.mxu0 %v1270
  %5694 = vmatpush.bf16.msra.mxu0 %v1262
  %5695 = vmatmul.bf16.gmra.mxu0 %v5335
  %v5696 = vpop.f32.mrf.mxu0
  %v5697 = vadd.f32 %v5684, %v5696
  %v5698 = vpop.f32.mrf.mxu0
  %5699 = vdwg.mxu0
  %5700 = vmatpush.bf16.msra.mxu0 %v1127
  %5701 = vmatpush.bf16.msra.mxu0 %v1119
  %5702 = vmatpush.bf16.msra.mxu0 %v1111
  %5703 = vmatpush.bf16.msra.mxu0 %v1103
  %5704 = vmatpush.bf16.msra.mxu0 %v1095
  %5705 = vmatpush.bf16.msra.mxu0 %v1087
  %5706 = vmatpush.bf16.msra.mxu0 %v1079
  %5707 = vmatpush.bf16.msra.mxu0 %v1071
  %5708 = vmatmul.bf16.gmra.mxu0 %v5332
  %v5709 = vpop.f32.mrf.mxu0
  %v5710 = vadd.f32 0.0, %v5709
  %v5711 = vpop.f32.mrf.mxu0
  %5712 = vdwg.mxu0
  %5713 = vmatpush.bf16.msra.mxu0 %v1191
  %5714 = vmatpush.bf16.msra.mxu0 %v1183
  %5715 = vmatpush.bf16.msra.mxu0 %v1175
  %5716 = vmatpush.bf16.msra.mxu0 %v1167
  %5717 = vmatpush.bf16.msra.mxu0 %v1159
  %5718 = vmatpush.bf16.msra.mxu0 %v1151
  %5719 = vmatpush.bf16.msra.mxu0 %v1143
  %5720 = vmatpush.bf16.msra.mxu0 %v1135
  %5721 = vmatmul.bf16.gmra.mxu0 %v5333
  %v5722 = vpop.f32.mrf.mxu0
  %v5723 = vadd.f32 %v5710, %v5722
  %v5724 = vpop.f32.mrf.mxu0
  %5725 = vdwg.mxu0
  %5726 = vmatpush.bf16.msra.mxu0 %v1255
  %5727 = vmatpush.bf16.msra.mxu0 %v1247
  %5728 = vmatpush.bf16.msra.mxu0 %v1239
  %5729 = vmatpush.bf16.msra.mxu0 %v1231
  %5730 = vmatpush.bf16.msra.mxu0 %v1223
  %5731 = vmatpush.bf16.msra.mxu0 %v1215
  %5732 = vmatpush.bf16.msra.mxu0 %v1207
  %5733 = vmatpush.bf16.msra.mxu0 %v1199
  %5734 = vmatmul.bf16.gmra.mxu0 %v5334
  %v5735 = vpop.f32.mrf.mxu0
  %v5736 = vadd.f32 %v5723, %v5735
  %v5737 = vpop.f32.mrf.mxu0
  %5738 = vdwg.mxu0
  %5739 = vmatpush.bf16.msra.mxu0 %v1319
  %5740 = vmatpush.bf16.msra.mxu0 %v1311
  %5741 = vmatpush.bf16.msra.mxu0 %v1303
  %5742 = vmatpush.bf16.msra.mxu0 %v1295
  %5743 = vmatpush.bf16.msra.mxu0 %v1287
  %5744 = vmatpush.bf16.msra.mxu0 %v1279
  %5745 = vmatpush.bf16.msra.mxu0 %v1271
  %5746 = vmatpush.bf16.msra.mxu0 %v1263
  %5747 = vmatmul.bf16.gmra.mxu0 %v5335
  %v5748 = vpop.f32.mrf.mxu0
  %v5749 = vadd.f32 %v5736, %v5748
  %v5750 = vpop.f32.mrf.mxu0
  %5751 = vdwg.mxu0
  %s5752 = scalar_lea.vmem %s0, 224
  %v5753 = vld [vmem:[%s5752] sm:$0xff]
  %v5754 = vld [vmem:[%s5752 + $0x8] sm:$0xff]
  %v5755 = vld [vmem:[%s5752 + $0x10] sm:$0xff]
  %v5756 = vld [vmem:[%s5752 + $0x18] sm:$0xff]
  %v5765 = vrot.slane %v5437, 4
  %v5766 = vrot.slane %v5541, 4
  %v5767 = vrot.slane %v5645, 4
  %v5768 = vrot.slane %v5749, 4
  %v5769 = vsel %vm2008, %v5385, %v5765
  %v5770 = vsel %vm2008, %v5489, %v5766
  %v5771 = vsel %vm2008, %v5593, %v5767
  %v5772 = vsel %vm2008, %v5697, %v5768
  %v5777 = vadd.f32 %v5753, %v5769
  %v5778 = vadd.f32 %v5754, %v5770
  %v5779 = vadd.f32 %v5755, %v5771
  %v5780 = vadd.f32 %v5756, %v5772
  %v5781 = vxor.u32 %v5777, 2147483648
  %v5782 = vmul.f32 %v5781, 1.442695
  %v5783 = vpow.pop %v5782
  %v5784 = vadd.f32 %v5783, 1.0
  %v5785 = vrcp.pop %v5784
  %v5786 = vmul.f32 %v5784, %v5785
  %v5787 = vsub.f32 1.0, %v5786
  %v5788 = vmul.f32 %v5785, %v5787
  %v5789 = vadd.f32 %v5785, %v5788
  %vm5790 = vweird.f32 %v5784
  %vm5791 = vweird.f32 %v5785
  %vm5792 = vmor %vm5790, %vm5791
  %v5793 = vsel %vm5792, %v5785, %v5789
  %v5794 = vand.u32 2147483647, %v5784
  %vm5795 = vcmp.eq.f32.partialorder %v5794, 8.507059e+37
  %v5796 = vand.u32 %v5784, 2147483648
  %v5797 = vor.u32 1.1754944e-38, %v5796
  %v5798 = vsel %vm5795, %v5797, %v5793
  %v5799 = vmul.f32 1.0, %v5798
  %v5800 = vxor.u32 %v5778, 2147483648
  %v5801 = vmul.f32 %v5800, 1.442695
  %v5802 = vpow.pop %v5801
  %v5803 = vadd.f32 %v5802, 1.0
  %v5804 = vrcp.pop %v5803
  %v5805 = vmul.f32 %v5803, %v5804
  %v5806 = vsub.f32 1.0, %v5805
  %v5807 = vmul.f32 %v5804, %v5806
  %v5808 = vadd.f32 %v5804, %v5807
  %vm5809 = vweird.f32 %v5803
  %vm5810 = vweird.f32 %v5804
  %vm5811 = vmor %vm5809, %vm5810
  %v5812 = vsel %vm5811, %v5804, %v5808
  %v5813 = vand.u32 2147483647, %v5803
  %vm5814 = vcmp.eq.f32.partialorder %v5813, 8.507059e+37
  %v5815 = vand.u32 %v5803, 2147483648
  %v5816 = vor.u32 1.1754944e-38, %v5815
  %v5817 = vsel %vm5814, %v5816, %v5812
  %v5818 = vmul.f32 1.0, %v5817
  %v5819 = vtanh.pop %v5779
  %v5820 = vxor.u32 %v5780, 2147483648
  %v5821 = vmul.f32 %v5820, 1.442695
  %v5822 = vpow.pop %v5821
  %v5823 = vadd.f32 %v5822, 1.0
  %v5824 = vrcp.pop %v5823
  %v5825 = vmul.f32 %v5823, %v5824
  %v5826 = vsub.f32 1.0, %v5825
  %v5827 = vmul.f32 %v5824, %v5826
  %v5828 = vadd.f32 %v5824, %v5827
  %vm5829 = vweird.f32 %v5823
  %vm5830 = vweird.f32 %v5824
  %vm5831 = vmor %vm5829, %vm5830
  %v5832 = vsel %vm5831, %v5824, %v5828
  %v5833 = vand.u32 2147483647, %v5823
  %vm5834 = vcmp.eq.f32.partialorder %v5833, 8.507059e+37
  %v5835 = vand.u32 %v5823, 2147483648
  %v5836 = vor.u32 1.1754944e-38, %v5835
  %v5837 = vsel %vm5834, %v5836, %v5832
  %v5838 = vmul.f32 1.0, %v5837
  %v5839 = vmul.f32 %v5818, %v5305
  %v5840 = vmul.f32 %v5799, %v5819
  %v5841 = vadd.f32 %v5839, %v5840
  %v5842 = vtanh.pop %v5841
  %v5843 = vmul.f32 %v5838, %v5842
  %v5845 = vrot.slane %v5843, 2
  %v5846 = vsel %vm2086, %v5843, %v5845
  %5848 = vst [vmem:[%s2094] sm:$0xf] %v5846
  %5849 = vst.sshfl [vmem:[#allocation1] sm:$0xff pattern:$0x75643120] %v5843
  %s5850 = scalar_lea.vmem [#allocation1], 1
  %v5851 = vld [vmem:[%s5850] ss:$2 sm:$0xff]
  %5853 = vst [vmem:[%s2 + $0x4] sm:$0xf] %v5851
  // Predicated region
  $region10: #{lstm_backbone_forward.1} parent=0 // pred_check
    _
  $region11: #{lstm_backbone_forward.1} parent=0 // pred_check_branch
    %5855 = sbr.rel (0) target = $region13
  $region12: #{lstm_backbone_forward.1} parent=0 // pred_region
    _
  $region13: #{lstm_backbone_forward.1} parent=0 // pred_fallthru
    _
  // Predicated region
  $region14: #{lstm_backbone_forward.1} parent=0 // pred_check
    _
  $region15: #{lstm_backbone_forward.1} parent=0 // pred_check_branch
    %5857 = sbr.rel (0) target = $region17
  $region16: #{lstm_backbone_forward.1} parent=0 // pred_region
    _
  $region17: #{lstm_backbone_forward.1} parent=0 // pred_fallthru
    _

</llo_original>
